<compile_context>
chip_gen: v5e
topology: v5e:2x2
jax: 0.10.0
libtpu: 0.0.40
codegen_flags: <defaults>
</compile_context>

<pallas_src>
import jax
import jax.numpy as jnp
from jax.experimental import pallas as pl
from jax.experimental.pallas import tpu as pltpu

# Hyper-parameters from the PyTorch module __init__
HIDDEN = 128          # hidden_feature  (classifier in_features)
MID = 512             # classifier mid_features
NUM_CLASSES = 4       # emotion classes (out_features)
K_DET = 10            # k sentiment detectors per class
DD = HIDDEN * HIDDEN  # flattened bilinear contraction length (16384)
TK = 8192             # contraction tile (4 MiB f32 weight block per grid step)
assert DD % TK == 0


# --------------------------------------------------------------------------------------
# Kernel 1: L2 normalization + per-class sentiment-map attention pooling + outer product.
#   grid axis 0 = emotion class c  (fully parallel)
# --------------------------------------------------------------------------------------
def _senti_map_outer_kernel(v_ref, q_ref, wdet_ref, bdet_ref, z_ref):
    """For the current class c and each modality (vectorized over batch):
         xn     = x / (||x||_2 + 1e-12)                 (top-level forward L2 norm)
         scores = xn @ Wdet[c].T + bdet[c]              (Conv1d kernel_size=1)      [B, R, K]
         soft   = softmax(scores) over R                (torch softmax dim=-1 == r)
         attn   = mean_k(soft)                          (sum(dim=3)/k)              [B, R, 1]
         pooled = mean_r(attn * xn)                     (map.mean(1))               [B, D]
       Then write the per-class outer product of the two pooled vectors:
         z[c, b, j, k] = pooled_eeg[b, j] * pooled_eye[b, k]
    """
    w = wdet_ref[0]        # [K, D]
    bias = bdet_ref[0]     # [1, K]

    def pool(x3):          # x3: [B, R, D]
        b, r, d = x3.shape
        x = x3.reshape(b * r, d)
        nrm = jnp.sqrt(jnp.sum(x * x, axis=1, keepdims=True))
        xn = x / (nrm + 1e-12)                                                # [B*R, D]
        s = jax.lax.dot_general(xn, w, (((1,), (1,)), ((), ())),
                                preferred_element_type=jnp.float32) + bias    # [B*R, K]
        s3 = s.reshape(b, r, K_DET)                                           # [B, R, K]
        m = jnp.max(s3, axis=1, keepdims=True)
        e = jnp.exp(s3 - m)
        soft = e / jnp.sum(e, axis=1, keepdims=True)                          # softmax over R
        attn = jnp.mean(soft, axis=2, keepdims=True)                          # mean over K
        xn3 = xn.reshape(b, r, d)
        return jnp.sum(attn * xn3, axis=1) * (1.0 / r)                        # mean over R -> [B, D]

    eegp = pool(v_ref[...])                         # [B, D]
    eyep = pool(q_ref[...])                         # eeg detectors reused (as in the source)
    z_ref[0] = eegp[:, :, None] * eyep[:, None, :]  # [B, D, D]  (flattened by free XLA reshape)


# --------------------------------------------------------------------------------------
# Kernel 2: per-class nn.Bilinear fusion (tiled long-contraction matmul) + 2-layer MLP head.
#   grid = (class c [parallel], contraction tile t [arbitrary])
# --------------------------------------------------------------------------------------
def _bilinear_classifier_kernel(z_ref, wb_ref, bb_ref, w1_ref, b1_ref, w2_ref, b2_ref,
                                out_ref, acc_ref):
    """acc[b, o] += z_tile[b, :] @ Wb_tile[:, o]    (z = flattened outer product of pooled feats)
       On the last contraction tile:  out = relu((acc + bb) @ W1 + b1) . W2_row + b2
    """
    t = pl.program_id(1)

    @pl.when(t == 0)
    def _():
        acc_ref[...] = jnp.zeros_like(acc_ref)

    acc_ref[...] += jnp.dot(z_ref[0], wb_ref[0], preferred_element_type=jnp.float32)

    @pl.when(t == pl.num_programs(1) - 1)
    def _():
        y = acc_ref[...] + bb_ref[0]                                                   # [B, D]
        h = jnp.maximum(jnp.dot(y, w1_ref[0], preferred_element_type=jnp.float32)
                        + b1_ref[0], 0.0)                                              # [B, M]
        # FC2 has a single output feature: VPU multiply + lane reduce (no (M,1) MXU operand).
        out_ref[0] = jnp.sum(h * w2_ref[0], axis=1, keepdims=True) + b2_ref[0]         # [B, 1]


# --------------------------------------------------------------------------------------
# Parameters (deterministic synthetic init; shapes follow the module __init__)
# --------------------------------------------------------------------------------------
def init_params(key):
    C, D, M, K = NUM_CLASSES, HIDDEN, MID, K_DET
    ks = jax.random.split(key, 8)
    return dict(
        Wdet=0.5 * jax.random.normal(ks[0], (C, K, D), jnp.float32),     # Conv1d k=1 weights
        bdet=0.1 * jax.random.normal(ks[1], (C, 1, K), jnp.float32),     # Conv1d biases
        # Kernel-ready flattened bilinear weight (no in-jit transpose):
        #   Wb_flat[c, j*D + k, o] corresponds to torch bilinears[c].weight[o, j, k]
        Wb_flat=0.25 * jax.random.normal(ks[2], (C, D * D, D), jnp.float32),
        bb=0.1 * jax.random.normal(ks[3], (C, 1, D), jnp.float32),
        W1=0.1 * jax.random.normal(ks[4], (C, D, M), jnp.float32),       # FCNet(D, MID, relu)
        b1=0.05 * jax.random.normal(ks[5], (C, 1, M), jnp.float32),
        W2=0.1 * jax.random.normal(ks[6], (C, 1, M), jnp.float32),       # FCNet(MID, 1), row layout
        b2=0.05 * jax.random.normal(ks[7], (C, 1, 1), jnp.float32),
    )


# --------------------------------------------------------------------------------------
# Forward wrapper
# --------------------------------------------------------------------------------------
@jax.jit
def hierarchical_attn_forward(v, q, params):
    C, D, M, K = NUM_CLASSES, HIDDEN, MID, K_DET
    B, R1, _ = v.shape
    R2 = q.shape[1]

    # ---- kernel 1: L2-norm + per-class attention pooling + per-class outer product ----
    zmap = pl.pallas_call(
        _senti_map_outer_kernel,
        out_shape=jax.ShapeDtypeStruct((C, B, D, D), jnp.float32),
        grid=(C,),
        in_specs=[
            pl.BlockSpec((B, R1, D), lambda c: (0, 0, 0)),
            pl.BlockSpec((B, R2, D), lambda c: (0, 0, 0)),
            pl.BlockSpec((1, K, D), lambda c: (c, 0, 0)),
            pl.BlockSpec((1, 1, K), lambda c: (c, 0, 0)),
        ],
        out_specs=pl.BlockSpec((1, B, D, D), lambda c: (c, 0, 0, 0)),
        compiler_params=pltpu.CompilerParams(dimension_semantics=("parallel",)),
    )(v, q, params["Wdet"], params["bdet"])

    # Contiguous flatten (j, k) -> j*D + k to match Wb_flat's layout; metadata-only reshape.
    z = zmap.reshape(C, B, DD)

    # ---- kernel 2: per-class bilinear fusion (tiled contraction) + MLP head ----
    nk = DD // TK
    logits = pl.pallas_call(
        _bilinear_classifier_kernel,
        out_shape=jax.ShapeDtypeStruct((C, B, 1), jnp.float32),
        grid=(C, nk),
        in_specs=[
            pl.BlockSpec((1, B, TK), lambda c, t: (c, 0, t)),      # flattened outer product tile
            pl.BlockSpec((1, TK, D), lambda c, t: (c, t, 0)),      # bilinear weight tile (streams)
            pl.BlockSpec((1, 1, D), lambda c, t: (c, 0, 0)),       # bilinear bias
            pl.BlockSpec((1, D, M), lambda c, t: (c, 0, 0)),       # FC1 weight (fetched once/class)
            pl.BlockSpec((1, 1, M), lambda c, t: (c, 0, 0)),       # FC1 bias
            pl.BlockSpec((1, 1, M), lambda c, t: (c, 0, 0)),       # FC2 weight (row layout)
            pl.BlockSpec((1, 1, 1), lambda c, t: (c, 0, 0)),       # FC2 bias
        ],
        out_specs=pl.BlockSpec((1, B, 1), lambda c, t: (c, 0, 0)),
        scratch_shapes=[pltpu.VMEM((B, D), jnp.float32)],          # bilinear accumulator
        compiler_params=pltpu.CompilerParams(
            dimension_semantics=("parallel", "arbitrary")),
        cost_estimate=pl.CostEstimate(
            flops=2 * C * B * (DD * D + D * M + M),
            transcendentals=0,
            bytes_accessed=4 * (C * DD * D + C * B * DD + C * D * M + C * M)),
    )(z, params["Wb_flat"], params["bb"], params["W1"], params["b1"],
      params["W2"], params["b2"])

    # torch.cat(out, dim=-1) -> [batch, emotion_class]
    return jnp.transpose(logits[:, :, 0])


# --------------------------------------------------------------------------------------
# Pure-JAX reference (same math, no Pallas) for a sanity check
# --------------------------------------------------------------------------------------
def forward_reference(v, q, p):
    def l2n(x):
        return x / (jnp.linalg.norm(x, axis=2, keepdims=True) + 1e-12)

    vn, qn = l2n(v), l2n(q)

    def pooled(x):
        s = jnp.einsum('brd,ckd->cbrk', x, p["Wdet"]) + p["bdet"][:, None, :, :]
        soft = jax.nn.softmax(s, axis=2)                 # softmax over r
        attn = jnp.mean(soft, axis=3)                    # mean over k -> [C, B, R]
        return jnp.mean(attn[..., None] * x[None, :, :, :], axis=2)   # [C, B, D]

    eegp, eyep = pooled(vn), pooled(qn)
    C, B, D = eegp.shape
    z = (eegp[:, :, :, None] * eyep[:, :, None, :]).reshape(C, B, D * D)
    y = jnp.einsum('cbz,czo->cbo', z, p["Wb_flat"]) + p["bb"]
    h = jnp.maximum(jnp.einsum('cbd,cdm->cbm', y, p["W1"]) + p["b1"], 0.0)
    out = jnp.einsum('cbm,cm->cb', h, p["W2"][:, 0, :]) + p["b2"][:, :, 0]
    return out.T


if __name__ == "__main__":
    key = jax.random.PRNGKey(0)
    kp, kv, kq = jax.random.split(key, 3)

    B, R1, R2 = 2, 8, 8
    params = init_params(kp)
    v = jax.random.normal(kv, (B, R1, HIDDEN), jnp.float32)   # "eeg" features at hidden size
    q = jax.random.normal(kq, (B, R2, HIDDEN), jnp.float32)   # "eye" features at hidden size

    out = hierarchical_attn_forward(v, q, params)
    out = jax.block_until_ready(out)

    ref = forward_reference(v, q, params)
    if out.shape != (B, NUM_CLASSES):
        raise AssertionError(f"bad output shape {out.shape}")
    if not jnp.allclose(out, ref, rtol=5e-2, atol=1e-2):
        raise AssertionError(f"kernel/reference mismatch:\nkernel={out}\nref={ref}")

    print("KERNEL_OK")
</pallas_src>

<mosaic_0001>
module attributes {stable_mosaic.version = 11 : i64} {
  func.func @_senti_map_outer_kernel(%arg0: i32, %arg1: memref<2x8x128xf32, #tpu.memory_space<vmem>>, %arg2: memref<2x8x128xf32, #tpu.memory_space<vmem>>, %arg3: memref<1x10x128xf32, #tpu.memory_space<vmem>>, %arg4: memref<1x1x10xf32, #tpu.memory_space<vmem>>, %arg5: memref<1x2x128x128xf32, #tpu.memory_space<vmem>>) attributes {dimension_semantics = [#tpu.dimension_semantics<parallel>], iteration_bounds = array<i64: 4>, scalar_prefetch = 0 : i64, scratch_operands = 0 : i64, tpu.core_type = #tpu.core_type<tc>, window_params = [{pipeline_mode = #tpu.pipeline_mode<synchronous>, transform_indices = @transform_0, window_bounds = array<i64: 2, 8, 128>}, {pipeline_mode = #tpu.pipeline_mode<synchronous>, transform_indices = @transform_1, window_bounds = array<i64: 2, 8, 128>}, {transform_indices = @transform_2, window_bounds = array<i64: 1, 10, 128>}, {transform_indices = @transform_3, window_bounds = array<i64: 1, 1, 10>}, {transform_indices = @transform_4, window_bounds = array<i64: 1, 2, 128, 128>}]} {
    %c0 = arith.constant 0 : index
    %c0_0 = arith.constant 0 : index
    %c0_1 = arith.constant 0 : index
    %0 = vector.load %arg3[%c0, %c0_0, %c0_1] : memref<1x10x128xf32, #tpu.memory_space<vmem>>, vector<1x10x128xf32>
    %1 = vector.shape_cast %0 : vector<1x10x128xf32> to vector<10x128xf32>
    %c0_2 = arith.constant 0 : index
    %c0_3 = arith.constant 0 : index
    %c0_4 = arith.constant 0 : index
    %2 = vector.load %arg4[%c0_2, %c0_3, %c0_4] : memref<1x1x10xf32, #tpu.memory_space<vmem>>, vector<1x1x10xf32>
    %3 = vector.shape_cast %2 : vector<1x1x10xf32> to vector<1x10xf32>
    %c0_5 = arith.constant 0 : index
    %c0_6 = arith.constant 0 : index
    %c0_7 = arith.constant 0 : index
    %4 = vector.load %arg1[%c0_5, %c0_6, %c0_7] : memref<2x8x128xf32, #tpu.memory_space<vmem>>, vector<2x8x128xf32>
    %5 = vector.shape_cast %4 : vector<2x8x128xf32> to vector<16x128xf32>
    %6 = arith.mulf %5, %5 : vector<16x128xf32>
    %cst = arith.constant dense<0.000000e+00> : vector<16xf32>
    %7 = vector.multi_reduction <add>, %6, %cst [1] : vector<16x128xf32> to vector<16xf32>
    %8 = vector.shape_cast %7 : vector<16xf32> to vector<16x1xf32>
    %9 = math.sqrt %8 : vector<16x1xf32>
    %cst_8 = arith.constant 9.99999996E-13 : f32
    %10 = vector.broadcast %cst_8 : f32 to vector<16x1xf32>
    %11 = arith.addf %9, %10 : vector<16x1xf32>
    %12 = vector.broadcast %11 : vector<16x1xf32> to vector<16x128xf32>
    %13 = arith.divf %5, %12 : vector<16x128xf32>
    %cst_9 = arith.constant dense<0.000000e+00> : vector<16x10xf32>
    %14 = tpu.matmul %13, %1, %cst_9 {dimension_numbers = #tpu.dot_dimension_numbers<[1], [1], [0], [0], [0, 0, 1, 0], [], []>} : vector<16x128xf32>, vector<10x128xf32>, vector<16x10xf32> -> vector<16x10xf32>
    %15 = vector.broadcast %3 : vector<1x10xf32> to vector<16x10xf32>
    %16 = arith.addf %14, %15 : vector<16x10xf32>
    %17 = vector.shape_cast %16 : vector<16x10xf32> to vector<2x8x10xf32>
    %cst_10 = arith.constant dense<0xFF800000> : vector<2x10xf32>
    %18 = vector.multi_reduction <maximumf>, %17, %cst_10 [1] : vector<2x8x10xf32> to vector<2x10xf32>
    %19 = vector.shape_cast %18 : vector<2x10xf32> to vector<2x1x10xf32>
    %20 = vector.broadcast %19 : vector<2x1x10xf32> to vector<2x8x10xf32>
    %21 = arith.subf %17, %20 : vector<2x8x10xf32>
    %22 = math.exp %21 : vector<2x8x10xf32>
    %cst_11 = arith.constant dense<0.000000e+00> : vector<2x10xf32>
    %23 = vector.multi_reduction <add>, %22, %cst_11 [1] : vector<2x8x10xf32> to vector<2x10xf32>
    %24 = vector.shape_cast %23 : vector<2x10xf32> to vector<2x1x10xf32>
    %25 = vector.broadcast %24 : vector<2x1x10xf32> to vector<2x8x10xf32>
    %26 = arith.divf %22, %25 : vector<2x8x10xf32>
    %cst_12 = arith.constant dense<0.000000e+00> : vector<2x8xf32>
    %27 = vector.multi_reduction <add>, %26, %cst_12 [2] : vector<2x8x10xf32> to vector<2x8xf32>
    %28 = vector.shape_cast %27 : vector<2x8xf32> to vector<2x8x1xf32>
    %cst_13 = arith.constant 1.000000e+01 : f32
    %29 = vector.broadcast %cst_13 : f32 to vector<2x8x1xf32>
    %30 = arith.divf %28, %29 : vector<2x8x1xf32>
    %31 = vector.shape_cast %13 : vector<16x128xf32> to vector<2x8x128xf32>
    %32 = vector.broadcast %30 : vector<2x8x1xf32> to vector<2x8x128xf32>
    %33 = arith.mulf %32, %31 : vector<2x8x128xf32>
    %cst_14 = arith.constant dense<0.000000e+00> : vector<2x128xf32>
    %34 = vector.multi_reduction <add>, %33, %cst_14 [1] : vector<2x8x128xf32> to vector<2x128xf32>
    %cst_15 = arith.constant 1.250000e-01 : f32
    %35 = vector.broadcast %cst_15 : f32 to vector<2x128xf32>
    %36 = arith.mulf %34, %35 : vector<2x128xf32>
    %c0_16 = arith.constant 0 : index
    %c0_17 = arith.constant 0 : index
    %c0_18 = arith.constant 0 : index
    %37 = vector.load %arg2[%c0_16, %c0_17, %c0_18] : memref<2x8x128xf32, #tpu.memory_space<vmem>>, vector<2x8x128xf32>
    %38 = vector.shape_cast %37 : vector<2x8x128xf32> to vector<16x128xf32>
    %39 = arith.mulf %38, %38 : vector<16x128xf32>
    %cst_19 = arith.constant dense<0.000000e+00> : vector<16xf32>
    %40 = vector.multi_reduction <add>, %39, %cst_19 [1] : vector<16x128xf32> to vector<16xf32>
    %41 = vector.shape_cast %40 : vector<16xf32> to vector<16x1xf32>
    %42 = math.sqrt %41 : vector<16x1xf32>
    %cst_20 = arith.constant 9.99999996E-13 : f32
    %43 = vector.broadcast %cst_20 : f32 to vector<16x1xf32>
    %44 = arith.addf %42, %43 : vector<16x1xf32>
    %45 = vector.broadcast %44 : vector<16x1xf32> to vector<16x128xf32>
    %46 = arith.divf %38, %45 : vector<16x128xf32>
    %cst_21 = arith.constant dense<0.000000e+00> : vector<16x10xf32>
    %47 = tpu.matmul %46, %1, %cst_21 {dimension_numbers = #tpu.dot_dimension_numbers<[1], [1], [0], [0], [0, 0, 1, 0], [], []>} : vector<16x128xf32>, vector<10x128xf32>, vector<16x10xf32> -> vector<16x10xf32>
    %48 = vector.broadcast %3 : vector<1x10xf32> to vector<16x10xf32>
    %49 = arith.addf %47, %48 : vector<16x10xf32>
    %50 = vector.shape_cast %49 : vector<16x10xf32> to vector<2x8x10xf32>
    %cst_22 = arith.constant dense<0xFF800000> : vector<2x10xf32>
    %51 = vector.multi_reduction <maximumf>, %50, %cst_22 [1] : vector<2x8x10xf32> to vector<2x10xf32>
    %52 = vector.shape_cast %51 : vector<2x10xf32> to vector<2x1x10xf32>
    %53 = vector.broadcast %52 : vector<2x1x10xf32> to vector<2x8x10xf32>
    %54 = arith.subf %50, %53 : vector<2x8x10xf32>
    %55 = math.exp %54 : vector<2x8x10xf32>
    %cst_23 = arith.constant dense<0.000000e+00> : vector<2x10xf32>
    %56 = vector.multi_reduction <add>, %55, %cst_23 [1] : vector<2x8x10xf32> to vector<2x10xf32>
    %57 = vector.shape_cast %56 : vector<2x10xf32> to vector<2x1x10xf32>
    %58 = vector.broadcast %57 : vector<2x1x10xf32> to vector<2x8x10xf32>
    %59 = arith.divf %55, %58 : vector<2x8x10xf32>
    %cst_24 = arith.constant dense<0.000000e+00> : vector<2x8xf32>
    %60 = vector.multi_reduction <add>, %59, %cst_24 [2] : vector<2x8x10xf32> to vector<2x8xf32>
    %61 = vector.shape_cast %60 : vector<2x8xf32> to vector<2x8x1xf32>
    %cst_25 = arith.constant 1.000000e+01 : f32
    %62 = vector.broadcast %cst_25 : f32 to vector<2x8x1xf32>
    %63 = arith.divf %61, %62 : vector<2x8x1xf32>
    %64 = vector.shape_cast %46 : vector<16x128xf32> to vector<2x8x128xf32>
    %65 = vector.broadcast %63 : vector<2x8x1xf32> to vector<2x8x128xf32>
    %66 = arith.mulf %65, %64 : vector<2x8x128xf32>
    %cst_26 = arith.constant dense<0.000000e+00> : vector<2x128xf32>
    %67 = vector.multi_reduction <add>, %66, %cst_26 [1] : vector<2x8x128xf32> to vector<2x128xf32>
    %cst_27 = arith.constant 1.250000e-01 : f32
    %68 = vector.broadcast %cst_27 : f32 to vector<2x128xf32>
    %69 = arith.mulf %67, %68 : vector<2x128xf32>
    %70 = vector.shape_cast %36 : vector<2x128xf32> to vector<2x128x1xf32>
    %71 = vector.shape_cast %69 : vector<2x128xf32> to vector<2x1x128xf32>
    %72 = vector.broadcast %70 : vector<2x128x1xf32> to vector<2x128x128xf32>
    %73 = vector.broadcast %71 : vector<2x1x128xf32> to vector<2x128x128xf32>
    %74 = arith.mulf %72, %73 : vector<2x128x128xf32>
    %c0_28 = arith.constant 0 : index
    %c0_29 = arith.constant 0 : index
    %c0_30 = arith.constant 0 : index
    %c0_31 = arith.constant 0 : index
    %75 = vector.load %arg5[%c0_28, %c0_29, %c0_30, %c0_31] : memref<1x2x128x128xf32, #tpu.memory_space<vmem>>, vector<1x2x128x128xf32>
    %76 = vector.shape_cast %75 : vector<1x2x128x128xf32> to vector<2x128x128xf32>
    %77 = vector.shape_cast %74 : vector<2x128x128xf32> to vector<1x2x128x128xf32>
    tpu.vector_store %arg5[%c0_28, %c0_29, %c0_30, %c0_31], %77 {strides = array<i32>} : memref<1x2x128x128xf32, #tpu.memory_space<vmem>>, vector<1x2x128x128xf32>,
    return
  }
  func.func @transform_0(%arg0: i32) -> (i32, i32, i32) {
    %c0_i32 = arith.constant 0 : i32
    %c0_i32_0 = arith.constant 0 : i32
    %c0_i32_1 = arith.constant 0 : i32
    %c0_i32_2 = arith.constant 0 : i32
    return %c0_i32, %c0_i32_0, %c0_i32_1 : i32, i32, i32
  }
  func.func @transform_1(%arg0: i32) -> (i32, i32, i32) {
    %c0_i32 = arith.constant 0 : i32
    %c0_i32_0 = arith.constant 0 : i32
    %c0_i32_1 = arith.constant 0 : i32
    %c0_i32_2 = arith.constant 0 : i32
    return %c0_i32, %c0_i32_0, %c0_i32_1 : i32, i32, i32
  }
  func.func @transform_2(%arg0: i32) -> (i32, i32, i32) {
    %c0_i32 = arith.constant 0 : i32
    %c0_i32_0 = arith.constant 0 : i32
    %c0_i32_1 = arith.constant 0 : i32
    return %arg0, %c0_i32, %c0_i32_0 : i32, i32, i32
  }
  func.func @transform_3(%arg0: i32) -> (i32, i32, i32) {
    %c0_i32 = arith.constant 0 : i32
    %c0_i32_0 = arith.constant 0 : i32
    %c0_i32_1 = arith.constant 0 : i32
    return %arg0, %c0_i32, %c0_i32_0 : i32, i32, i32
  }
  func.func @transform_4(%arg0: i32) -> (i32, i32, i32, i32) {
    %c0_i32 = arith.constant 0 : i32
    %c0_i32_0 = arith.constant 0 : i32
    %c0_i32_1 = arith.constant 0 : i32
    %c0_i32_2 = arith.constant 0 : i32
    return %arg0, %c0_i32, %c0_i32_0, %c0_i32_1 : i32, i32, i32, i32
  }
}

module attributes {stable_mosaic.version = 11 : i64} {
  func.func @_bilinear_classifier_kernel(%arg0: i32, %arg1: i32, %arg2: memref<1x2x8192xf32, #tpu.memory_space<vmem>>, %arg3: memref<1x8192x128xf32, #tpu.memory_space<vmem>>, %arg4: memref<1x1x128xf32, #tpu.memory_space<vmem>>, %arg5: memref<1x128x512xf32, #tpu.memory_space<vmem>>, %arg6: memref<1x1x512xf32, #tpu.memory_space<vmem>>, %arg7: memref<1x1x512xf32, #tpu.memory_space<vmem>>, %arg8: memref<1x1x1xf32, #tpu.memory_space<vmem>>, %arg9: memref<1x2x1xf32, #tpu.memory_space<vmem>>, %arg10: memref<2x128xf32, #tpu.memory_space<vmem>>) attributes {dimension_semantics = [#tpu.dimension_semantics<parallel>, #tpu.dimension_semantics<arbitrary>], iteration_bounds = array<i64: 4, 2>, scalar_prefetch = 0 : i64, scratch_operands = 1 : i64, tpu.core_type = #tpu.core_type<tc>, window_params = [{transform_indices = @transform_0, window_bounds = array<i64: 1, 2, 8192>}, {transform_indices = @transform_1, window_bounds = array<i64: 1, 8192, 128>}, {transform_indices = @transform_2, window_bounds = array<i64: 1, 1, 128>}, {transform_indices = @transform_3, window_bounds = array<i64: 1, 128, 512>}, {transform_indices = @transform_4, window_bounds = array<i64: 1, 1, 512>}, {transform_indices = @transform_5, window_bounds = array<i64: 1, 1, 512>}, {transform_indices = @transform_6, window_bounds = array<i64: 1, 1, 1>}, {transform_indices = @transform_7, window_bounds = array<i64: 1, 2, 1>}]} {
    %c0_i32 = arith.constant 0 : i32
    %0 = arith.cmpi eq, %arg1, %c0_i32 : i32
    %1 = arith.extui %0 : i1 to i32
    %c0_i32_0 = arith.constant 0 : i32
    %2 = arith.cmpi ne, %1, %c0_i32_0 : i32
    scf.if %2 {
      %cst_11 = arith.constant 0.000000e+00 : f32
      %14 = vector.broadcast %cst_11 : f32 to vector<2x128xf32>
      %c0_12 = arith.constant 0 : index
      %c0_13 = arith.constant 0 : index
      %15 = vector.load %arg10[%c0_12, %c0_13] : memref<2x128xf32, #tpu.memory_space<vmem>>, vector<2x128xf32>
      tpu.vector_store %arg10[%c0_12, %c0_13], %14 {strides = array<i32>} : memref<2x128xf32, #tpu.memory_space<vmem>>, vector<2x128xf32>,
    } else {
    }
    %c0 = arith.constant 0 : index
    %c0_1 = arith.constant 0 : index
    %3 = vector.load %arg10[%c0, %c0_1] : memref<2x128xf32, #tpu.memory_space<vmem>>, vector<2x128xf32>
    %c0_2 = arith.constant 0 : index
    %c0_3 = arith.constant 0 : index
    %c0_4 = arith.constant 0 : index
    %4 = vector.load %arg2[%c0_2, %c0_3, %c0_4] : memref<1x2x8192xf32, #tpu.memory_space<vmem>>, vector<1x2x8192xf32>
    %5 = vector.shape_cast %4 : vector<1x2x8192xf32> to vector<2x8192xf32>
    %c0_5 = arith.constant 0 : index
    %c0_6 = arith.constant 0 : index
    %c0_7 = arith.constant 0 : index
    %6 = vector.load %arg3[%c0_5, %c0_6, %c0_7] : memref<1x8192x128xf32, #tpu.memory_space<vmem>>, vector<1x8192x128xf32>
    %7 = vector.shape_cast %6 : vector<1x8192x128xf32> to vector<8192x128xf32>
    %cst = arith.constant dense<0.000000e+00> : vector<2x128xf32>
    %8 = tpu.matmul %5, %7, %cst {dimension_numbers = #tpu.dot_dimension_numbers<[1], [0], [0], [1], [0, 0, 1, 1], [], []>} : vector<2x8192xf32>, vector<8192x128xf32>, vector<2x128xf32> -> vector<2x128xf32>
    %9 = arith.addf %3, %8 : vector<2x128xf32>
    %c0_8 = arith.constant 0 : index
    %c0_9 = arith.constant 0 : index
    %10 = vector.load %arg10[%c0_8, %c0_9] : memref<2x128xf32, #tpu.memory_space<vmem>>, vector<2x128xf32>
    tpu.vector_store %arg10[%c0_8, %c0_9], %9 {strides = array<i32>} : memref<2x128xf32, #tpu.memory_space<vmem>>, vector<2x128xf32>,
    %c1_i32 = arith.constant 1 : i32
    %11 = arith.cmpi eq, %arg1, %c1_i32 : i32
    %12 = arith.extui %11 : i1 to i32
    %c0_i32_10 = arith.constant 0 : i32
    %13 = arith.cmpi ne, %12, %c0_i32_10 : i32
    scf.if %13 {
      %c0_11 = arith.constant 0 : index
      %c0_12 = arith.constant 0 : index
      %14 = vector.load %arg10[%c0_11, %c0_12] : memref<2x128xf32, #tpu.memory_space<vmem>>, vector<2x128xf32>
      %c0_13 = arith.constant 0 : index
      %c0_14 = arith.constant 0 : index
      %c0_15 = arith.constant 0 : index
      %15 = vector.load %arg4[%c0_13, %c0_14, %c0_15] : memref<1x1x128xf32, #tpu.memory_space<vmem>>, vector<1x1x128xf32>
      %16 = vector.shape_cast %15 : vector<1x1x128xf32> to vector<1x128xf32>
      %17 = vector.broadcast %16 : vector<1x128xf32> to vector<2x128xf32>
      %18 = arith.addf %14, %17 : vector<2x128xf32>
      %c0_16 = arith.constant 0 : index
      %c0_17 = arith.constant 0 : index
      %c0_18 = arith.constant 0 : index
      %19 = vector.load %arg5[%c0_16, %c0_17, %c0_18] : memref<1x128x512xf32, #tpu.memory_space<vmem>>, vector<1x128x512xf32>
      %20 = vector.shape_cast %19 : vector<1x128x512xf32> to vector<128x512xf32>
      %cst_19 = arith.constant dense<0.000000e+00> : vector<2x512xf32>
      %21 = tpu.matmul %18, %20, %cst_19 {dimension_numbers = #tpu.dot_dimension_numbers<[1], [0], [0], [1], [0, 0, 1, 1], [], []>} : vector<2x128xf32>, vector<128x512xf32>, vector<2x512xf32> -> vector<2x512xf32>
      %c0_20 = arith.constant 0 : index
      %c0_21 = arith.constant 0 : index
      %c0_22 = arith.constant 0 : index
      %22 = vector.load %arg6[%c0_20, %c0_21, %c0_22] : memref<1x1x512xf32, #tpu.memory_space<vmem>>, vector<1x1x512xf32>
      %23 = vector.shape_cast %22 : vector<1x1x512xf32> to vector<1x512xf32>
      %24 = vector.broadcast %23 : vector<1x512xf32> to vector<2x512xf32>
      %25 = arith.addf %21, %24 : vector<2x512xf32>
      %cst_23 = arith.constant 0.000000e+00 : f32
      %26 = vector.broadcast %cst_23 : f32 to vector<2x512xf32>
      %27 = arith.maximumf %25, %26 : vector<2x512xf32>
      %c0_24 = arith.constant 0 : index
      %c0_25 = arith.constant 0 : index
      %c0_26 = arith.constant 0 : index
      %28 = vector.load %arg7[%c0_24, %c0_25, %c0_26] : memref<1x1x512xf32, #tpu.memory_space<vmem>>, vector<1x1x512xf32>
      %29 = vector.shape_cast %28 : vector<1x1x512xf32> to vector<1x512xf32>
      %30 = vector.broadcast %29 : vector<1x512xf32> to vector<2x512xf32>
      %31 = arith.mulf %27, %30 : vector<2x512xf32>
      %cst_27 = arith.constant dense<0.000000e+00> : vector<2xf32>
      %32 = vector.multi_reduction <add>, %31, %cst_27 [1] : vector<2x512xf32> to vector<2xf32>
      %33 = vector.shape_cast %32 : vector<2xf32> to vector<2x1xf32>
      %c0_28 = arith.constant 0 : index
      %c0_29 = arith.constant 0 : index
      %c0_30 = arith.constant 0 : index
      %34 = vector.load %arg8[%c0_28, %c0_29, %c0_30] : memref<1x1x1xf32, #tpu.memory_space<vmem>>, vector<1x1x1xf32>
      %35 = vector.shape_cast %34 : vector<1x1x1xf32> to vector<1x1xf32>
      %36 = vector.broadcast %35 : vector<1x1xf32> to vector<2x1xf32>
      %37 = arith.addf %33, %36 : vector<2x1xf32>
      %c0_31 = arith.constant 0 : index
      %c0_32 = arith.constant 0 : index
      %c0_33 = arith.constant 0 : index
      %38 = vector.load %arg9[%c0_31, %c0_32, %c0_33] : memref<1x2x1xf32, #tpu.memory_space<vmem>>, vector<1x2x1xf32>
      %39 = vector.shape_cast %38 : vector<1x2x1xf32> to vector<2x1xf32>
      %40 = vector.shape_cast %37 : vector<2x1xf32> to vector<1x2x1xf32>
      tpu.vector_store %arg9[%c0_31, %c0_32, %c0_33], %40 {strides = array<i32>} : memref<1x2x1xf32, #tpu.memory_space<vmem>>, vector<1x2x1xf32>,
    } else {
    }
    return
  }
  func.func @transform_0(%arg0: i32, %arg1: i32) -> (i32, i32, i32) {
    %c0_i32 = arith.constant 0 : i32
    %c0_i32_0 = arith.constant 0 : i32
    return %arg0, %c0_i32, %arg1 : i32, i32, i32
  }
  func.func @transform_1(%arg0: i32, %arg1: i32) -> (i32, i32, i32) {
    %c0_i32 = arith.constant 0 : i32
    %c0_i32_0 = arith.constant 0 : i32
    return %arg0, %arg1, %c0_i32 : i32, i32, i32
  }
  func.func @transform_2(%arg0: i32, %arg1: i32) -> (i32, i32, i32) {
    %c0_i32 = arith.constant 0 : i32
    %c0_i32_0 = arith.constant 0 : i32
    %c0_i32_1 = arith.constant 0 : i32
    return %arg0, %c0_i32, %c0_i32_0 : i32, i32, i32
  }
  func.func @transform_3(%arg0: i32, %arg1: i32) -> (i32, i32, i32) {
    %c0_i32 = arith.constant 0 : i32
    %c0_i32_0 = arith.constant 0 : i32
    %c0_i32_1 = arith.constant 0 : i32
    return %arg0, %c0_i32, %c0_i32_0 : i32, i32, i32
  }
  func.func @transform_4(%arg0: i32, %arg1: i32) -> (i32, i32, i32) {
    %c0_i32 = arith.constant 0 : i32
    %c0_i32_0 = arith.constant 0 : i32
    %c0_i32_1 = arith.constant 0 : i32
    return %arg0, %c0_i32, %c0_i32_0 : i32, i32, i32
  }
  func.func @transform_5(%arg0: i32, %arg1: i32) -> (i32, i32, i32) {
    %c0_i32 = arith.constant 0 : i32
    %c0_i32_0 = arith.constant 0 : i32
    %c0_i32_1 = arith.constant 0 : i32
    return %arg0, %c0_i32, %c0_i32_0 : i32, i32, i32
  }
  func.func @transform_6(%arg0: i32, %arg1: i32) -> (i32, i32, i32) {
    %c0_i32 = arith.constant 0 : i32
    %c0_i32_0 = arith.constant 0 : i32
    %c0_i32_1 = arith.constant 0 : i32
    return %arg0, %c0_i32, %c0_i32_0 : i32, i32, i32
  }
  func.func @transform_7(%arg0: i32, %arg1: i32) -> (i32, i32, i32) {
    %c0_i32 = arith.constant 0 : i32
    %c0_i32_0 = arith.constant 0 : i32
    %c0_i32_1 = arith.constant 0 : i32
    return %arg0, %c0_i32, %c0_i32_0 : i32, i32, i32
  }
}

</mosaic_0001>

<llo_original>
// kernel: hierarchical_attn_forward.2
$region0: #{hierarchical_attn_forward.2}
  #allocation0 [shape = 'u32[]', space=smem, size = 0x4, offset = 0x4, fixed_abs, tag = 'smem constant byte address 0x4 - core index']
  #allocation1 [shape = 'u32[72,128]{1,0:T(1,128)}', space=vmem, size = 0x9000, scoped, tag = 'internal scratch']
  %s0 = inlined_call_operand.hbm [shape: f32[2,8,128], index: 0, kind: input, shape index: {}]
  %s1 = inlined_call_operand.hbm [shape: f32[2,8,128], index: 1, kind: input, shape index: {}]
  %s2 = inlined_call_operand.vmem [shape: f32[4,10,128], index: 2, kind: input, shape index: {}]
  %s3 = inlined_call_operand.hbm [shape: f32[4,1,10], index: 3, kind: input, shape index: {}]
  %s4 = inlined_call_operand.vmem [shape: f32[4,2,128,128], index: 4, kind: output, shape index: {}]
  %s5 = sld [smem:[#allocation0]]
  $region61: #{hierarchical_attn_forward.2} parent=0
    _
  %s7 = ssub.s32 1, %s5
  %s8 = scalar_select 0, %s7, %s5
  $region1: #{hierarchical_attn_forward.2} parent=0
    #allocation2 [shape = 'u8[8192]{0}', space=vmem, size = 0x2000, scoped, tag = 'input window, operand 0, single buffered']
    #allocation3 [shape = 's32[2]{0}', space=sflag, size = 0x8, scoped, tag = 'scoped memory for hierarchical_attn_forward.2']
    #allocation4 [shape = 'u8[8192]{0}', space=vmem, size = 0x2000, scoped, tag = 'input window, operand 1, single buffered']
    #allocation5 [shape = 's32[1]{0}', space=sflag, size = 0x4, scoped, tag = 'scoped memory for hierarchical_attn_forward.2']
    #allocation6 [shape = 'u8[1024]{0}', space=vmem, size = 0x400, scoped, tag = 'input window, operand 3']
    %9 = vsyncpa [#allocation3], 0
    %10 = vsyncpa [#allocation5], 0
    loop: start=0, step=1, limit=6
    $region2: #{hierarchical_attn_forward.2} parent=1 // loop_pre_header
      _
    $region3: #{hierarchical_attn_forward.2} parent=1 // loop_header
      %s12 = sphi 0, %s16
      %p13 = scmp.ge.s32.totalorder %s12, 6
      %s20 = sphi 0, %s20
      %s22 = sphi 0, %s20
      %s23 = sphi 0, %s22
      %s37 = sphi 0, %s23
      %s41 = sphi 0, %s41
      %s43 = sphi 0, %s41
      %s44 = sphi 0, %s43
      %s58 = sphi 0, %s44
      %s64 = sphi 0, %s66
      %s67 = sphi 0, %s64
      %s68 = sphi 0, %s67
      %s84 = sphi 0, %s68
      %s90 = sphi 0, %s92
      %s93 = sphi 0, %s90
      %s94 = sphi 0, %s93
      %s110 = sphi 0, %s94
      %s116 = sphi 0, %s118
      %s119 = sphi 0, %s116
      %s120 = sphi 0, %s119
      %s136 = sphi 0, %s120
    $region4: #{hierarchical_attn_forward.2} parent=1 // loop_header_branch
      %15 = sbr.rel (%p13) target = $region8
    $region5: #{hierarchical_attn_forward.2} parent=1 // loop_body
      %s17 = ssub.s32 %s12, 1
      %s18 = ssub.s32 %s12, 2
      %s19 = sadd.s32 %s12, 1
      %s21 = sadd.s32 %s20, 1
      %p24 = scmp.eq.s32.totalorder %s12, 3
      %p25 = scmp.ne.s32.totalorder %s20, %s22
      %p26 = scmp.eq.s32.totalorder %s12, 0
      %p27 = por %p25, %p26
      %p28 = scmp.ne.s32.totalorder %s20, %s22
      %p29 = scmp.eq.s32.totalorder %s17, 3
      %p30 = por %p28, %p29
      %p31 = scmp.ne.s32.totalorder %s22, %s23
      %p32 = scmp.eq.s32.totalorder %s17, 0
      %p33 = por %p31, %p32
      %p34 = scmp.ne.s32.totalorder %s22, %s23
      %p35 = scmp.eq.s32.totalorder %s18, 3
      %p36 = por %p34, %p35
      %p38 = scmp.ne.s32.totalorder %s23, %s37
      %p39 = scmp.eq.s32.totalorder %s18, 0
      %p40 = por %p38, %p39
      %s42 = sadd.s32 %s41, 1
      %p45 = scmp.eq.s32.totalorder %s12, 3
      %p46 = scmp.ne.s32.totalorder %s41, %s43
      %p47 = scmp.eq.s32.totalorder %s12, 0
      %p48 = por %p46, %p47
      %p49 = scmp.ne.s32.totalorder %s41, %s43
      %p50 = scmp.eq.s32.totalorder %s17, 3
      %p51 = por %p49, %p50
      %p52 = scmp.ne.s32.totalorder %s43, %s44
      %p53 = scmp.eq.s32.totalorder %s17, 0
      %p54 = por %p52, %p53
      %p55 = scmp.ne.s32.totalorder %s43, %s44
      %p56 = scmp.eq.s32.totalorder %s18, 3
      %p57 = por %p55, %p56
      %p59 = scmp.ne.s32.totalorder %s44, %s58
      %p60 = scmp.eq.s32.totalorder %s18, 0
      %p61 = por %p59, %p60
      %s62 = ssub.s32 %s12, %s19
      %p63 = scmp.eq.s32.totalorder %s62, 0
      %s65 = sadd.s32 %s64, 1
      %s66 = scalar_select %p63, %s64, %s65
      %p69 = pneg %p63
      %p70 = scmp.eq.s32.totalorder %s12, 3
      %p71 = por %p69, %p70
      %p72 = scmp.ne.s32.totalorder %s64, %s67
      %p73 = scmp.eq.s32.totalorder %s12, 0
      %p74 = por %p72, %p73
      %p75 = scmp.ne.s32.totalorder %s64, %s67
      %p76 = scmp.eq.s32.totalorder %s17, 3
      %p77 = por %p75, %p76
      %p78 = scmp.ne.s32.totalorder %s67, %s68
      %p79 = scmp.eq.s32.totalorder %s17, 0
      %p80 = por %p78, %p79
      %p81 = scmp.ne.s32.totalorder %s67, %s68
      %p82 = scmp.eq.s32.totalorder %s18, 3
      %p83 = por %p81, %p82
      %p85 = scmp.ne.s32.totalorder %s68, %s84
      %p86 = scmp.eq.s32.totalorder %s18, 0
      %p87 = por %p85, %p86
      %s88 = ssub.s32 %s12, %s19
      %p89 = scmp.eq.s32.totalorder %s88, 0
      %s91 = sadd.s32 %s90, 1
      %s92 = scalar_select %p89, %s90, %s91
      %p95 = pneg %p89
      %p96 = scmp.eq.s32.totalorder %s12, 3
      %p97 = por %p95, %p96
      %p98 = scmp.ne.s32.totalorder %s90, %s93
      %p99 = scmp.eq.s32.totalorder %s12, 0
      %p100 = por %p98, %p99
      %p101 = scmp.ne.s32.totalorder %s90, %s93
      %p102 = scmp.eq.s32.totalorder %s17, 3
      %p103 = por %p101, %p102
      %p104 = scmp.ne.s32.totalorder %s93, %s94
      %p105 = scmp.eq.s32.totalorder %s17, 0
      %p106 = por %p104, %p105
      %p107 = scmp.ne.s32.totalorder %s93, %s94
      %p108 = scmp.eq.s32.totalorder %s18, 3
      %p109 = por %p107, %p108
      %p111 = scmp.ne.s32.totalorder %s94, %s110
      %p112 = scmp.eq.s32.totalorder %s18, 0
      %p113 = por %p111, %p112
      %s114 = ssub.s32 %s12, %s19
      %p115 = scmp.eq.s32.totalorder %s114, 0
      %s117 = sadd.s32 %s116, 1
      %s118 = scalar_select %p115, %s116, %s117
      %p121 = pneg %p115
      %p122 = scmp.eq.s32.totalorder %s12, 3
      %p123 = por %p121, %p122
      %p124 = scmp.ne.s32.totalorder %s116, %s119
      %p125 = scmp.eq.s32.totalorder %s12, 0
      %p126 = por %p124, %p125
      %p127 = scmp.ne.s32.totalorder %s116, %s119
      %p128 = scmp.eq.s32.totalorder %s17, 3
      %p129 = por %p127, %p128
      %p130 = scmp.ne.s32.totalorder %s119, %s120
      %p131 = scmp.eq.s32.totalorder %s17, 0
      %p132 = por %p130, %p131
      %p133 = scmp.ne.s32.totalorder %s119, %s120
      %p134 = scmp.eq.s32.totalorder %s18, 3
      %p135 = por %p133, %p134
      %p137 = scmp.ne.s32.totalorder %s120, %s136
      %p138 = scmp.eq.s32.totalorder %s18, 0
      %p139 = por %p137, %p138
      %p140 = scmp.le.s32.totalorder 1, %s12
      %p141 = scmp.lt.s32.totalorder %s12, 5
      %p142 = pnand %p140, %p141
      %p143 = pneg %p142
      // Predicated region
      $region9: #{hierarchical_attn_forward.2} parent=5 // pred_check
        _
      $region10: #{hierarchical_attn_forward.2} parent=5 // pred_check_branch
        %145 = sbr.rel (%p142) target = $region12
      $region11: #{hierarchical_attn_forward.2} parent=5 // pred_region
        %s146 = ssub.s32 %s12, 1
        // Predicated region
        $region13: #{hierarchical_attn_forward.2} parent=11 // pred_check
          %p147 = pneg %p33
        $region14: #{hierarchical_attn_forward.2} parent=11 // pred_check_branch
          %149 = sbr.rel (%p147) target = $region16
        $region15: #{hierarchical_attn_forward.2} parent=11 // pred_region
          %151 = vsyncadd [#allocation3], 0
          %s152 = sshll.u32 %s0, 4
          %s153 = int_to_ptr.hbm [resolvable:$true] %s152
          %s154 = sshll.u32 [#allocation2], 4
          %s155 = int_to_ptr.vmem [resolvable:$true] %s154
          %160 = dma.hbm_to_vmem [thread:$0]  %s153, 256, %s155, [#allocation3], 128, 128, 8
        $region16: #{hierarchical_attn_forward.2} parent=11 // pred_fallthru
          _
        // Predicated region
        $region17: #{hierarchical_attn_forward.2} parent=11 // pred_check
          %p161 = pneg %p54
        $region18: #{hierarchical_attn_forward.2} parent=11 // pred_check_branch
          %163 = sbr.rel (%p161) target = $region20
        $region19: #{hierarchical_attn_forward.2} parent=11 // pred_region
          %165 = vsyncadd [#allocation5], 0
          %s166 = sshll.u32 %s1, 4
          %s167 = int_to_ptr.hbm [resolvable:$true] %s166
          %s168 = sshll.u32 [#allocation4], 4
          %s169 = int_to_ptr.vmem [resolvable:$true] %s168
          %174 = dma.hbm_to_vmem [thread:$0]  %s167, 256, %s169, [#allocation5], 128, 128, 8
        $region20: #{hierarchical_attn_forward.2} parent=11 // pred_fallthru
          _
      $region12: #{hierarchical_attn_forward.2} parent=5 // pred_fallthru
        _
      %p175 = scmp.lt.s32.totalorder %s12, 4
      // Predicated region
      $region21: #{hierarchical_attn_forward.2} parent=5 // pred_check
        %p176 = pneg %p175
      $region22: #{hierarchical_attn_forward.2} parent=5 // pred_check_branch
        %178 = sbr.rel (%p176) target = $region24
      $region23: #{hierarchical_attn_forward.2} parent=5 // pred_region
        // Predicated region
        $region25: #{hierarchical_attn_forward.2} parent=23 // pred_check
          %p179 = pneg %p74
        $region26: #{hierarchical_attn_forward.2} parent=23 // pred_check_branch
          %181 = sbr.rel (%p179) target = $region28
        $region27: #{hierarchical_attn_forward.2} parent=23 // pred_region
          %p182 = scmp.lt.s32.totalorder %s12, 3
          %s183 = scalar_select %p182, %s12, 3
          %s184 = smul.addr %s183, 2
          %s185 = smul.addr %s184, 8
          %s186 = scalar_lea.vmem %s2, %s185
        $region28: #{hierarchical_attn_forward.2} parent=23 // pred_fallthru
          _
        // Predicated region
        $region29: #{hierarchical_attn_forward.2} parent=23 // pred_check
          %p187 = pneg %p100
        $region30: #{hierarchical_attn_forward.2} parent=23 // pred_check_branch
          %189 = sbr.rel (%p187) target = $region32
        $region31: #{hierarchical_attn_forward.2} parent=23 // pred_region
          %s190 = sand.u32 %s12, 1
          %s191 = scalar_lea.sflag [#allocation3], %s190
          %s192 = sand.u32 %s90, 1
          %s193 = scalar_lea.vmem [#allocation6], %s192
          %195 = vsyncadd %s191, 0
          %s196 = scalar_lea.hbm %s3, %s12
          %s198 = sshll.u32 %s196, 4
          %s199 = int_to_ptr.hbm [resolvable:$true] %s198
          %s200 = sshll.u32 %s193, 4
          %s201 = int_to_ptr.vmem [resolvable:$true] %s200
          %203 = dma.hbm_to_vmem [thread:$0]  %s199, 16, %s201, %s191
        $region32: #{hierarchical_attn_forward.2} parent=23 // pred_fallthru
          _
      $region24: #{hierarchical_attn_forward.2} parent=5 // pred_fallthru
        _
      %p204 = scmp.le.s32.totalorder 1, %s12
      %p205 = scmp.lt.s32.totalorder %s12, 5
      %p206 = pnand %p204, %p205
      %p207 = pneg %p206
      // Predicated region
      $region33: #{hierarchical_attn_forward.2} parent=5 // pred_check
        _
      $region34: #{hierarchical_attn_forward.2} parent=5 // pred_check_branch
        %209 = sbr.rel (%p206) target = $region36
      $region35: #{hierarchical_attn_forward.2} parent=5 // pred_region
        %s210 = ssub.s32 %s12, 1
        // Predicated region
        $region37: #{hierarchical_attn_forward.2} parent=35 // pred_check
          %p211 = pneg %p33
        $region38: #{hierarchical_attn_forward.2} parent=35 // pred_check_branch
          %213 = sbr.rel (%p211) target = $region40
        $region39: #{hierarchical_attn_forward.2} parent=35 // pred_region
          %215 = dma.done [#allocation3], 256
        $region40: #{hierarchical_attn_forward.2} parent=35 // pred_fallthru
          _
        // Predicated region
        $region41: #{hierarchical_attn_forward.2} parent=35 // pred_check
          %p216 = pneg %p54
        $region42: #{hierarchical_attn_forward.2} parent=35 // pred_check_branch
          %218 = sbr.rel (%p216) target = $region44
        $region43: #{hierarchical_attn_forward.2} parent=35 // pred_region
          %220 = dma.done [#allocation5], 256
        $region44: #{hierarchical_attn_forward.2} parent=35 // pred_fallthru
          _
        %s221 = sand.u32 %s17, 1
        %s222 = scalar_lea.sflag [#allocation3], %s221
        %s223 = sand.u32 %s93, 1
        %s224 = scalar_lea.vmem [#allocation6], %s223
        // Predicated region
        $region45: #{hierarchical_attn_forward.2} parent=35 // pred_check
          %p225 = pneg %p106
        $region46: #{hierarchical_attn_forward.2} parent=35 // pred_check_branch
          %227 = sbr.rel (%p225) target = $region48
        $region47: #{hierarchical_attn_forward.2} parent=35 // pred_region
          %229 = dma.done %s222, 16
        $region48: #{hierarchical_attn_forward.2} parent=35 // pred_fallthru
          _
        %p230 = pneg %p33
        %p231 = pneg %p30
        %p232 = pneg %p54
        %p233 = pneg %p51
        %p234 = scmp.lt.s32.totalorder %s17, 3
        %s235 = scalar_select %p234, %s17, 3
        %s236 = smul.addr %s235, 2
        %s237 = smul.addr %s236, 8
        %s238 = scalar_lea.vmem %s2, %s237
        %p239 = pneg %p80
        %p240 = pneg %p77
        %s241 = sand.u32 %s17, 1
        %s242 = scalar_lea.sflag [#allocation3], %s241
        %s243 = sand.u32 %s93, 1
        %s244 = scalar_lea.vmem [#allocation6], %s243
        %p245 = pneg %p106
        %p246 = pneg %p103
        %p247 = pneg %p132
        %p248 = pneg %p129
        %p249 = scmp.lt.s32.totalorder %s17, 3
        %s250 = scalar_select %p249, %s17, 3
        %s251 = smul.addr %s250, 32
        %s252 = smul.addr %s251, 8
        %s253 = scalar_lea.vmem %s4, %s252
        %p254 = scmp.lt.s32.totalorder %s17, 3
        %s255 = scalar_select %p254, %s17, 3
        %s256 = smul.addr %s255, 2
        %s257 = smul.addr %s256, 8
        %s258 = scalar_lea.vmem %s2, %s257
        %p259 = scmp.lt.s32.totalorder %s17, 3
        %s260 = scalar_select %p259, %s17, 3
        %s261 = smul.addr %s260, 32
        %s262 = smul.addr %s261, 8
        %s263 = scalar_lea.vmem %s4, %s262
        %v264 = vld [vmem:[%s258] sm:$0xff]
        %v265 = vld [vmem:[%s258 + $0x8] sm:$0x3]
        %v266 = vld [vmem:[%s224] sm:$0x1]
        %v267 = vld [vmem:[#allocation2] sm:$0xff]
        %v268 = vld [vmem:[#allocation2 + $0x8] sm:$0xff]
        %v269 = vmul.f32 %v267, %v267
        %v270 = vmul.f32 %v268, %v268
        %271 = vadd.xlane.f32.xlu0 %v269
        %v272 = vpop.xlane.xlu0 %271
        %273 = vadd.xlane.f32.xlu0 %v270
        %v274 = vpop.xlane.xlu0 %273
        %v275 = vrsqrt.pop %v272
        %v276 = vmul.f32 %v275, %v272
        %v277 = vmul.f32 %v276, %v275
        %v278 = vmul.f32 0.5, %v277
        %v279 = vsub.f32 1.5, %v278
        %v280 = vmul.f32 %v275, %v279
        %v281 = vmul.f32 %v272, %v280
        %vm282 = vcmp.eq.f32.partialorder %v272, inf
        %v283 = vsel %vm282, %v272, %v281
        %vm284 = vcmp.eq.f32.partialorder %v272, 0.0
        %v285 = vand.u32 %v272, 2147483648
        %v286 = vsel %vm284, %v285, %v283
        %v287 = vrsqrt.pop %v274
        %v288 = vmul.f32 %v287, %v274
        %v289 = vmul.f32 %v288, %v287
        %v290 = vmul.f32 0.5, %v289
        %v291 = vsub.f32 1.5, %v290
        %v292 = vmul.f32 %v287, %v291
        %v293 = vmul.f32 %v274, %v292
        %vm294 = vcmp.eq.f32.partialorder %v274, inf
        %v295 = vsel %vm294, %v274, %v293
        %vm296 = vcmp.eq.f32.partialorder %v274, 0.0
        %v297 = vand.u32 %v274, 2147483648
        %v298 = vsel %vm296, %v297, %v295
        %v299 = vadd.f32 %v286, 1e-12
        %v300 = vadd.f32 %v298, 1e-12
        %v301 = vrcp.pop %v299
        %v302 = vmul.f32 %v299, %v301
        %v303 = vsub.f32 1.0, %v302
        %v304 = vmul.f32 %v301, %v303
        %v305 = vadd.f32 %v301, %v304
        %vm306 = vweird.f32 %v299
        %vm307 = vweird.f32 %v301
        %vm308 = vmor %vm306, %vm307
        %v309 = vsel %vm308, %v301, %v305
        %v310 = vand.u32 2147483647, %v299
        %vm311 = vcmp.eq.f32.partialorder %v310, 8.507059e+37
        %v312 = vand.u32 %v299, 2147483648
        %v313 = vor.u32 1.1754944e-38, %v312
        %v314 = vsel %vm311, %v313, %v309
        %v315 = vmul.f32 %v267, %v314
        %v316 = vrcp.pop %v300
        %v317 = vmul.f32 %v300, %v316
        %v318 = vsub.f32 1.0, %v317
        %v319 = vmul.f32 %v316, %v318
        %v320 = vadd.f32 %v316, %v319
        %vm321 = vweird.f32 %v300
        %vm322 = vweird.f32 %v316
        %vm323 = vmor %vm321, %vm322
        %v324 = vsel %vm323, %v316, %v320
        %v325 = vand.u32 2147483647, %v300
        %vm326 = vcmp.eq.f32.partialorder %v325, 8.507059e+37
        %v327 = vand.u32 %v300, 2147483648
        %v328 = vor.u32 1.1754944e-38, %v327
        %v329 = vsel %vm326, %v328, %v324
        %v330 = vmul.f32 %v268, %v329
        %v332 = vperm.slane %v266, 0
        %334 = vmatpush.xpose.msra.mxu0 0.0
        %335 = vmatpush.xpose.msra.mxu0 0.0
        %336 = vmatpush.xpose.msra.mxu0 0.0
        %337 = vmatpush.xpose.msra.mxu0 0.0
        %338 = vmatpush.xpose.msra.mxu0 0.0
        %339 = vmatpush.xpose.msra.mxu0 0.0
        %340 = vmatpush.xpose.msra.mxu0 0.0
        %341 = vmatpush.xpose.msra.mxu0 0.0
        %342 = vmatpush.xpose.msra.mxu0 0.0
        %343 = vmatpush.xpose.msra.mxu0 0.0
        %344 = vmatpush.xpose.msra.mxu0 0.0
        %345 = vmatpush.xpose.msra.mxu0 0.0
        %346 = vmatpush.xpose.msra.mxu0 0.0
        %347 = vmatpush.xpose.msra.mxu0 0.0
        %348 = vmatpush.xpose.msra.mxu0 %v265
        %349 = vmatpush.xpose.msra.mxu0 %v264
        %350 = vmatmul.f32.gmra.mxu0 %v315
        %v351 = vpop.f32.mrf.mxu0
        %v352 = vadd.f32 %v332, %v351
        %353 = vmatmul.f32.gmra.mxu0 %v330
        %v354 = vpop.f32.mrf.mxu0
        %v355 = vadd.f32 %v332, %v354
        %356 = vdwg.mxu0
        %vm357 = vcmask 80896
        %v358 = vsel %vm357, %v352, -inf
        %v359 = vrot.slane %v358, 4
        %v360 = vmax.f32 %v358, %v359
        %v361 = vrot.slane %v360, 2
        %v362 = vmax.f32 %v360, %v361
        %v363 = vrot.slane %v362, 1
        %v364 = vmax.f32 %v362, %v363
        %v365 = vsel %vm357, %v355, -inf
        %v366 = vrot.slane %v365, 4
        %v367 = vmax.f32 %v365, %v366
        %v368 = vrot.slane %v367, 2
        %v369 = vmax.f32 %v367, %v368
        %v370 = vrot.slane %v369, 1
        %v371 = vmax.f32 %v369, %v370
        %v372 = vsub.f32 %v352, %v364
        %v373 = vsub.f32 %v355, %v371
        %v374 = vmul.f32 %v372, 1.442695
        %v375 = vpow.pop %v374
        %v376 = vmul.f32 %v373, 1.442695
        %v377 = vpow.pop %v376
        %v378 = vsel %vm357, %v375, 0.0
        %v379 = vrot.slane %v378, 4
        %v380 = vadd.f32 %v378, %v379
        %v381 = vrot.slane %v380, 2
        %v382 = vadd.f32 %v380, %v381
        %v383 = vrot.slane %v382, 1
        %v384 = vadd.f32 %v382, %v383
        %v385 = vsel %vm357, %v377, 0.0
        %v386 = vrot.slane %v385, 4
        %v387 = vadd.f32 %v385, %v386
        %v388 = vrot.slane %v387, 2
        %v389 = vadd.f32 %v387, %v388
        %v390 = vrot.slane %v389, 1
        %v391 = vadd.f32 %v389, %v390
        %v392 = vrcp.pop %v384
        %v393 = vmul.f32 %v384, %v392
        %v394 = vsub.f32 1.0, %v393
        %v395 = vmul.f32 %v392, %v394
        %v396 = vadd.f32 %v392, %v395
        %vm397 = vweird.f32 %v384
        %vm398 = vweird.f32 %v392
        %vm399 = vmor %vm397, %vm398
        %v400 = vsel %vm399, %v392, %v396
        %v401 = vand.u32 2147483647, %v384
        %vm402 = vcmp.eq.f32.partialorder %v401, 8.507059e+37
        %v403 = vand.u32 %v384, 2147483648
        %v404 = vor.u32 1.1754944e-38, %v403
        %v405 = vsel %vm402, %v404, %v400
        %v406 = vmul.f32 %v375, %v405
        %v407 = vrcp.pop %v391
        %v408 = vmul.f32 %v391, %v407
        %v409 = vsub.f32 1.0, %v408
        %v410 = vmul.f32 %v407, %v409
        %v411 = vadd.f32 %v407, %v410
        %vm412 = vweird.f32 %v391
        %vm413 = vweird.f32 %v407
        %vm414 = vmor %vm412, %vm413
        %v415 = vsel %vm414, %v407, %v411
        %v416 = vand.u32 2147483647, %v391
        %vm417 = vcmp.eq.f32.partialorder %v416, 8.507059e+37
        %v418 = vand.u32 %v391, 2147483648
        %v419 = vor.u32 1.1754944e-38, %v418
        %v420 = vsel %vm417, %v419, %v415
        %v421 = vmul.f32 %v377, %v420
        %v422 = vsel %vm357, %v406, 0.0
        %423 = vadd.xlane.f32.xlu0 %v422
        %v424 = vpop.xlane.xlu0 %423
        %v425 = vsel %vm357, %v421, 0.0
        %426 = vadd.xlane.f32.xlu0 %v425
        %v427 = vpop.xlane.xlu0 %426
        %v428 = vrcp.pop 10.0
        %v429 = vmul.f32 10.0, %v428
        %v430 = vsub.f32 1.0, %v429
        %v431 = vmul.f32 %v428, %v430
        %v432 = vadd.f32 %v428, %v431
        %vm433 = vweird.f32 %v428
        %v434 = vsel %vm433, %v428, %v432
        %v435 = vmul.f32 %v424, %v434
        %v436 = vmul.f32 %v427, %v434
        %v437 = vmul.f32 %v435, %v315
        %v438 = vmul.f32 %v436, %v330
        %v439 = vrot.slane %v437, 4
        %v440 = vadd.f32 %v437, %v439
        %v441 = vrot.slane %v440, 2
        %v442 = vadd.f32 %v440, %v441
        %v443 = vrot.slane %v442, 1
        %v444 = vadd.f32 %v442, %v443
        %v445 = vrot.slane %v438, 4
        %v446 = vadd.f32 %v438, %v445
        %v447 = vrot.slane %v446, 2
        %v448 = vadd.f32 %v446, %v447
        %v449 = vrot.slane %v448, 1
        %v450 = vadd.f32 %v448, %v449
        %v451 = vmul.f32 %v444, 0.125
        %v452 = vmul.f32 %v450, 0.125
        %v453 = vld [vmem:[#allocation4] sm:$0xff]
        %v454 = vld [vmem:[#allocation4 + $0x8] sm:$0xff]
        %v455 = vmul.f32 %v453, %v453
        %v456 = vmul.f32 %v454, %v454
        %457 = vadd.xlane.f32.xlu0 %v455
        %v458 = vpop.xlane.xlu0 %457
        %459 = vadd.xlane.f32.xlu0 %v456
        %v460 = vpop.xlane.xlu0 %459
        %v461 = vrsqrt.pop %v458
        %v462 = vmul.f32 %v461, %v458
        %v463 = vmul.f32 %v462, %v461
        %v464 = vmul.f32 0.5, %v463
        %v465 = vsub.f32 1.5, %v464
        %v466 = vmul.f32 %v461, %v465
        %v467 = vmul.f32 %v458, %v466
        %vm468 = vcmp.eq.f32.partialorder %v458, inf
        %v469 = vsel %vm468, %v458, %v467
        %vm470 = vcmp.eq.f32.partialorder %v458, 0.0
        %v471 = vand.u32 %v458, 2147483648
        %v472 = vsel %vm470, %v471, %v469
        %v473 = vrsqrt.pop %v460
        %v474 = vmul.f32 %v473, %v460
        %v475 = vmul.f32 %v474, %v473
        %v476 = vmul.f32 0.5, %v475
        %v477 = vsub.f32 1.5, %v476
        %v478 = vmul.f32 %v473, %v477
        %v479 = vmul.f32 %v460, %v478
        %vm480 = vcmp.eq.f32.partialorder %v460, inf
        %v481 = vsel %vm480, %v460, %v479
        %vm482 = vcmp.eq.f32.partialorder %v460, 0.0
        %v483 = vand.u32 %v460, 2147483648
        %v484 = vsel %vm482, %v483, %v481
        %v485 = vadd.f32 %v472, 1e-12
        %v486 = vadd.f32 %v484, 1e-12
        %v487 = vrcp.pop %v485
        %v488 = vmul.f32 %v485, %v487
        %v489 = vsub.f32 1.0, %v488
        %v490 = vmul.f32 %v487, %v489
        %v491 = vadd.f32 %v487, %v490
        %vm492 = vweird.f32 %v485
        %vm493 = vweird.f32 %v487
        %vm494 = vmor %vm492, %vm493
        %v495 = vsel %vm494, %v487, %v491
        %v496 = vand.u32 2147483647, %v485
        %vm497 = vcmp.eq.f32.partialorder %v496, 8.507059e+37
        %v498 = vand.u32 %v485, 2147483648
        %v499 = vor.u32 1.1754944e-38, %v498
        %v500 = vsel %vm497, %v499, %v495
        %v501 = vmul.f32 %v453, %v500
        %v502 = vrcp.pop %v486
        %v503 = vmul.f32 %v486, %v502
        %v504 = vsub.f32 1.0, %v503
        %v505 = vmul.f32 %v502, %v504
        %v506 = vadd.f32 %v502, %v505
        %vm507 = vweird.f32 %v486
        %vm508 = vweird.f32 %v502
        %vm509 = vmor %vm507, %vm508
        %v510 = vsel %vm509, %v502, %v506
        %v511 = vand.u32 2147483647, %v486
        %vm512 = vcmp.eq.f32.partialorder %v511, 8.507059e+37
        %v513 = vand.u32 %v486, 2147483648
        %v514 = vor.u32 1.1754944e-38, %v513
        %v515 = vsel %vm512, %v514, %v510
        %v516 = vmul.f32 %v454, %v515
        %517 = vmatpush.xpose.msra.mxu0 0.0
        %518 = vmatpush.xpose.msra.mxu0 0.0
        %519 = vmatpush.xpose.msra.mxu0 0.0
        %520 = vmatpush.xpose.msra.mxu0 0.0
        %521 = vmatpush.xpose.msra.mxu0 0.0
        %522 = vmatpush.xpose.msra.mxu0 0.0
        %523 = vmatpush.xpose.msra.mxu0 0.0
        %524 = vmatpush.xpose.msra.mxu0 0.0
        %525 = vmatpush.xpose.msra.mxu0 0.0
        %526 = vmatpush.xpose.msra.mxu0 0.0
        %527 = vmatpush.xpose.msra.mxu0 0.0
        %528 = vmatpush.xpose.msra.mxu0 0.0
        %529 = vmatpush.xpose.msra.mxu0 0.0
        %530 = vmatpush.xpose.msra.mxu0 0.0
        %531 = vmatpush.xpose.msra.mxu0 %v265
        %532 = vmatpush.xpose.msra.mxu0 %v264
        %533 = vmatmul.f32.gmra.mxu0 %v501
        %v534 = vpop.f32.mrf.mxu0
        %v535 = vadd.f32 %v332, %v534
        %536 = vmatmul.f32.gmra.mxu0 %v516
        %v537 = vpop.f32.mrf.mxu0
        %v538 = vadd.f32 %v332, %v537
        %539 = vdwg.mxu0
        %v540 = vsel %vm357, %v535, -inf
        %v541 = vrot.slane %v540, 4
        %v542 = vmax.f32 %v540, %v541
        %v543 = vrot.slane %v542, 2
        %v544 = vmax.f32 %v542, %v543
        %v545 = vrot.slane %v544, 1
        %v546 = vmax.f32 %v544, %v545
        %v547 = vsel %vm357, %v538, -inf
        %v548 = vrot.slane %v547, 4
        %v549 = vmax.f32 %v547, %v548
        %v550 = vrot.slane %v549, 2
        %v551 = vmax.f32 %v549, %v550
        %v552 = vrot.slane %v551, 1
        %v553 = vmax.f32 %v551, %v552
        %v554 = vsub.f32 %v535, %v546
        %v555 = vsub.f32 %v538, %v553
        %v556 = vmul.f32 %v554, 1.442695
        %v557 = vpow.pop %v556
        %v558 = vmul.f32 %v555, 1.442695
        %v559 = vpow.pop %v558
        %v560 = vsel %vm357, %v557, 0.0
        %v561 = vrot.slane %v560, 4
        %v562 = vadd.f32 %v560, %v561
        %v563 = vrot.slane %v562, 2
        %v564 = vadd.f32 %v562, %v563
        %v565 = vrot.slane %v564, 1
        %v566 = vadd.f32 %v564, %v565
        %v567 = vsel %vm357, %v559, 0.0
        %v568 = vrot.slane %v567, 4
        %v569 = vadd.f32 %v567, %v568
        %v570 = vrot.slane %v569, 2
        %v571 = vadd.f32 %v569, %v570
        %v572 = vrot.slane %v571, 1
        %v573 = vadd.f32 %v571, %v572
        %v574 = vrcp.pop %v566
        %v575 = vmul.f32 %v566, %v574
        %v576 = vsub.f32 1.0, %v575
        %v577 = vmul.f32 %v574, %v576
        %v578 = vadd.f32 %v574, %v577
        %vm579 = vweird.f32 %v566
        %vm580 = vweird.f32 %v574
        %vm581 = vmor %vm579, %vm580
        %v582 = vsel %vm581, %v574, %v578
        %v583 = vand.u32 2147483647, %v566
        %vm584 = vcmp.eq.f32.partialorder %v583, 8.507059e+37
        %v585 = vand.u32 %v566, 2147483648
        %v586 = vor.u32 1.1754944e-38, %v585
        %v587 = vsel %vm584, %v586, %v582
        %v588 = vmul.f32 %v557, %v587
        %v589 = vrcp.pop %v573
        %v590 = vmul.f32 %v573, %v589
        %v591 = vsub.f32 1.0, %v590
        %v592 = vmul.f32 %v589, %v591
        %v593 = vadd.f32 %v589, %v592
        %vm594 = vweird.f32 %v573
        %vm595 = vweird.f32 %v589
        %vm596 = vmor %vm594, %vm595
        %v597 = vsel %vm596, %v589, %v593
        %v598 = vand.u32 2147483647, %v573
        %vm599 = vcmp.eq.f32.partialorder %v598, 8.507059e+37
        %v600 = vand.u32 %v573, 2147483648
        %v601 = vor.u32 1.1754944e-38, %v600
        %v602 = vsel %vm599, %v601, %v597
        %v603 = vmul.f32 %v559, %v602
        %v604 = vsel %vm357, %v588, 0.0
        %605 = vadd.xlane.f32.xlu0 %v604
        %v606 = vpop.xlane.xlu0 %605
        %v607 = vsel %vm357, %v603, 0.0
        %608 = vadd.xlane.f32.xlu0 %v607
        %v609 = vpop.xlane.xlu0 %608
        %v610 = vmul.f32 %v606, %v434
        %v611 = vmul.f32 %v609, %v434
        %v612 = vmul.f32 %v610, %v501
        %v613 = vmul.f32 %v611, %v516
        %v614 = vrot.slane %v612, 4
        %v615 = vadd.f32 %v612, %v614
        %v616 = vrot.slane %v615, 2
        %v617 = vadd.f32 %v615, %v616
        %v618 = vrot.slane %v617, 1
        %v619 = vadd.f32 %v617, %v618
        %v620 = vrot.slane %v613, 4
        %v621 = vadd.f32 %v613, %v620
        %v622 = vrot.slane %v621, 2
        %v623 = vadd.f32 %v621, %v622
        %v624 = vrot.slane %v623, 1
        %v625 = vadd.f32 %v623, %v624
        %v626 = vmul.f32 %v619, 0.125
        %v627 = vmul.f32 %v625, 0.125
        %v628 = vlaneseq
        %v629 = vshrl.u32 %v628, 7
        %631 = vset.pattern.permute.xlu0 %v629
        %632 = vperm.xlu0 %631, %v451
        %v633 = vpop.permute.xlu0 %632
        %v634 = vlaneseq
        %v635 = vshrl.u32 %v634, 7
        %v636 = vadd.s32 %v635, 8
        %637 = vset.pattern.permute.xlu0 %v636
        %638 = vperm.xlu0 %637, %v451
        %v639 = vpop.permute.xlu0 %638
        %v640 = vlaneseq
        %v641 = vshrl.u32 %v640, 7
        %v642 = vadd.s32 %v641, 16
        %643 = vset.pattern.permute.xlu0 %v642
        %644 = vperm.xlu0 %643, %v451
        %v645 = vpop.permute.xlu0 %644
        %v646 = vlaneseq
        %v647 = vshrl.u32 %v646, 7
        %v648 = vadd.s32 %v647, 24
        %649 = vset.pattern.permute.xlu0 %v648
        %650 = vperm.xlu0 %649, %v451
        %v651 = vpop.permute.xlu0 %650
        %v652 = vlaneseq
        %v653 = vshrl.u32 %v652, 7
        %v654 = vadd.s32 %v653, 32
        %655 = vset.pattern.permute.xlu0 %v654
        %656 = vperm.xlu0 %655, %v451
        %v657 = vpop.permute.xlu0 %656
        %v658 = vlaneseq
        %v659 = vshrl.u32 %v658, 7
        %v660 = vadd.s32 %v659, 40
        %661 = vset.pattern.permute.xlu0 %v660
        %662 = vperm.xlu0 %661, %v451
        %v663 = vpop.permute.xlu0 %662
        %v664 = vlaneseq
        %v665 = vshrl.u32 %v664, 7
        %v666 = vadd.s32 %v665, 48
        %667 = vset.pattern.permute.xlu0 %v666
        %668 = vperm.xlu0 %667, %v451
        %v669 = vpop.permute.xlu0 %668
        %v670 = vlaneseq
        %v671 = vshrl.u32 %v670, 7
        %v672 = vadd.s32 %v671, 56
        %673 = vset.pattern.permute.xlu0 %v672
        %674 = vperm.xlu0 %673, %v451
        %v675 = vpop.permute.xlu0 %674
        %v676 = vlaneseq
        %v677 = vshrl.u32 %v676, 7
        %v678 = vadd.s32 %v677, 64
        %679 = vset.pattern.permute.xlu0 %v678
        %680 = vperm.xlu0 %679, %v451
        %v681 = vpop.permute.xlu0 %680
        %v682 = vlaneseq
        %v683 = vshrl.u32 %v682, 7
        %v684 = vadd.s32 %v683, 72
        %685 = vset.pattern.permute.xlu0 %v684
        %686 = vperm.xlu0 %685, %v451
        %v687 = vpop.permute.xlu0 %686
        %v688 = vlaneseq
        %v689 = vshrl.u32 %v688, 7
        %v690 = vadd.s32 %v689, 80
        %691 = vset.pattern.permute.xlu0 %v690
        %692 = vperm.xlu0 %691, %v451
        %v693 = vpop.permute.xlu0 %692
        %v694 = vlaneseq
        %v695 = vshrl.u32 %v694, 7
        %v696 = vadd.s32 %v695, 88
        %697 = vset.pattern.permute.xlu0 %v696
        %698 = vperm.xlu0 %697, %v451
        %v699 = vpop.permute.xlu0 %698
        %v700 = vlaneseq
        %v701 = vshrl.u32 %v700, 7
        %v702 = vadd.s32 %v701, 96
        %703 = vset.pattern.permute.xlu0 %v702
        %704 = vperm.xlu0 %703, %v451
        %v705 = vpop.permute.xlu0 %704
        %v706 = vlaneseq
        %v707 = vshrl.u32 %v706, 7
        %v708 = vadd.s32 %v707, 104
        %709 = vset.pattern.permute.xlu0 %v708
        %710 = vperm.xlu0 %709, %v451
        %v711 = vpop.permute.xlu0 %710
        %v712 = vlaneseq
        %v713 = vshrl.u32 %v712, 7
        %v714 = vadd.s32 %v713, 112
        %715 = vset.pattern.permute.xlu0 %v714
        %716 = vperm.xlu0 %715, %v451
        %v717 = vpop.permute.xlu0 %716
        %v718 = vlaneseq
        %v719 = vshrl.u32 %v718, 7
        %v720 = vadd.s32 %v719, 120
        %721 = vset.pattern.permute.xlu0 %v720
        %722 = vperm.xlu0 %721, %v451
        %v723 = vpop.permute.xlu0 %722
        %v724 = vlaneseq
        %v725 = vshrl.u32 %v724, 7
        %727 = vset.pattern.permute.xlu0 %v725
        %728 = vperm.xlu0 %727, %v452
        %v729 = vpop.permute.xlu0 %728
        %v730 = vlaneseq
        %v731 = vshrl.u32 %v730, 7
        %v732 = vadd.s32 %v731, 8
        %733 = vset.pattern.permute.xlu0 %v732
        %734 = vperm.xlu0 %733, %v452
        %v735 = vpop.permute.xlu0 %734
        %v736 = vlaneseq
        %v737 = vshrl.u32 %v736, 7
        %v738 = vadd.s32 %v737, 16
        %739 = vset.pattern.permute.xlu0 %v738
        %740 = vperm.xlu0 %739, %v452
        %v741 = vpop.permute.xlu0 %740
        %v742 = vlaneseq
        %v743 = vshrl.u32 %v742, 7
        %v744 = vadd.s32 %v743, 24
        %745 = vset.pattern.permute.xlu0 %v744
        %746 = vperm.xlu0 %745, %v452
        %v747 = vpop.permute.xlu0 %746
        %v748 = vlaneseq
        %v749 = vshrl.u32 %v748, 7
        %v750 = vadd.s32 %v749, 32
        %751 = vset.pattern.permute.xlu0 %v750
        %752 = vperm.xlu0 %751, %v452
        %v753 = vpop.permute.xlu0 %752
        %v754 = vlaneseq
        %v755 = vshrl.u32 %v754, 7
        %v756 = vadd.s32 %v755, 40
        %757 = vset.pattern.permute.xlu0 %v756
        %758 = vperm.xlu0 %757, %v452
        %v759 = vpop.permute.xlu0 %758
        %v760 = vlaneseq
        %v761 = vshrl.u32 %v760, 7
        %v762 = vadd.s32 %v761, 48
        %763 = vset.pattern.permute.xlu0 %v762
        %764 = vperm.xlu0 %763, %v452
        %v765 = vpop.permute.xlu0 %764
        %v766 = vlaneseq
        %v767 = vshrl.u32 %v766, 7
        %v768 = vadd.s32 %v767, 56
        %769 = vset.pattern.permute.xlu0 %v768
        %770 = vperm.xlu0 %769, %v452
        %v771 = vpop.permute.xlu0 %770
        %v772 = vlaneseq
        %v773 = vshrl.u32 %v772, 7
        %v774 = vadd.s32 %v773, 64
        %775 = vset.pattern.permute.xlu0 %v774
        %776 = vperm.xlu0 %775, %v452
        %v777 = vpop.permute.xlu0 %776
        %v778 = vlaneseq
        %v779 = vshrl.u32 %v778, 7
        %v780 = vadd.s32 %v779, 72
        %781 = vset.pattern.permute.xlu0 %v780
        %782 = vperm.xlu0 %781, %v452
        %v783 = vpop.permute.xlu0 %782
        %v784 = vlaneseq
        %v785 = vshrl.u32 %v784, 7
        %v786 = vadd.s32 %v785, 80
        %787 = vset.pattern.permute.xlu0 %v786
        %788 = vperm.xlu0 %787, %v452
        %v789 = vpop.permute.xlu0 %788
        %v790 = vlaneseq
        %v791 = vshrl.u32 %v790, 7
        %v792 = vadd.s32 %v791, 88
        %793 = vset.pattern.permute.xlu0 %v792
        %794 = vperm.xlu0 %793, %v452
        %v795 = vpop.permute.xlu0 %794
        %v796 = vlaneseq
        %v797 = vshrl.u32 %v796, 7
        %v798 = vadd.s32 %v797, 96
        %799 = vset.pattern.permute.xlu0 %v798
        %800 = vperm.xlu0 %799, %v452
        %v801 = vpop.permute.xlu0 %800
        %v802 = vlaneseq
        %v803 = vshrl.u32 %v802, 7
        %v804 = vadd.s32 %v803, 104
        %805 = vset.pattern.permute.xlu0 %v804
        %806 = vperm.xlu0 %805, %v452
        %v807 = vpop.permute.xlu0 %806
        %v808 = vlaneseq
        %v809 = vshrl.u32 %v808, 7
        %v810 = vadd.s32 %v809, 112
        %811 = vset.pattern.permute.xlu0 %v810
        %812 = vperm.xlu0 %811, %v452
        %v813 = vpop.permute.xlu0 %812
        %v814 = vlaneseq
        %v815 = vshrl.u32 %v814, 7
        %v816 = vadd.s32 %v815, 120
        %817 = vset.pattern.permute.xlu0 %v816
        %818 = vperm.xlu0 %817, %v452
        %v819 = vpop.permute.xlu0 %818
        %v820 = vmul.f32 %v633, %v626
        %v821 = vmul.f32 %v639, %v626
        %v822 = vmul.f32 %v645, %v626
        %v823 = vmul.f32 %v651, %v626
        %v824 = vmul.f32 %v657, %v626
        %v825 = vmul.f32 %v663, %v626
        %v826 = vmul.f32 %v669, %v626
        %v827 = vmul.f32 %v675, %v626
        %v828 = vmul.f32 %v681, %v626
        %v829 = vmul.f32 %v687, %v626
        %v830 = vmul.f32 %v693, %v626
        %v831 = vmul.f32 %v699, %v626
        %v832 = vmul.f32 %v705, %v626
        %v833 = vmul.f32 %v711, %v626
        %v834 = vmul.f32 %v717, %v626
        %v835 = vmul.f32 %v723, %v626
        %v836 = vmul.f32 %v729, %v627
        %v837 = vmul.f32 %v735, %v627
        %v838 = vmul.f32 %v741, %v627
        %v839 = vmul.f32 %v747, %v627
        %v840 = vmul.f32 %v753, %v627
        %v841 = vmul.f32 %v759, %v627
        %v842 = vmul.f32 %v765, %v627
        %v843 = vmul.f32 %v771, %v627
        %v844 = vmul.f32 %v777, %v627
        %v845 = vmul.f32 %v783, %v627
        %v846 = vmul.f32 %v789, %v627
        %v847 = vmul.f32 %v795, %v627
        %v848 = vmul.f32 %v801, %v627
        %v849 = vmul.f32 %v807, %v627
        %v850 = vmul.f32 %v813, %v627
        %v851 = vmul.f32 %v819, %v627
        %852 = vst [vmem:[%s263] sm:$0xff] %v820
        %853 = vst [vmem:[%s263 + $0x8] sm:$0xff] %v821
        %854 = vst [vmem:[%s263 + $0x10] sm:$0xff] %v822
        %855 = vst [vmem:[%s263 + $0x18] sm:$0xff] %v823
        %856 = vst [vmem:[%s263 + $0x20] sm:$0xff] %v824
        %857 = vst [vmem:[%s263 + $0x28] sm:$0xff] %v825
        %858 = vst [vmem:[%s263 + $0x30] sm:$0xff] %v826
        %859 = vst [vmem:[%s263 + $0x38] sm:$0xff] %v827
        %860 = vst [vmem:[%s263 + $0x40] sm:$0xff] %v828
        %861 = vst [vmem:[%s263 + $0x48] sm:$0xff] %v829
        %862 = vst [vmem:[%s263 + $0x50] sm:$0xff] %v830
        %863 = vst [vmem:[%s263 + $0x58] sm:$0xff] %v831
        %864 = vst [vmem:[%s263 + $0x60] sm:$0xff] %v832
        %865 = vst [vmem:[%s263 + $0x68] sm:$0xff] %v833
        %866 = vst [vmem:[%s263 + $0x70] sm:$0xff] %v834
        %867 = vst [vmem:[%s263 + $0x78] sm:$0xff] %v835
        %868 = vst [vmem:[%s263 + $0x80] sm:$0xff] %v836
        %869 = vst [vmem:[%s263 + $0x88] sm:$0xff] %v837
        %870 = vst [vmem:[%s263 + $0x90] sm:$0xff] %v838
        %871 = vst [vmem:[%s263 + $0x98] sm:$0xff] %v839
        %872 = vst [vmem:[%s263 + $0xa0] sm:$0xff] %v840
        %873 = vst [vmem:[%s263 + $0xa8] sm:$0xff] %v841
        %874 = vst [vmem:[%s263 + $0xb0] sm:$0xff] %v842
        %875 = vst [vmem:[%s263 + $0xb8] sm:$0xff] %v843
        %876 = vst [vmem:[%s263 + $0xc0] sm:$0xff] %v844
        %877 = vst [vmem:[%s263 + $0xc8] sm:$0xff] %v845
        %878 = vst [vmem:[%s263 + $0xd0] sm:$0xff] %v846
        %879 = vst [vmem:[%s263 + $0xd8] sm:$0xff] %v847
        %880 = vst [vmem:[%s263 + $0xe0] sm:$0xff] %v848
        %881 = vst [vmem:[%s263 + $0xe8] sm:$0xff] %v849
        %882 = vst [vmem:[%s263 + $0xf0] sm:$0xff] %v850
        %883 = vst [vmem:[%s263 + $0xf8] sm:$0xff] %v851
        %p884 = scmp.lt.s32.totalorder %s17, 3
        %s885 = scalar_select %p884, %s17, 3
        %s886 = smul.addr %s885, 32
        %s887 = smul.addr %s886, 8
        %s888 = scalar_lea.vmem %s4, %s887
        // Predicated region
        $region49: #{hierarchical_attn_forward.2} parent=35 // pred_check
          %p889 = pneg %p129
        $region50: #{hierarchical_attn_forward.2} parent=35 // pred_check_branch
          %891 = sbr.rel (%p889) target = $region52
        $region51: #{hierarchical_attn_forward.2} parent=35 // pred_region
          _
        $region52: #{hierarchical_attn_forward.2} parent=35 // pred_fallthru
          _
      $region36: #{hierarchical_attn_forward.2} parent=5 // pred_fallthru
        _
      %p892 = scmp.le.s32.totalorder 2, %s12
      // Predicated region
      $region53: #{hierarchical_attn_forward.2} parent=5 // pred_check
        %p893 = pneg %p892
      $region54: #{hierarchical_attn_forward.2} parent=5 // pred_check_branch
        %895 = sbr.rel (%p893) target = $region56
      $region55: #{hierarchical_attn_forward.2} parent=5 // pred_region
        %s896 = ssub.s32 %s12, 2
        // Predicated region
        $region57: #{hierarchical_attn_forward.2} parent=55 // pred_check
          %p897 = pneg %p135
        $region58: #{hierarchical_attn_forward.2} parent=55 // pred_check_branch
          %899 = sbr.rel (%p897) target = $region60
        $region59: #{hierarchical_attn_forward.2} parent=55 // pred_region
          %p900 = scmp.lt.s32.totalorder %s18, 3
          %s901 = scalar_select %p900, %s18, 3
          %s902 = smul.addr %s901, 32
          %s903 = smul.addr %s902, 8
          %s904 = scalar_lea.vmem %s4, %s903
        $region60: #{hierarchical_attn_forward.2} parent=55 // pred_fallthru
          _
      $region56: #{hierarchical_attn_forward.2} parent=5 // pred_fallthru
        _
    $region6: #{hierarchical_attn_forward.2} parent=1 // loop_footer
      %s16 = sadd.s32 1, %s12
    $region7: #{hierarchical_attn_forward.2} parent=1 // loop_footer_branch
      %11 = sbr.rel target = $region3
    $region8: #{hierarchical_attn_forward.2} parent=1 // loop_exit
      _
    %905 = vsyncpa [#allocation3], 1
    %s906 = scalar_lea.sflag [#allocation3], 1
    %907 = vsyncpa %s906, 1
    %908 = vsyncpa [#allocation5], 1

// kernel: hierarchical_attn_forward.3
$region0: #{hierarchical_attn_forward.3}
  #allocation0 [shape = 'u32[]', space=smem, size = 0x4, offset = 0x4, fixed_abs, tag = 'smem constant byte address 0x4 - core index']
  #allocation1 [shape = 'u32[72,128]{1,0:T(1,128)}', space=vmem, size = 0x9000, scoped, tag = 'internal scratch']
  #allocation2 [shape = 'f32[2,128]{1,0:T(2,128)}', space=vmem, size = 0x400, scoped, tag = 'scratch operand']
  %s0 = inlined_call_operand.vmem [shape: f32[4,2,16384], index: 0, kind: input, shape index: {}]
  %s1 = inlined_call_operand.hbm [shape: f32[4,16384,128], index: 1, kind: input, shape index: {}]
  %s2 = inlined_call_operand.hbm [shape: f32[4,1,128], index: 2, kind: input, shape index: {}]
  %s3 = inlined_call_operand.hbm [shape: f32[4,128,512], index: 3, kind: input, shape index: {}]
  %s4 = inlined_call_operand.hbm [shape: f32[4,1,512], index: 4, kind: input, shape index: {}]
  %s5 = inlined_call_operand.hbm [shape: f32[4,1,512], index: 5, kind: input, shape index: {}]
  %s6 = inlined_call_operand.vmem [shape: f32[4,1,1], index: 6, kind: input, shape index: {}]
  %s7 = inlined_call_operand.vmem [shape: f32[4,2,1], index: 7, kind: output, shape index: {}]
  %s8 = sld [smem:[#allocation0]]
  $region89: #{hierarchical_attn_forward.3} parent=0
    _
  %s10 = ssub.s32 1, %s8
  %s11 = scalar_select 0, %s10, %s8
  $region1: #{hierarchical_attn_forward.3} parent=0
    #allocation3 [shape = 'u8[8388608]{0}', space=vmem, size = 0x800000, scoped, tag = 'input window, operand 1']
    #allocation4 [shape = 's32[2]{0}', space=sflag, size = 0x8, scoped, tag = 'scoped memory for hierarchical_attn_forward.3']
    #allocation5 [shape = 'u8[1024]{0}', space=vmem, size = 0x400, scoped, tag = 'input window, operand 2']
    #allocation6 [shape = 's32[2]{0}', space=sflag, size = 0x8, scoped, tag = 'scoped memory for hierarchical_attn_forward.3']
    #allocation7 [shape = 'u8[524288]{0}', space=vmem, size = 0x80000, scoped, tag = 'input window, operand 3']
    #allocation8 [shape = 'u8[4096]{0}', space=vmem, size = 0x1000, scoped, tag = 'input window, operand 4']
    #allocation9 [shape = 's32[2]{0}', space=sflag, size = 0x8, scoped, tag = 'scoped memory for hierarchical_attn_forward.3']
    #allocation10 [shape = 'u8[4096]{0}', space=vmem, size = 0x1000, scoped, tag = 'input window, operand 5']
    %12 = vsyncpa [#allocation4], 0
    %s13 = scalar_lea.sflag [#allocation4], 1
    %14 = vsyncpa %s13, 0
    %15 = vsyncpa [#allocation6], 0
    %s16 = scalar_lea.sflag [#allocation6], 1
    %17 = vsyncpa %s16, 0
    %18 = vsyncpa [#allocation9], 0
    %s19 = scalar_lea.sflag [#allocation9], 1
    %20 = vsyncpa %s19, 0
    loop: start=0, step=1, limit=10
    $region2: #{hierarchical_attn_forward.3} parent=1 // loop_pre_header
      _
    $region3: #{hierarchical_attn_forward.3} parent=1 // loop_header
      %s22 = sphi 0, %s26
      %p23 = scmp.ge.s32.totalorder %s22, 10
      %s29 = sphi 0, %s41
      %s30 = sphi 0, %s37
      %s31 = sphi 0, %s29
      %s32 = sphi 0, %s30
      %s33 = sphi 0, %s31
      %s34 = sphi 0, %s32
      %s46 = sphi 0, %s48
      %s49 = sphi 0, %s46
      %s50 = sphi 0, %s49
      %s66 = sphi 0, %s50
      %s74 = sphi 0, %s76
      %s77 = sphi 0, %s74
      %s78 = sphi 0, %s77
      %s94 = sphi 0, %s78
      %s100 = sphi 0, %s102
      %s103 = sphi 0, %s100
      %s104 = sphi 0, %s103
      %s120 = sphi 0, %s104
      %s126 = sphi 0, %s128
      %s129 = sphi 0, %s126
      %s130 = sphi 0, %s129
      %s146 = sphi 0, %s130
      %s152 = sphi 0, %s154
      %s155 = sphi 0, %s152
      %s156 = sphi 0, %s155
      %s172 = sphi 0, %s156
      %s178 = sphi 0, %s180
      %s181 = sphi 0, %s178
      %s182 = sphi 0, %s181
      %s198 = sphi 0, %s182
      %s204 = sphi 0, %s206
      %s207 = sphi 0, %s204
      %s208 = sphi 0, %s207
      %s224 = sphi 0, %s208
      %s230 = sphi 0, %s232
      %s233 = sphi 0, %s230
      %s234 = sphi 0, %s233
      %s250 = sphi 0, %s234
    $region4: #{hierarchical_attn_forward.3} parent=1 // loop_header_branch
      %25 = sbr.rel (%p23) target = $region8
    $region5: #{hierarchical_attn_forward.3} parent=1 // loop_body
      %s27 = ssub.s32 %s22, 1
      %s28 = ssub.s32 %s22, 2
      %s35 = sadd.s32 1, %s30
      %p36 = scmp.ge.s32.totalorder %s35, 2
      %s37 = scalar_select %p36, 0, %s35
      %s38 = sadd.s32 1, %s29
      %s39 = scalar_select %p36, %s38, %s29
      %p40 = scmp.ge.s32.totalorder %s39, 4
      %s41 = scalar_select %p40, 0, %s39
      %s42 = ssub.s32 %s29, %s41
      %s43 = ssub.s32 %s30, %s37
      %s44 = sor.u32 %s42, %s43
      %p45 = scmp.eq.s32.totalorder %s44, 0
      %s47 = sadd.s32 %s46, 1
      %s48 = scalar_select %p45, %s46, %s47
      %p51 = pneg %p45
      %p52 = scmp.eq.s32.totalorder %s22, 7
      %p53 = por %p51, %p52
      %p54 = scmp.ne.s32.totalorder %s46, %s49
      %p55 = scmp.eq.s32.totalorder %s22, 0
      %p56 = por %p54, %p55
      %p57 = scmp.ne.s32.totalorder %s46, %s49
      %p58 = scmp.eq.s32.totalorder %s27, 7
      %p59 = por %p57, %p58
      %p60 = scmp.ne.s32.totalorder %s49, %s50
      %p61 = scmp.eq.s32.totalorder %s27, 0
      %p62 = por %p60, %p61
      %p63 = scmp.ne.s32.totalorder %s49, %s50
      %p64 = scmp.eq.s32.totalorder %s28, 7
      %p65 = por %p63, %p64
      %p67 = scmp.ne.s32.totalorder %s50, %s66
      %p68 = scmp.eq.s32.totalorder %s28, 0
      %p69 = por %p67, %p68
      %s70 = ssub.s32 %s29, %s41
      %s71 = ssub.s32 %s30, %s37
      %s72 = sor.u32 %s70, %s71
      %p73 = scmp.eq.s32.totalorder %s72, 0
      %s75 = sadd.s32 %s74, 1
      %s76 = scalar_select %p73, %s74, %s75
      %p79 = pneg %p73
      %p80 = scmp.eq.s32.totalorder %s22, 7
      %p81 = por %p79, %p80
      %p82 = scmp.ne.s32.totalorder %s74, %s77
      %p83 = scmp.eq.s32.totalorder %s22, 0
      %p84 = por %p82, %p83
      %p85 = scmp.ne.s32.totalorder %s74, %s77
      %p86 = scmp.eq.s32.totalorder %s27, 7
      %p87 = por %p85, %p86
      %p88 = scmp.ne.s32.totalorder %s77, %s78
      %p89 = scmp.eq.s32.totalorder %s27, 0
      %p90 = por %p88, %p89
      %p91 = scmp.ne.s32.totalorder %s77, %s78
      %p92 = scmp.eq.s32.totalorder %s28, 7
      %p93 = por %p91, %p92
      %p95 = scmp.ne.s32.totalorder %s78, %s94
      %p96 = scmp.eq.s32.totalorder %s28, 0
      %p97 = por %p95, %p96
      %s98 = ssub.s32 %s29, %s41
      %p99 = scmp.eq.s32.totalorder %s98, 0
      %s101 = sadd.s32 %s100, 1
      %s102 = scalar_select %p99, %s100, %s101
      %p105 = pneg %p99
      %p106 = scmp.eq.s32.totalorder %s22, 7
      %p107 = por %p105, %p106
      %p108 = scmp.ne.s32.totalorder %s100, %s103
      %p109 = scmp.eq.s32.totalorder %s22, 0
      %p110 = por %p108, %p109
      %p111 = scmp.ne.s32.totalorder %s100, %s103
      %p112 = scmp.eq.s32.totalorder %s27, 7
      %p113 = por %p111, %p112
      %p114 = scmp.ne.s32.totalorder %s103, %s104
      %p115 = scmp.eq.s32.totalorder %s27, 0
      %p116 = por %p114, %p115
      %p117 = scmp.ne.s32.totalorder %s103, %s104
      %p118 = scmp.eq.s32.totalorder %s28, 7
      %p119 = por %p117, %p118
      %p121 = scmp.ne.s32.totalorder %s104, %s120
      %p122 = scmp.eq.s32.totalorder %s28, 0
      %p123 = por %p121, %p122
      %s124 = ssub.s32 %s29, %s41
      %p125 = scmp.eq.s32.totalorder %s124, 0
      %s127 = sadd.s32 %s126, 1
      %s128 = scalar_select %p125, %s126, %s127
      %p131 = pneg %p125
      %p132 = scmp.eq.s32.totalorder %s22, 7
      %p133 = por %p131, %p132
      %p134 = scmp.ne.s32.totalorder %s126, %s129
      %p135 = scmp.eq.s32.totalorder %s22, 0
      %p136 = por %p134, %p135
      %p137 = scmp.ne.s32.totalorder %s126, %s129
      %p138 = scmp.eq.s32.totalorder %s27, 7
      %p139 = por %p137, %p138
      %p140 = scmp.ne.s32.totalorder %s129, %s130
      %p141 = scmp.eq.s32.totalorder %s27, 0
      %p142 = por %p140, %p141
      %p143 = scmp.ne.s32.totalorder %s129, %s130
      %p144 = scmp.eq.s32.totalorder %s28, 7
      %p145 = por %p143, %p144
      %p147 = scmp.ne.s32.totalorder %s130, %s146
      %p148 = scmp.eq.s32.totalorder %s28, 0
      %p149 = por %p147, %p148
      %s150 = ssub.s32 %s29, %s41
      %p151 = scmp.eq.s32.totalorder %s150, 0
      %s153 = sadd.s32 %s152, 1
      %s154 = scalar_select %p151, %s152, %s153
      %p157 = pneg %p151
      %p158 = scmp.eq.s32.totalorder %s22, 7
      %p159 = por %p157, %p158
      %p160 = scmp.ne.s32.totalorder %s152, %s155
      %p161 = scmp.eq.s32.totalorder %s22, 0
      %p162 = por %p160, %p161
      %p163 = scmp.ne.s32.totalorder %s152, %s155
      %p164 = scmp.eq.s32.totalorder %s27, 7
      %p165 = por %p163, %p164
      %p166 = scmp.ne.s32.totalorder %s155, %s156
      %p167 = scmp.eq.s32.totalorder %s27, 0
      %p168 = por %p166, %p167
      %p169 = scmp.ne.s32.totalorder %s155, %s156
      %p170 = scmp.eq.s32.totalorder %s28, 7
      %p171 = por %p169, %p170
      %p173 = scmp.ne.s32.totalorder %s156, %s172
      %p174 = scmp.eq.s32.totalorder %s28, 0
      %p175 = por %p173, %p174
      %s176 = ssub.s32 %s29, %s41
      %p177 = scmp.eq.s32.totalorder %s176, 0
      %s179 = sadd.s32 %s178, 1
      %s180 = scalar_select %p177, %s178, %s179
      %p183 = pneg %p177
      %p184 = scmp.eq.s32.totalorder %s22, 7
      %p185 = por %p183, %p184
      %p186 = scmp.ne.s32.totalorder %s178, %s181
      %p187 = scmp.eq.s32.totalorder %s22, 0
      %p188 = por %p186, %p187
      %p189 = scmp.ne.s32.totalorder %s178, %s181
      %p190 = scmp.eq.s32.totalorder %s27, 7
      %p191 = por %p189, %p190
      %p192 = scmp.ne.s32.totalorder %s181, %s182
      %p193 = scmp.eq.s32.totalorder %s27, 0
      %p194 = por %p192, %p193
      %p195 = scmp.ne.s32.totalorder %s181, %s182
      %p196 = scmp.eq.s32.totalorder %s28, 7
      %p197 = por %p195, %p196
      %p199 = scmp.ne.s32.totalorder %s182, %s198
      %p200 = scmp.eq.s32.totalorder %s28, 0
      %p201 = por %p199, %p200
      %s202 = ssub.s32 %s29, %s41
      %p203 = scmp.eq.s32.totalorder %s202, 0
      %s205 = sadd.s32 %s204, 1
      %s206 = scalar_select %p203, %s204, %s205
      %p209 = pneg %p203
      %p210 = scmp.eq.s32.totalorder %s22, 7
      %p211 = por %p209, %p210
      %p212 = scmp.ne.s32.totalorder %s204, %s207
      %p213 = scmp.eq.s32.totalorder %s22, 0
      %p214 = por %p212, %p213
      %p215 = scmp.ne.s32.totalorder %s204, %s207
      %p216 = scmp.eq.s32.totalorder %s27, 7
      %p217 = por %p215, %p216
      %p218 = scmp.ne.s32.totalorder %s207, %s208
      %p219 = scmp.eq.s32.totalorder %s27, 0
      %p220 = por %p218, %p219
      %p221 = scmp.ne.s32.totalorder %s207, %s208
      %p222 = scmp.eq.s32.totalorder %s28, 7
      %p223 = por %p221, %p222
      %p225 = scmp.ne.s32.totalorder %s208, %s224
      %p226 = scmp.eq.s32.totalorder %s28, 0
      %p227 = por %p225, %p226
      %s228 = ssub.s32 %s29, %s41
      %p229 = scmp.eq.s32.totalorder %s228, 0
      %s231 = sadd.s32 %s230, 1
      %s232 = scalar_select %p229, %s230, %s231
      %p235 = pneg %p229
      %p236 = scmp.eq.s32.totalorder %s22, 7
      %p237 = por %p235, %p236
      %p238 = scmp.ne.s32.totalorder %s230, %s233
      %p239 = scmp.eq.s32.totalorder %s22, 0
      %p240 = por %p238, %p239
      %p241 = scmp.ne.s32.totalorder %s230, %s233
      %p242 = scmp.eq.s32.totalorder %s27, 7
      %p243 = por %p241, %p242
      %p244 = scmp.ne.s32.totalorder %s233, %s234
      %p245 = scmp.eq.s32.totalorder %s27, 0
      %p246 = por %p244, %p245
      %p247 = scmp.ne.s32.totalorder %s233, %s234
      %p248 = scmp.eq.s32.totalorder %s28, 7
      %p249 = por %p247, %p248
      %p251 = scmp.ne.s32.totalorder %s234, %s250
      %p252 = scmp.eq.s32.totalorder %s28, 0
      %p253 = por %p251, %p252
      %p254 = scmp.le.s32.totalorder 1, %s22
      %p255 = scmp.lt.s32.totalorder %s22, 9
      %p256 = pnand %p254, %p255
      %p257 = pneg %p256
      // Predicated region
      $region9: #{hierarchical_attn_forward.3} parent=5 // pred_check
        _
      $region10: #{hierarchical_attn_forward.3} parent=5 // pred_check_branch
        %259 = sbr.rel (%p256) target = $region12
      $region11: #{hierarchical_attn_forward.3} parent=5 // pred_region
        %s260 = ssub.s32 %s22, 1
      $region12: #{hierarchical_attn_forward.3} parent=5 // pred_fallthru
        _
      %p261 = scmp.lt.s32.totalorder %s22, 8
      // Predicated region
      $region13: #{hierarchical_attn_forward.3} parent=5 // pred_check
        %p262 = pneg %p261
      $region14: #{hierarchical_attn_forward.3} parent=5 // pred_check_branch
        %264 = sbr.rel (%p262) target = $region16
      $region15: #{hierarchical_attn_forward.3} parent=5 // pred_region
        // Predicated region
        $region17: #{hierarchical_attn_forward.3} parent=15 // pred_check
          %p265 = pneg %p56
        $region18: #{hierarchical_attn_forward.3} parent=15 // pred_check_branch
          %267 = sbr.rel (%p265) target = $region20
        $region19: #{hierarchical_attn_forward.3} parent=15 // pred_region
          %s268 = smul.u32 64, %s30
          %p269 = scmp.lt.s32.totalorder %s29, 3
          %s270 = scalar_select %p269, %s29, 3
          %p271 = scmp.lt.s32.totalorder %s268, 127
          %s272 = scalar_select %p271, %s268, 127
          %s273 = smul.addr %s270, 128
          %s274 = sadd.s32 %s272, %s273
          %s275 = smul.addr %s274, 2
          %s276 = scalar_lea.vmem %s0, %s275
          %s277 = smul.u32 64, %s30
        $region20: #{hierarchical_attn_forward.3} parent=15 // pred_fallthru
          _
        // Predicated region
        $region21: #{hierarchical_attn_forward.3} parent=15 // pred_check
          %p278 = pneg %p84
        $region22: #{hierarchical_attn_forward.3} parent=15 // pred_check_branch
          %280 = sbr.rel (%p278) target = $region24
        $region23: #{hierarchical_attn_forward.3} parent=15 // pred_region
          %s281 = sand.u32 %s74, 1
          %s282 = scalar_lea.sflag [#allocation4], %s281
          %s283 = sand.u32 %s74, 1
          %s284 = smul.addr %s283, 8192
          %s285 = scalar_lea.vmem [#allocation3], %s284
          %s286 = smul.u32 1024, %s30
          %288 = vsyncadd %s282, 0
          %s289 = smul.addr %s29, 2048
          %s290 = sadd.s32 %s286, %s289
          %s291 = smul.addr %s290, 8
          %s292 = scalar_lea.hbm %s1, %s291
          %s293 = sshll.u32 %s292, 4
          %s294 = int_to_ptr.hbm [resolvable:$true] %s293
          %s295 = sshll.u32 %s285, 4
          %s296 = int_to_ptr.vmem [resolvable:$true] %s295
          %301 = dma.hbm_to_vmem [thread:$0]  %s294, 131072, %s296, %s282, 128, 128, 8
        $region24: #{hierarchical_attn_forward.3} parent=15 // pred_fallthru
          _
        // Predicated region
        $region25: #{hierarchical_attn_forward.3} parent=15 // pred_check
          %p302 = pneg %p110
        $region26: #{hierarchical_attn_forward.3} parent=15 // pred_check_branch
          %304 = sbr.rel (%p302) target = $region28
        $region27: #{hierarchical_attn_forward.3} parent=15 // pred_region
          %s305 = sand.u32 %s22, 1
          %s306 = scalar_lea.sflag [#allocation6], %s305
          %s307 = sand.u32 %s100, 1
          %s308 = scalar_lea.vmem [#allocation5], %s307
          %310 = vsyncadd %s306, 0
          %s311 = scalar_lea.hbm %s2, %s29
          %s313 = sshll.u32 %s311, 4
          %s314 = int_to_ptr.hbm [resolvable:$true] %s313
          %s315 = sshll.u32 %s308, 4
          %s316 = int_to_ptr.vmem [resolvable:$true] %s315
          %318 = dma.hbm_to_vmem [thread:$0]  %s314, 16, %s316, %s306
        $region28: #{hierarchical_attn_forward.3} parent=15 // pred_fallthru
          _
        // Predicated region
        $region29: #{hierarchical_attn_forward.3} parent=15 // pred_check
          %p319 = pneg %p136
        $region30: #{hierarchical_attn_forward.3} parent=15 // pred_check_branch
          %321 = sbr.rel (%p319) target = $region32
        $region31: #{hierarchical_attn_forward.3} parent=15 // pred_region
          %s322 = sand.u32 %s22, 1
          %s323 = scalar_lea.sflag [#allocation6], %s322
          %s324 = sand.u32 %s126, 1
          %s325 = smul.addr %s324, 512
          %s326 = scalar_lea.vmem [#allocation7], %s325
          %328 = vsyncadd %s323, 0
          %s329 = smul.addr %s29, 64
          %s330 = smul.addr %s329, 8
          %s331 = scalar_lea.hbm %s3, %s330
          %s332 = sshll.u32 %s331, 4
          %s333 = int_to_ptr.hbm [resolvable:$true] %s332
          %s334 = sshll.u32 %s326, 4
          %s335 = int_to_ptr.vmem [resolvable:$true] %s334
          %340 = dma.hbm_to_vmem [thread:$0]  %s333, 8192, %s335, %s323, 512, 512, 32
        $region32: #{hierarchical_attn_forward.3} parent=15 // pred_fallthru
          _
        // Predicated region
        $region33: #{hierarchical_attn_forward.3} parent=15 // pred_check
          %p341 = pneg %p162
        $region34: #{hierarchical_attn_forward.3} parent=15 // pred_check_branch
          %343 = sbr.rel (%p341) target = $region36
        $region35: #{hierarchical_attn_forward.3} parent=15 // pred_region
          %s344 = sand.u32 %s22, 1
          %s345 = scalar_lea.sflag [#allocation9], %s344
          %s346 = sand.u32 %s152, 1
          %s347 = smul.addr %s346, 4
          %s348 = scalar_lea.vmem [#allocation8], %s347
          %350 = vsyncadd %s345, 0
          %s351 = smul.addr %s29, 4
          %s352 = scalar_lea.hbm %s4, %s351
          %s354 = sshll.u32 %s352, 4
          %s355 = int_to_ptr.hbm [resolvable:$true] %s354
          %s356 = sshll.u32 %s348, 4
          %s357 = int_to_ptr.vmem [resolvable:$true] %s356
          %359 = dma.hbm_to_vmem [thread:$0]  %s355, 64, %s357, %s345
        $region36: #{hierarchical_attn_forward.3} parent=15 // pred_fallthru
          _
        // Predicated region
        $region37: #{hierarchical_attn_forward.3} parent=15 // pred_check
          %p360 = pneg %p188
        $region38: #{hierarchical_attn_forward.3} parent=15 // pred_check_branch
          %362 = sbr.rel (%p360) target = $region40
        $region39: #{hierarchical_attn_forward.3} parent=15 // pred_region
          %s363 = sand.u32 %s22, 1
          %s364 = scalar_lea.sflag [#allocation9], %s363
          %s365 = sand.u32 %s178, 1
          %s366 = smul.addr %s365, 4
          %s367 = scalar_lea.vmem [#allocation10], %s366
          %369 = vsyncadd %s364, 0
          %s370 = smul.addr %s29, 4
          %s371 = scalar_lea.hbm %s5, %s370
          %s373 = sshll.u32 %s371, 4
          %s374 = int_to_ptr.hbm [resolvable:$true] %s373
          %s375 = sshll.u32 %s367, 4
          %s376 = int_to_ptr.vmem [resolvable:$true] %s375
          %378 = dma.hbm_to_vmem [thread:$0]  %s374, 64, %s376, %s364
        $region40: #{hierarchical_attn_forward.3} parent=15 // pred_fallthru
          _
        // Predicated region
        $region41: #{hierarchical_attn_forward.3} parent=15 // pred_check
          %p379 = pneg %p214
        $region42: #{hierarchical_attn_forward.3} parent=15 // pred_check_branch
          %381 = sbr.rel (%p379) target = $region44
        $region43: #{hierarchical_attn_forward.3} parent=15 // pred_region
          %p382 = scmp.lt.s32.totalorder %s29, 3
          %s383 = scalar_select %p382, %s29, 3
          %s384 = scalar_lea.vmem %s6, %s383
        $region44: #{hierarchical_attn_forward.3} parent=15 // pred_fallthru
          _
      $region16: #{hierarchical_attn_forward.3} parent=5 // pred_fallthru
        _
      %p385 = scmp.le.s32.totalorder 1, %s22
      %p386 = scmp.lt.s32.totalorder %s22, 9
      %p387 = pnand %p385, %p386
      %p388 = pneg %p387
      // Predicated region
      $region45: #{hierarchical_attn_forward.3} parent=5 // pred_check
        _
      $region46: #{hierarchical_attn_forward.3} parent=5 // pred_check_branch
        %390 = sbr.rel (%p387) target = $region48
      $region47: #{hierarchical_attn_forward.3} parent=5 // pred_region
        %s391 = ssub.s32 %s22, 1
        %s392 = sand.u32 %s77, 1
        %s393 = scalar_lea.sflag [#allocation4], %s392
        %s394 = sand.u32 %s77, 1
        %s395 = smul.addr %s394, 8192
        %s396 = scalar_lea.vmem [#allocation3], %s395
        // Predicated region
        $region49: #{hierarchical_attn_forward.3} parent=47 // pred_check
          %p397 = pneg %p90
        $region50: #{hierarchical_attn_forward.3} parent=47 // pred_check_branch
          %399 = sbr.rel (%p397) target = $region52
        $region51: #{hierarchical_attn_forward.3} parent=47 // pred_region
          %401 = dma.done %s393, 131072
        $region52: #{hierarchical_attn_forward.3} parent=47 // pred_fallthru
          _
        %s402 = sand.u32 %s27, 1
        %s403 = scalar_lea.sflag [#allocation6], %s402
        %s404 = sand.u32 %s103, 1
        %s405 = scalar_lea.vmem [#allocation5], %s404
        // Predicated region
        $region53: #{hierarchical_attn_forward.3} parent=47 // pred_check
          %p406 = pneg %p116
        $region54: #{hierarchical_attn_forward.3} parent=47 // pred_check_branch
          %408 = sbr.rel (%p406) target = $region56
        $region55: #{hierarchical_attn_forward.3} parent=47 // pred_region
          %410 = dma.done %s403, 16
        $region56: #{hierarchical_attn_forward.3} parent=47 // pred_fallthru
          _
        %s411 = sand.u32 %s27, 1
        %s412 = scalar_lea.sflag [#allocation6], %s411
        %s413 = sand.u32 %s129, 1
        %s414 = smul.addr %s413, 512
        %s415 = scalar_lea.vmem [#allocation7], %s414
        // Predicated region
        $region57: #{hierarchical_attn_forward.3} parent=47 // pred_check
          %p416 = pneg %p142
        $region58: #{hierarchical_attn_forward.3} parent=47 // pred_check_branch
          %418 = sbr.rel (%p416) target = $region60
        $region59: #{hierarchical_attn_forward.3} parent=47 // pred_region
          %420 = dma.done %s412, 8192
        $region60: #{hierarchical_attn_forward.3} parent=47 // pred_fallthru
          _
        %s421 = sand.u32 %s27, 1
        %s422 = scalar_lea.sflag [#allocation9], %s421
        %s423 = sand.u32 %s155, 1
        %s424 = smul.addr %s423, 4
        %s425 = scalar_lea.vmem [#allocation8], %s424
        // Predicated region
        $region61: #{hierarchical_attn_forward.3} parent=47 // pred_check
          %p426 = pneg %p168
        $region62: #{hierarchical_attn_forward.3} parent=47 // pred_check_branch
          %428 = sbr.rel (%p426) target = $region64
        $region63: #{hierarchical_attn_forward.3} parent=47 // pred_region
          %430 = dma.done %s422, 64
        $region64: #{hierarchical_attn_forward.3} parent=47 // pred_fallthru
          _
        %s431 = sand.u32 %s27, 1
        %s432 = scalar_lea.sflag [#allocation9], %s431
        %s433 = sand.u32 %s181, 1
        %s434 = smul.addr %s433, 4
        %s435 = scalar_lea.vmem [#allocation10], %s434
        // Predicated region
        $region65: #{hierarchical_attn_forward.3} parent=47 // pred_check
          %p436 = pneg %p194
        $region66: #{hierarchical_attn_forward.3} parent=47 // pred_check_branch
          %438 = sbr.rel (%p436) target = $region68
        $region67: #{hierarchical_attn_forward.3} parent=47 // pred_region
          %440 = dma.done %s432, 64
        $region68: #{hierarchical_attn_forward.3} parent=47 // pred_fallthru
          _
        %s441 = smul.u32 64, %s32
        %p442 = scmp.lt.s32.totalorder %s31, 3
        %s443 = scalar_select %p442, %s31, 3
        %p444 = scmp.lt.s32.totalorder %s441, 127
        %s445 = scalar_select %p444, %s441, 127
        %s446 = smul.addr %s443, 128
        %s447 = sadd.s32 %s445, %s446
        %s448 = smul.addr %s447, 2
        %s449 = scalar_lea.vmem %s0, %s448
        %p450 = pneg %p62
        %p451 = pneg %p59
        %s452 = sand.u32 %s77, 1
        %s453 = scalar_lea.sflag [#allocation4], %s452
        %s454 = sand.u32 %s77, 1
        %s455 = smul.addr %s454, 8192
        %s456 = scalar_lea.vmem [#allocation3], %s455
        %p457 = pneg %p90
        %p458 = pneg %p87
        %s459 = sand.u32 %s27, 1
        %s460 = scalar_lea.sflag [#allocation6], %s459
        %s461 = sand.u32 %s103, 1
        %s462 = scalar_lea.vmem [#allocation5], %s461
        %p463 = pneg %p116
        %p464 = pneg %p113
        %s465 = sand.u32 %s27, 1
        %s466 = scalar_lea.sflag [#allocation6], %s465
        %s467 = sand.u32 %s129, 1
        %s468 = smul.addr %s467, 512
        %s469 = scalar_lea.vmem [#allocation7], %s468
        %p470 = pneg %p142
        %p471 = pneg %p139
        %s472 = sand.u32 %s27, 1
        %s473 = scalar_lea.sflag [#allocation9], %s472
        %s474 = sand.u32 %s155, 1
        %s475 = smul.addr %s474, 4
        %s476 = scalar_lea.vmem [#allocation8], %s475
        %p477 = pneg %p168
        %p478 = pneg %p165
        %s479 = sand.u32 %s27, 1
        %s480 = scalar_lea.sflag [#allocation9], %s479
        %s481 = sand.u32 %s181, 1
        %s482 = smul.addr %s481, 4
        %s483 = scalar_lea.vmem [#allocation10], %s482
        %p484 = pneg %p194
        %p485 = pneg %p191
        %p486 = scmp.lt.s32.totalorder %s31, 3
        %s487 = scalar_select %p486, %s31, 3
        %s488 = scalar_lea.vmem %s6, %s487
        %p489 = pneg %p220
        %p490 = pneg %p217
        %p491 = pneg %p246
        %p492 = pneg %p243
        %p493 = scmp.lt.s32.totalorder %s31, 3
        %s494 = scalar_select %p493, %s31, 3
        %s495 = smul.addr %s494, 2
        %s496 = scalar_lea.vmem %s7, %s495
        %s497 = smul.u32 64, %s32
        %p498 = scmp.lt.s32.totalorder %s31, 3
        %s499 = scalar_select %p498, %s31, 3
        %p500 = scmp.lt.s32.totalorder %s497, 127
        %s501 = scalar_select %p500, %s497, 127
        %s502 = smul.addr %s499, 128
        %s503 = sadd.s32 %s501, %s502
        %s504 = smul.addr %s503, 2
        %s505 = scalar_lea.vmem %s0, %s504
        %s506 = smul.u32 64, %s32
        %s507 = smul.u32 1024, %s32
        %p508 = scmp.lt.s32.totalorder %s31, 3
        %s509 = scalar_select %p508, %s31, 3
        %s510 = scalar_lea.vmem %s6, %s509
        %p511 = scmp.lt.s32.totalorder %s31, 3
        %s512 = scalar_select %p511, %s31, 3
        %s513 = smul.addr %s512, 2
        %s514 = scalar_lea.vmem %s7, %s513
        %p515 = scmp.eq.s32.totalorder %s32, 0
        // Predicated region
        $region69: #{hierarchical_attn_forward.3} parent=47 // pred_check
          %p516 = pneg %p515
        $region70: #{hierarchical_attn_forward.3} parent=47 // pred_check_branch
          %518 = sbr.rel (%p516) target = $region72
        $region71: #{hierarchical_attn_forward.3} parent=47 // pred_region
          %519 = vst [vmem:[#allocation2] sm:$0x3] 0.0
        $region72: #{hierarchical_attn_forward.3} parent=47 // pred_fallthru
          _
        %v520 = vld [vmem:[#allocation2] sm:$0x3]
        %v521 = vld [vmem:[%s505] sm:$0xff]
        %v522 = vld [vmem:[%s505 + $0x8] sm:$0xff]
        %v523 = vld [vmem:[%s505 + $0x10] sm:$0xff]
        %v524 = vld [vmem:[%s505 + $0x18] sm:$0xff]
        %v525 = vld [vmem:[%s505 + $0x20] sm:$0xff]
        %v526 = vld [vmem:[%s505 + $0x28] sm:$0xff]
        %v527 = vld [vmem:[%s505 + $0x30] sm:$0xff]
        %v528 = vld [vmem:[%s505 + $0x38] sm:$0xff]
        %v529 = vld [vmem:[%s505 + $0x40] sm:$0xff]
        %v530 = vld [vmem:[%s505 + $0x48] sm:$0xff]
        %v531 = vld [vmem:[%s505 + $0x50] sm:$0xff]
        %v532 = vld [vmem:[%s505 + $0x58] sm:$0xff]
        %v533 = vld [vmem:[%s505 + $0x60] sm:$0xff]
        %v534 = vld [vmem:[%s505 + $0x68] sm:$0xff]
        %v535 = vld [vmem:[%s505 + $0x70] sm:$0xff]
        %v536 = vld [vmem:[%s505 + $0x78] sm:$0xff]
        %v537 = vld [vmem:[%s396] sm:$0xff]
        %v538 = vld [vmem:[%s396 + $0x8] sm:$0xff]
        %v539 = vld [vmem:[%s396 + $0x10] sm:$0xff]
        %v540 = vld [vmem:[%s396 + $0x18] sm:$0xff]
        %v541 = vld [vmem:[%s396 + $0x20] sm:$0xff]
        %v542 = vld [vmem:[%s396 + $0x28] sm:$0xff]
        %v543 = vld [vmem:[%s396 + $0x30] sm:$0xff]
        %v544 = vld [vmem:[%s396 + $0x38] sm:$0xff]
        %v545 = vld [vmem:[%s396 + $0x40] sm:$0xff]
        %v546 = vld [vmem:[%s396 + $0x48] sm:$0xff]
        %v547 = vld [vmem:[%s396 + $0x50] sm:$0xff]
        %v548 = vld [vmem:[%s396 + $0x58] sm:$0xff]
        %v549 = vld [vmem:[%s396 + $0x60] sm:$0xff]
        %v550 = vld [vmem:[%s396 + $0x68] sm:$0xff]
        %v551 = vld [vmem:[%s396 + $0x70] sm:$0xff]
        %v552 = vld [vmem:[%s396 + $0x78] sm:$0xff]
        %v553 = vld [vmem:[%s396 + $0x80] sm:$0xff]
        %v554 = vld [vmem:[%s396 + $0x88] sm:$0xff]
        %v555 = vld [vmem:[%s396 + $0x90] sm:$0xff]
        %v556 = vld [vmem:[%s396 + $0x98] sm:$0xff]
        %v557 = vld [vmem:[%s396 + $0xa0] sm:$0xff]
        %v558 = vld [vmem:[%s396 + $0xa8] sm:$0xff]
        %v559 = vld [vmem:[%s396 + $0xb0] sm:$0xff]
        %v560 = vld [vmem:[%s396 + $0xb8] sm:$0xff]
        %v561 = vld [vmem:[%s396 + $0xc0] sm:$0xff]
        %v562 = vld [vmem:[%s396 + $0xc8] sm:$0xff]
        %v563 = vld [vmem:[%s396 + $0xd0] sm:$0xff]
        %v564 = vld [vmem:[%s396 + $0xd8] sm:$0xff]
        %v565 = vld [vmem:[%s396 + $0xe0] sm:$0xff]
        %v566 = vld [vmem:[%s396 + $0xe8] sm:$0xff]
        %v567 = vld [vmem:[%s396 + $0xf0] sm:$0xff]
        %v568 = vld [vmem:[%s396 + $0xf8] sm:$0xff]
        %v569 = vld [vmem:[%s396 + $0x100] sm:$0xff]
        %v570 = vld [vmem:[%s396 + $0x108] sm:$0xff]
        %v571 = vld [vmem:[%s396 + $0x110] sm:$0xff]
        %v572 = vld [vmem:[%s396 + $0x118] sm:$0xff]
        %v573 = vld [vmem:[%s396 + $0x120] sm:$0xff]
        %v574 = vld [vmem:[%s396 + $0x128] sm:$0xff]
        %v575 = vld [vmem:[%s396 + $0x130] sm:$0xff]
        %v576 = vld [vmem:[%s396 + $0x138] sm:$0xff]
        %v577 = vld [vmem:[%s396 + $0x140] sm:$0xff]
        %v578 = vld [vmem:[%s396 + $0x148] sm:$0xff]
        %v579 = vld [vmem:[%s396 + $0x150] sm:$0xff]
        %v580 = vld [vmem:[%s396 + $0x158] sm:$0xff]
        %v581 = vld [vmem:[%s396 + $0x160] sm:$0xff]
        %v582 = vld [vmem:[%s396 + $0x168] sm:$0xff]
        %v583 = vld [vmem:[%s396 + $0x170] sm:$0xff]
        %v584 = vld [vmem:[%s396 + $0x178] sm:$0xff]
        %v585 = vld [vmem:[%s396 + $0x180] sm:$0xff]
        %v586 = vld [vmem:[%s396 + $0x188] sm:$0xff]
        %v587 = vld [vmem:[%s396 + $0x190] sm:$0xff]
        %v588 = vld [vmem:[%s396 + $0x198] sm:$0xff]
        %v589 = vld [vmem:[%s396 + $0x1a0] sm:$0xff]
        %v590 = vld [vmem:[%s396 + $0x1a8] sm:$0xff]
        %v591 = vld [vmem:[%s396 + $0x1b0] sm:$0xff]
        %v592 = vld [vmem:[%s396 + $0x1b8] sm:$0xff]
        %v593 = vld [vmem:[%s396 + $0x1c0] sm:$0xff]
        %v594 = vld [vmem:[%s396 + $0x1c8] sm:$0xff]
        %v595 = vld [vmem:[%s396 + $0x1d0] sm:$0xff]
        %v596 = vld [vmem:[%s396 + $0x1d8] sm:$0xff]
        %v597 = vld [vmem:[%s396 + $0x1e0] sm:$0xff]
        %v598 = vld [vmem:[%s396 + $0x1e8] sm:$0xff]
        %v599 = vld [vmem:[%s396 + $0x1f0] sm:$0xff]
        %v600 = vld [vmem:[%s396 + $0x1f8] sm:$0xff]
        %v601 = vld [vmem:[%s396 + $0x200] sm:$0xff]
        %v602 = vld [vmem:[%s396 + $0x208] sm:$0xff]
        %v603 = vld [vmem:[%s396 + $0x210] sm:$0xff]
        %v604 = vld [vmem:[%s396 + $0x218] sm:$0xff]
        %v605 = vld [vmem:[%s396 + $0x220] sm:$0xff]
        %v606 = vld [vmem:[%s396 + $0x228] sm:$0xff]
        %v607 = vld [vmem:[%s396 + $0x230] sm:$0xff]
        %v608 = vld [vmem:[%s396 + $0x238] sm:$0xff]
        %v609 = vld [vmem:[%s396 + $0x240] sm:$0xff]
        %v610 = vld [vmem:[%s396 + $0x248] sm:$0xff]
        %v611 = vld [vmem:[%s396 + $0x250] sm:$0xff]
        %v612 = vld [vmem:[%s396 + $0x258] sm:$0xff]
        %v613 = vld [vmem:[%s396 + $0x260] sm:$0xff]
        %v614 = vld [vmem:[%s396 + $0x268] sm:$0xff]
        %v615 = vld [vmem:[%s396 + $0x270] sm:$0xff]
        %v616 = vld [vmem:[%s396 + $0x278] sm:$0xff]
        %v617 = vld [vmem:[%s396 + $0x280] sm:$0xff]
        %v618 = vld [vmem:[%s396 + $0x288] sm:$0xff]
        %v619 = vld [vmem:[%s396 + $0x290] sm:$0xff]
        %v620 = vld [vmem:[%s396 + $0x298] sm:$0xff]
        %v621 = vld [vmem:[%s396 + $0x2a0] sm:$0xff]
        %v622 = vld [vmem:[%s396 + $0x2a8] sm:$0xff]
        %v623 = vld [vmem:[%s396 + $0x2b0] sm:$0xff]
        %v624 = vld [vmem:[%s396 + $0x2b8] sm:$0xff]
        %v625 = vld [vmem:[%s396 + $0x2c0] sm:$0xff]
        %v626 = vld [vmem:[%s396 + $0x2c8] sm:$0xff]
        %v627 = vld [vmem:[%s396 + $0x2d0] sm:$0xff]
        %v628 = vld [vmem:[%s396 + $0x2d8] sm:$0xff]
        %v629 = vld [vmem:[%s396 + $0x2e0] sm:$0xff]
        %v630 = vld [vmem:[%s396 + $0x2e8] sm:$0xff]
        %v631 = vld [vmem:[%s396 + $0x2f0] sm:$0xff]
        %v632 = vld [vmem:[%s396 + $0x2f8] sm:$0xff]
        %v633 = vld [vmem:[%s396 + $0x300] sm:$0xff]
        %v634 = vld [vmem:[%s396 + $0x308] sm:$0xff]
        %v635 = vld [vmem:[%s396 + $0x310] sm:$0xff]
        %v636 = vld [vmem:[%s396 + $0x318] sm:$0xff]
        %v637 = vld [vmem:[%s396 + $0x320] sm:$0xff]
        %v638 = vld [vmem:[%s396 + $0x328] sm:$0xff]
        %v639 = vld [vmem:[%s396 + $0x330] sm:$0xff]
        %v640 = vld [vmem:[%s396 + $0x338] sm:$0xff]
        %v641 = vld [vmem:[%s396 + $0x340] sm:$0xff]
        %v642 = vld [vmem:[%s396 + $0x348] sm:$0xff]
        %v643 = vld [vmem:[%s396 + $0x350] sm:$0xff]
        %v644 = vld [vmem:[%s396 + $0x358] sm:$0xff]
        %v645 = vld [vmem:[%s396 + $0x360] sm:$0xff]
        %v646 = vld [vmem:[%s396 + $0x368] sm:$0xff]
        %v647 = vld [vmem:[%s396 + $0x370] sm:$0xff]
        %v648 = vld [vmem:[%s396 + $0x378] sm:$0xff]
        %v649 = vld [vmem:[%s396 + $0x380] sm:$0xff]
        %v650 = vld [vmem:[%s396 + $0x388] sm:$0xff]
        %v651 = vld [vmem:[%s396 + $0x390] sm:$0xff]
        %v652 = vld [vmem:[%s396 + $0x398] sm:$0xff]
        %v653 = vld [vmem:[%s396 + $0x3a0] sm:$0xff]
        %v654 = vld [vmem:[%s396 + $0x3a8] sm:$0xff]
        %v655 = vld [vmem:[%s396 + $0x3b0] sm:$0xff]
        %v656 = vld [vmem:[%s396 + $0x3b8] sm:$0xff]
        %v657 = vld [vmem:[%s396 + $0x3c0] sm:$0xff]
        %v658 = vld [vmem:[%s396 + $0x3c8] sm:$0xff]
        %v659 = vld [vmem:[%s396 + $0x3d0] sm:$0xff]
        %v660 = vld [vmem:[%s396 + $0x3d8] sm:$0xff]
        %v661 = vld [vmem:[%s396 + $0x3e0] sm:$0xff]
        %v662 = vld [vmem:[%s396 + $0x3e8] sm:$0xff]
        %v663 = vld [vmem:[%s396 + $0x3f0] sm:$0xff]
        %v664 = vld [vmem:[%s396 + $0x3f8] sm:$0xff]
        %v665 = vld [vmem:[%s396 + $0x400] sm:$0xff]
        %v666 = vld [vmem:[%s396 + $0x408] sm:$0xff]
        %v667 = vld [vmem:[%s396 + $0x410] sm:$0xff]
        %v668 = vld [vmem:[%s396 + $0x418] sm:$0xff]
        %v669 = vld [vmem:[%s396 + $0x420] sm:$0xff]
        %v670 = vld [vmem:[%s396 + $0x428] sm:$0xff]
        %v671 = vld [vmem:[%s396 + $0x430] sm:$0xff]
        %v672 = vld [vmem:[%s396 + $0x438] sm:$0xff]
        %v673 = vld [vmem:[%s396 + $0x440] sm:$0xff]
        %v674 = vld [vmem:[%s396 + $0x448] sm:$0xff]
        %v675 = vld [vmem:[%s396 + $0x450] sm:$0xff]
        %v676 = vld [vmem:[%s396 + $0x458] sm:$0xff]
        %v677 = vld [vmem:[%s396 + $0x460] sm:$0xff]
        %v678 = vld [vmem:[%s396 + $0x468] sm:$0xff]
        %v679 = vld [vmem:[%s396 + $0x470] sm:$0xff]
        %v680 = vld [vmem:[%s396 + $0x478] sm:$0xff]
        %v681 = vld [vmem:[%s396 + $0x480] sm:$0xff]
        %v682 = vld [vmem:[%s396 + $0x488] sm:$0xff]
        %v683 = vld [vmem:[%s396 + $0x490] sm:$0xff]
        %v684 = vld [vmem:[%s396 + $0x498] sm:$0xff]
        %v685 = vld [vmem:[%s396 + $0x4a0] sm:$0xff]
        %v686 = vld [vmem:[%s396 + $0x4a8] sm:$0xff]
        %v687 = vld [vmem:[%s396 + $0x4b0] sm:$0xff]
        %v688 = vld [vmem:[%s396 + $0x4b8] sm:$0xff]
        %v689 = vld [vmem:[%s396 + $0x4c0] sm:$0xff]
        %v690 = vld [vmem:[%s396 + $0x4c8] sm:$0xff]
        %v691 = vld [vmem:[%s396 + $0x4d0] sm:$0xff]
        %v692 = vld [vmem:[%s396 + $0x4d8] sm:$0xff]
        %v693 = vld [vmem:[%s396 + $0x4e0] sm:$0xff]
        %v694 = vld [vmem:[%s396 + $0x4e8] sm:$0xff]
        %v695 = vld [vmem:[%s396 + $0x4f0] sm:$0xff]
        %v696 = vld [vmem:[%s396 + $0x4f8] sm:$0xff]
        %v697 = vld [vmem:[%s396 + $0x500] sm:$0xff]
        %v698 = vld [vmem:[%s396 + $0x508] sm:$0xff]
        %v699 = vld [vmem:[%s396 + $0x510] sm:$0xff]
        %v700 = vld [vmem:[%s396 + $0x518] sm:$0xff]
        %v701 = vld [vmem:[%s396 + $0x520] sm:$0xff]
        %v702 = vld [vmem:[%s396 + $0x528] sm:$0xff]
        %v703 = vld [vmem:[%s396 + $0x530] sm:$0xff]
        %v704 = vld [vmem:[%s396 + $0x538] sm:$0xff]
        %v705 = vld [vmem:[%s396 + $0x540] sm:$0xff]
        %v706 = vld [vmem:[%s396 + $0x548] sm:$0xff]
        %v707 = vld [vmem:[%s396 + $0x550] sm:$0xff]
        %v708 = vld [vmem:[%s396 + $0x558] sm:$0xff]
        %v709 = vld [vmem:[%s396 + $0x560] sm:$0xff]
        %v710 = vld [vmem:[%s396 + $0x568] sm:$0xff]
        %v711 = vld [vmem:[%s396 + $0x570] sm:$0xff]
        %v712 = vld [vmem:[%s396 + $0x578] sm:$0xff]
        %v713 = vld [vmem:[%s396 + $0x580] sm:$0xff]
        %v714 = vld [vmem:[%s396 + $0x588] sm:$0xff]
        %v715 = vld [vmem:[%s396 + $0x590] sm:$0xff]
        %v716 = vld [vmem:[%s396 + $0x598] sm:$0xff]
        %v717 = vld [vmem:[%s396 + $0x5a0] sm:$0xff]
        %v718 = vld [vmem:[%s396 + $0x5a8] sm:$0xff]
        %v719 = vld [vmem:[%s396 + $0x5b0] sm:$0xff]
        %v720 = vld [vmem:[%s396 + $0x5b8] sm:$0xff]
        %v721 = vld [vmem:[%s396 + $0x5c0] sm:$0xff]
        %v722 = vld [vmem:[%s396 + $0x5c8] sm:$0xff]
        %v723 = vld [vmem:[%s396 + $0x5d0] sm:$0xff]
        %v724 = vld [vmem:[%s396 + $0x5d8] sm:$0xff]
        %v725 = vld [vmem:[%s396 + $0x5e0] sm:$0xff]
        %v726 = vld [vmem:[%s396 + $0x5e8] sm:$0xff]
        %v727 = vld [vmem:[%s396 + $0x5f0] sm:$0xff]
        %v728 = vld [vmem:[%s396 + $0x5f8] sm:$0xff]
        %v729 = vld [vmem:[%s396 + $0x600] sm:$0xff]
        %v730 = vld [vmem:[%s396 + $0x608] sm:$0xff]
        %v731 = vld [vmem:[%s396 + $0x610] sm:$0xff]
        %v732 = vld [vmem:[%s396 + $0x618] sm:$0xff]
        %v733 = vld [vmem:[%s396 + $0x620] sm:$0xff]
        %v734 = vld [vmem:[%s396 + $0x628] sm:$0xff]
        %v735 = vld [vmem:[%s396 + $0x630] sm:$0xff]
        %v736 = vld [vmem:[%s396 + $0x638] sm:$0xff]
        %v737 = vld [vmem:[%s396 + $0x640] sm:$0xff]
        %v738 = vld [vmem:[%s396 + $0x648] sm:$0xff]
        %v739 = vld [vmem:[%s396 + $0x650] sm:$0xff]
        %v740 = vld [vmem:[%s396 + $0x658] sm:$0xff]
        %v741 = vld [vmem:[%s396 + $0x660] sm:$0xff]
        %v742 = vld [vmem:[%s396 + $0x668] sm:$0xff]
        %v743 = vld [vmem:[%s396 + $0x670] sm:$0xff]
        %v744 = vld [vmem:[%s396 + $0x678] sm:$0xff]
        %v745 = vld [vmem:[%s396 + $0x680] sm:$0xff]
        %v746 = vld [vmem:[%s396 + $0x688] sm:$0xff]
        %v747 = vld [vmem:[%s396 + $0x690] sm:$0xff]
        %v748 = vld [vmem:[%s396 + $0x698] sm:$0xff]
        %v749 = vld [vmem:[%s396 + $0x6a0] sm:$0xff]
        %v750 = vld [vmem:[%s396 + $0x6a8] sm:$0xff]
        %v751 = vld [vmem:[%s396 + $0x6b0] sm:$0xff]
        %v752 = vld [vmem:[%s396 + $0x6b8] sm:$0xff]
        %v753 = vld [vmem:[%s396 + $0x6c0] sm:$0xff]
        %v754 = vld [vmem:[%s396 + $0x6c8] sm:$0xff]
        %v755 = vld [vmem:[%s396 + $0x6d0] sm:$0xff]
        %v756 = vld [vmem:[%s396 + $0x6d8] sm:$0xff]
        %v757 = vld [vmem:[%s396 + $0x6e0] sm:$0xff]
        %v758 = vld [vmem:[%s396 + $0x6e8] sm:$0xff]
        %v759 = vld [vmem:[%s396 + $0x6f0] sm:$0xff]
        %v760 = vld [vmem:[%s396 + $0x6f8] sm:$0xff]
        %v761 = vld [vmem:[%s396 + $0x700] sm:$0xff]
        %v762 = vld [vmem:[%s396 + $0x708] sm:$0xff]
        %v763 = vld [vmem:[%s396 + $0x710] sm:$0xff]
        %v764 = vld [vmem:[%s396 + $0x718] sm:$0xff]
        %v765 = vld [vmem:[%s396 + $0x720] sm:$0xff]
        %v766 = vld [vmem:[%s396 + $0x728] sm:$0xff]
        %v767 = vld [vmem:[%s396 + $0x730] sm:$0xff]
        %v768 = vld [vmem:[%s396 + $0x738] sm:$0xff]
        %v769 = vld [vmem:[%s396 + $0x740] sm:$0xff]
        %v770 = vld [vmem:[%s396 + $0x748] sm:$0xff]
        %v771 = vld [vmem:[%s396 + $0x750] sm:$0xff]
        %v772 = vld [vmem:[%s396 + $0x758] sm:$0xff]
        %v773 = vld [vmem:[%s396 + $0x760] sm:$0xff]
        %v774 = vld [vmem:[%s396 + $0x768] sm:$0xff]
        %v775 = vld [vmem:[%s396 + $0x770] sm:$0xff]
        %v776 = vld [vmem:[%s396 + $0x778] sm:$0xff]
        %v777 = vld [vmem:[%s396 + $0x780] sm:$0xff]
        %v778 = vld [vmem:[%s396 + $0x788] sm:$0xff]
        %v779 = vld [vmem:[%s396 + $0x790] sm:$0xff]
        %v780 = vld [vmem:[%s396 + $0x798] sm:$0xff]
        %v781 = vld [vmem:[%s396 + $0x7a0] sm:$0xff]
        %v782 = vld [vmem:[%s396 + $0x7a8] sm:$0xff]
        %v783 = vld [vmem:[%s396 + $0x7b0] sm:$0xff]
        %v784 = vld [vmem:[%s396 + $0x7b8] sm:$0xff]
        %v785 = vld [vmem:[%s396 + $0x7c0] sm:$0xff]
        %v786 = vld [vmem:[%s396 + $0x7c8] sm:$0xff]
        %v787 = vld [vmem:[%s396 + $0x7d0] sm:$0xff]
        %v788 = vld [vmem:[%s396 + $0x7d8] sm:$0xff]
        %v789 = vld [vmem:[%s396 + $0x7e0] sm:$0xff]
        %v790 = vld [vmem:[%s396 + $0x7e8] sm:$0xff]
        %v791 = vld [vmem:[%s396 + $0x7f0] sm:$0xff]
        %v792 = vld [vmem:[%s396 + $0x7f8] sm:$0xff]
        %v793 = vld [vmem:[%s396 + $0x800] sm:$0xff]
        %v794 = vld [vmem:[%s396 + $0x808] sm:$0xff]
        %v795 = vld [vmem:[%s396 + $0x810] sm:$0xff]
        %v796 = vld [vmem:[%s396 + $0x818] sm:$0xff]
        %v797 = vld [vmem:[%s396 + $0x820] sm:$0xff]
        %v798 = vld [vmem:[%s396 + $0x828] sm:$0xff]
        %v799 = vld [vmem:[%s396 + $0x830] sm:$0xff]
        %v800 = vld [vmem:[%s396 + $0x838] sm:$0xff]
        %v801 = vld [vmem:[%s396 + $0x840] sm:$0xff]
        %v802 = vld [vmem:[%s396 + $0x848] sm:$0xff]
        %v803 = vld [vmem:[%s396 + $0x850] sm:$0xff]
        %v804 = vld [vmem:[%s396 + $0x858] sm:$0xff]
        %v805 = vld [vmem:[%s396 + $0x860] sm:$0xff]
        %v806 = vld [vmem:[%s396 + $0x868] sm:$0xff]
        %v807 = vld [vmem:[%s396 + $0x870] sm:$0xff]
        %v808 = vld [vmem:[%s396 + $0x878] sm:$0xff]
        %v809 = vld [vmem:[%s396 + $0x880] sm:$0xff]
        %v810 = vld [vmem:[%s396 + $0x888] sm:$0xff]
        %v811 = vld [vmem:[%s396 + $0x890] sm:$0xff]
        %v812 = vld [vmem:[%s396 + $0x898] sm:$0xff]
        %v813 = vld [vmem:[%s396 + $0x8a0] sm:$0xff]
        %v814 = vld [vmem:[%s396 + $0x8a8] sm:$0xff]
        %v815 = vld [vmem:[%s396 + $0x8b0] sm:$0xff]
        %v816 = vld [vmem:[%s396 + $0x8b8] sm:$0xff]
        %v817 = vld [vmem:[%s396 + $0x8c0] sm:$0xff]
        %v818 = vld [vmem:[%s396 + $0x8c8] sm:$0xff]
        %v819 = vld [vmem:[%s396 + $0x8d0] sm:$0xff]
        %v820 = vld [vmem:[%s396 + $0x8d8] sm:$0xff]
        %v821 = vld [vmem:[%s396 + $0x8e0] sm:$0xff]
        %v822 = vld [vmem:[%s396 + $0x8e8] sm:$0xff]
        %v823 = vld [vmem:[%s396 + $0x8f0] sm:$0xff]
        %v824 = vld [vmem:[%s396 + $0x8f8] sm:$0xff]
        %v825 = vld [vmem:[%s396 + $0x900] sm:$0xff]
        %v826 = vld [vmem:[%s396 + $0x908] sm:$0xff]
        %v827 = vld [vmem:[%s396 + $0x910] sm:$0xff]
        %v828 = vld [vmem:[%s396 + $0x918] sm:$0xff]
        %v829 = vld [vmem:[%s396 + $0x920] sm:$0xff]
        %v830 = vld [vmem:[%s396 + $0x928] sm:$0xff]
        %v831 = vld [vmem:[%s396 + $0x930] sm:$0xff]
        %v832 = vld [vmem:[%s396 + $0x938] sm:$0xff]
        %v833 = vld [vmem:[%s396 + $0x940] sm:$0xff]
        %v834 = vld [vmem:[%s396 + $0x948] sm:$0xff]
        %v835 = vld [vmem:[%s396 + $0x950] sm:$0xff]
        %v836 = vld [vmem:[%s396 + $0x958] sm:$0xff]
        %v837 = vld [vmem:[%s396 + $0x960] sm:$0xff]
        %v838 = vld [vmem:[%s396 + $0x968] sm:$0xff]
        %v839 = vld [vmem:[%s396 + $0x970] sm:$0xff]
        %v840 = vld [vmem:[%s396 + $0x978] sm:$0xff]
        %v841 = vld [vmem:[%s396 + $0x980] sm:$0xff]
        %v842 = vld [vmem:[%s396 + $0x988] sm:$0xff]
        %v843 = vld [vmem:[%s396 + $0x990] sm:$0xff]
        %v844 = vld [vmem:[%s396 + $0x998] sm:$0xff]
        %v845 = vld [vmem:[%s396 + $0x9a0] sm:$0xff]
        %v846 = vld [vmem:[%s396 + $0x9a8] sm:$0xff]
        %v847 = vld [vmem:[%s396 + $0x9b0] sm:$0xff]
        %v848 = vld [vmem:[%s396 + $0x9b8] sm:$0xff]
        %v849 = vld [vmem:[%s396 + $0x9c0] sm:$0xff]
        %v850 = vld [vmem:[%s396 + $0x9c8] sm:$0xff]
        %v851 = vld [vmem:[%s396 + $0x9d0] sm:$0xff]
        %v852 = vld [vmem:[%s396 + $0x9d8] sm:$0xff]
        %v853 = vld [vmem:[%s396 + $0x9e0] sm:$0xff]
        %v854 = vld [vmem:[%s396 + $0x9e8] sm:$0xff]
        %v855 = vld [vmem:[%s396 + $0x9f0] sm:$0xff]
        %v856 = vld [vmem:[%s396 + $0x9f8] sm:$0xff]
        %v857 = vld [vmem:[%s396 + $0xa00] sm:$0xff]
        %v858 = vld [vmem:[%s396 + $0xa08] sm:$0xff]
        %v859 = vld [vmem:[%s396 + $0xa10] sm:$0xff]
        %v860 = vld [vmem:[%s396 + $0xa18] sm:$0xff]
        %v861 = vld [vmem:[%s396 + $0xa20] sm:$0xff]
        %v862 = vld [vmem:[%s396 + $0xa28] sm:$0xff]
        %v863 = vld [vmem:[%s396 + $0xa30] sm:$0xff]
        %v864 = vld [vmem:[%s396 + $0xa38] sm:$0xff]
        %v865 = vld [vmem:[%s396 + $0xa40] sm:$0xff]
        %v866 = vld [vmem:[%s396 + $0xa48] sm:$0xff]
        %v867 = vld [vmem:[%s396 + $0xa50] sm:$0xff]
        %v868 = vld [vmem:[%s396 + $0xa58] sm:$0xff]
        %v869 = vld [vmem:[%s396 + $0xa60] sm:$0xff]
        %v870 = vld [vmem:[%s396 + $0xa68] sm:$0xff]
        %v871 = vld [vmem:[%s396 + $0xa70] sm:$0xff]
        %v872 = vld [vmem:[%s396 + $0xa78] sm:$0xff]
        %v873 = vld [vmem:[%s396 + $0xa80] sm:$0xff]
        %v874 = vld [vmem:[%s396 + $0xa88] sm:$0xff]
        %v875 = vld [vmem:[%s396 + $0xa90] sm:$0xff]
        %v876 = vld [vmem:[%s396 + $0xa98] sm:$0xff]
        %v877 = vld [vmem:[%s396 + $0xaa0] sm:$0xff]
        %v878 = vld [vmem:[%s396 + $0xaa8] sm:$0xff]
        %v879 = vld [vmem:[%s396 + $0xab0] sm:$0xff]
        %v880 = vld [vmem:[%s396 + $0xab8] sm:$0xff]
        %v881 = vld [vmem:[%s396 + $0xac0] sm:$0xff]
        %v882 = vld [vmem:[%s396 + $0xac8] sm:$0xff]
        %v883 = vld [vmem:[%s396 + $0xad0] sm:$0xff]
        %v884 = vld [vmem:[%s396 + $0xad8] sm:$0xff]
        %v885 = vld [vmem:[%s396 + $0xae0] sm:$0xff]
        %v886 = vld [vmem:[%s396 + $0xae8] sm:$0xff]
        %v887 = vld [vmem:[%s396 + $0xaf0] sm:$0xff]
        %v888 = vld [vmem:[%s396 + $0xaf8] sm:$0xff]
        %v889 = vld [vmem:[%s396 + $0xb00] sm:$0xff]
        %v890 = vld [vmem:[%s396 + $0xb08] sm:$0xff]
        %v891 = vld [vmem:[%s396 + $0xb10] sm:$0xff]
        %v892 = vld [vmem:[%s396 + $0xb18] sm:$0xff]
        %v893 = vld [vmem:[%s396 + $0xb20] sm:$0xff]
        %v894 = vld [vmem:[%s396 + $0xb28] sm:$0xff]
        %v895 = vld [vmem:[%s396 + $0xb30] sm:$0xff]
        %v896 = vld [vmem:[%s396 + $0xb38] sm:$0xff]
        %v897 = vld [vmem:[%s396 + $0xb40] sm:$0xff]
        %v898 = vld [vmem:[%s396 + $0xb48] sm:$0xff]
        %v899 = vld [vmem:[%s396 + $0xb50] sm:$0xff]
        %v900 = vld [vmem:[%s396 + $0xb58] sm:$0xff]
        %v901 = vld [vmem:[%s396 + $0xb60] sm:$0xff]
        %v902 = vld [vmem:[%s396 + $0xb68] sm:$0xff]
        %v903 = vld [vmem:[%s396 + $0xb70] sm:$0xff]
        %v904 = vld [vmem:[%s396 + $0xb78] sm:$0xff]
        %v905 = vld [vmem:[%s396 + $0xb80] sm:$0xff]
        %v906 = vld [vmem:[%s396 + $0xb88] sm:$0xff]
        %v907 = vld [vmem:[%s396 + $0xb90] sm:$0xff]
        %v908 = vld [vmem:[%s396 + $0xb98] sm:$0xff]
        %v909 = vld [vmem:[%s396 + $0xba0] sm:$0xff]
        %v910 = vld [vmem:[%s396 + $0xba8] sm:$0xff]
        %v911 = vld [vmem:[%s396 + $0xbb0] sm:$0xff]
        %v912 = vld [vmem:[%s396 + $0xbb8] sm:$0xff]
        %v913 = vld [vmem:[%s396 + $0xbc0] sm:$0xff]
        %v914 = vld [vmem:[%s396 + $0xbc8] sm:$0xff]
        %v915 = vld [vmem:[%s396 + $0xbd0] sm:$0xff]
        %v916 = vld [vmem:[%s396 + $0xbd8] sm:$0xff]
        %v917 = vld [vmem:[%s396 + $0xbe0] sm:$0xff]
        %v918 = vld [vmem:[%s396 + $0xbe8] sm:$0xff]
        %v919 = vld [vmem:[%s396 + $0xbf0] sm:$0xff]
        %v920 = vld [vmem:[%s396 + $0xbf8] sm:$0xff]
        %v921 = vld [vmem:[%s396 + $0xc00] sm:$0xff]
        %v922 = vld [vmem:[%s396 + $0xc08] sm:$0xff]
        %v923 = vld [vmem:[%s396 + $0xc10] sm:$0xff]
        %v924 = vld [vmem:[%s396 + $0xc18] sm:$0xff]
        %v925 = vld [vmem:[%s396 + $0xc20] sm:$0xff]
        %v926 = vld [vmem:[%s396 + $0xc28] sm:$0xff]
        %v927 = vld [vmem:[%s396 + $0xc30] sm:$0xff]
        %v928 = vld [vmem:[%s396 + $0xc38] sm:$0xff]
        %v929 = vld [vmem:[%s396 + $0xc40] sm:$0xff]
        %v930 = vld [vmem:[%s396 + $0xc48] sm:$0xff]
        %v931 = vld [vmem:[%s396 + $0xc50] sm:$0xff]
        %v932 = vld [vmem:[%s396 + $0xc58] sm:$0xff]
        %v933 = vld [vmem:[%s396 + $0xc60] sm:$0xff]
        %v934 = vld [vmem:[%s396 + $0xc68] sm:$0xff]
        %v935 = vld [vmem:[%s396 + $0xc70] sm:$0xff]
        %v936 = vld [vmem:[%s396 + $0xc78] sm:$0xff]
        %v937 = vld [vmem:[%s396 + $0xc80] sm:$0xff]
        %v938 = vld [vmem:[%s396 + $0xc88] sm:$0xff]
        %v939 = vld [vmem:[%s396 + $0xc90] sm:$0xff]
        %v940 = vld [vmem:[%s396 + $0xc98] sm:$0xff]
        %v941 = vld [vmem:[%s396 + $0xca0] sm:$0xff]
        %v942 = vld [vmem:[%s396 + $0xca8] sm:$0xff]
        %v943 = vld [vmem:[%s396 + $0xcb0] sm:$0xff]
        %v944 = vld [vmem:[%s396 + $0xcb8] sm:$0xff]
        %v945 = vld [vmem:[%s396 + $0xcc0] sm:$0xff]
        %v946 = vld [vmem:[%s396 + $0xcc8] sm:$0xff]
        %v947 = vld [vmem:[%s396 + $0xcd0] sm:$0xff]
        %v948 = vld [vmem:[%s396 + $0xcd8] sm:$0xff]
        %v949 = vld [vmem:[%s396 + $0xce0] sm:$0xff]
        %v950 = vld [vmem:[%s396 + $0xce8] sm:$0xff]
        %v951 = vld [vmem:[%s396 + $0xcf0] sm:$0xff]
        %v952 = vld [vmem:[%s396 + $0xcf8] sm:$0xff]
        %v953 = vld [vmem:[%s396 + $0xd00] sm:$0xff]
        %v954 = vld [vmem:[%s396 + $0xd08] sm:$0xff]
        %v955 = vld [vmem:[%s396 + $0xd10] sm:$0xff]
        %v956 = vld [vmem:[%s396 + $0xd18] sm:$0xff]
        %v957 = vld [vmem:[%s396 + $0xd20] sm:$0xff]
        %v958 = vld [vmem:[%s396 + $0xd28] sm:$0xff]
        %v959 = vld [vmem:[%s396 + $0xd30] sm:$0xff]
        %v960 = vld [vmem:[%s396 + $0xd38] sm:$0xff]
        %v961 = vld [vmem:[%s396 + $0xd40] sm:$0xff]
        %v962 = vld [vmem:[%s396 + $0xd48] sm:$0xff]
        %v963 = vld [vmem:[%s396 + $0xd50] sm:$0xff]
        %v964 = vld [vmem:[%s396 + $0xd58] sm:$0xff]
        %v965 = vld [vmem:[%s396 + $0xd60] sm:$0xff]
        %v966 = vld [vmem:[%s396 + $0xd68] sm:$0xff]
        %v967 = vld [vmem:[%s396 + $0xd70] sm:$0xff]
        %v968 = vld [vmem:[%s396 + $0xd78] sm:$0xff]
        %v969 = vld [vmem:[%s396 + $0xd80] sm:$0xff]
        %v970 = vld [vmem:[%s396 + $0xd88] sm:$0xff]
        %v971 = vld [vmem:[%s396 + $0xd90] sm:$0xff]
        %v972 = vld [vmem:[%s396 + $0xd98] sm:$0xff]
        %v973 = vld [vmem:[%s396 + $0xda0] sm:$0xff]
        %v974 = vld [vmem:[%s396 + $0xda8] sm:$0xff]
        %v975 = vld [vmem:[%s396 + $0xdb0] sm:$0xff]
        %v976 = vld [vmem:[%s396 + $0xdb8] sm:$0xff]
        %v977 = vld [vmem:[%s396 + $0xdc0] sm:$0xff]
        %v978 = vld [vmem:[%s396 + $0xdc8] sm:$0xff]
        %v979 = vld [vmem:[%s396 + $0xdd0] sm:$0xff]
        %v980 = vld [vmem:[%s396 + $0xdd8] sm:$0xff]
        %v981 = vld [vmem:[%s396 + $0xde0] sm:$0xff]
        %v982 = vld [vmem:[%s396 + $0xde8] sm:$0xff]
        %v983 = vld [vmem:[%s396 + $0xdf0] sm:$0xff]
        %v984 = vld [vmem:[%s396 + $0xdf8] sm:$0xff]
        %v985 = vld [vmem:[%s396 + $0xe00] sm:$0xff]
        %v986 = vld [vmem:[%s396 + $0xe08] sm:$0xff]
        %v987 = vld [vmem:[%s396 + $0xe10] sm:$0xff]
        %v988 = vld [vmem:[%s396 + $0xe18] sm:$0xff]
        %v989 = vld [vmem:[%s396 + $0xe20] sm:$0xff]
        %v990 = vld [vmem:[%s396 + $0xe28] sm:$0xff]
        %v991 = vld [vmem:[%s396 + $0xe30] sm:$0xff]
        %v992 = vld [vmem:[%s396 + $0xe38] sm:$0xff]
        %v993 = vld [vmem:[%s396 + $0xe40] sm:$0xff]
        %v994 = vld [vmem:[%s396 + $0xe48] sm:$0xff]
        %v995 = vld [vmem:[%s396 + $0xe50] sm:$0xff]
        %v996 = vld [vmem:[%s396 + $0xe58] sm:$0xff]
        %v997 = vld [vmem:[%s396 + $0xe60] sm:$0xff]
        %v998 = vld [vmem:[%s396 + $0xe68] sm:$0xff]
        %v999 = vld [vmem:[%s396 + $0xe70] sm:$0xff]
        %v1000 = vld [vmem:[%s396 + $0xe78] sm:$0xff]
        %v1001 = vld [vmem:[%s396 + $0xe80] sm:$0xff]
        %v1002 = vld [vmem:[%s396 + $0xe88] sm:$0xff]
        %v1003 = vld [vmem:[%s396 + $0xe90] sm:$0xff]
        %v1004 = vld [vmem:[%s396 + $0xe98] sm:$0xff]
        %v1005 = vld [vmem:[%s396 + $0xea0] sm:$0xff]
        %v1006 = vld [vmem:[%s396 + $0xea8] sm:$0xff]
        %v1007 = vld [vmem:[%s396 + $0xeb0] sm:$0xff]
        %v1008 = vld [vmem:[%s396 + $0xeb8] sm:$0xff]
        %v1009 = vld [vmem:[%s396 + $0xec0] sm:$0xff]
        %v1010 = vld [vmem:[%s396 + $0xec8] sm:$0xff]
        %v1011 = vld [vmem:[%s396 + $0xed0] sm:$0xff]
        %v1012 = vld [vmem:[%s396 + $0xed8] sm:$0xff]
        %v1013 = vld [vmem:[%s396 + $0xee0] sm:$0xff]
        %v1014 = vld [vmem:[%s396 + $0xee8] sm:$0xff]
        %v1015 = vld [vmem:[%s396 + $0xef0] sm:$0xff]
        %v1016 = vld [vmem:[%s396 + $0xef8] sm:$0xff]
        %v1017 = vld [vmem:[%s396 + $0xf00] sm:$0xff]
        %v1018 = vld [vmem:[%s396 + $0xf08] sm:$0xff]
        %v1019 = vld [vmem:[%s396 + $0xf10] sm:$0xff]
        %v1020 = vld [vmem:[%s396 + $0xf18] sm:$0xff]
        %v1021 = vld [vmem:[%s396 + $0xf20] sm:$0xff]
        %v1022 = vld [vmem:[%s396 + $0xf28] sm:$0xff]
        %v1023 = vld [vmem:[%s396 + $0xf30] sm:$0xff]
        %v1024 = vld [vmem:[%s396 + $0xf38] sm:$0xff]
        %v1025 = vld [vmem:[%s396 + $0xf40] sm:$0xff]
        %v1026 = vld [vmem:[%s396 + $0xf48] sm:$0xff]
        %v1027 = vld [vmem:[%s396 + $0xf50] sm:$0xff]
        %v1028 = vld [vmem:[%s396 + $0xf58] sm:$0xff]
        %v1029 = vld [vmem:[%s396 + $0xf60] sm:$0xff]
        %v1030 = vld [vmem:[%s396 + $0xf68] sm:$0xff]
        %v1031 = vld [vmem:[%s396 + $0xf70] sm:$0xff]
        %v1032 = vld [vmem:[%s396 + $0xf78] sm:$0xff]
        %v1033 = vld [vmem:[%s396 + $0xf80] sm:$0xff]
        %v1034 = vld [vmem:[%s396 + $0xf88] sm:$0xff]
        %v1035 = vld [vmem:[%s396 + $0xf90] sm:$0xff]
        %v1036 = vld [vmem:[%s396 + $0xf98] sm:$0xff]
        %v1037 = vld [vmem:[%s396 + $0xfa0] sm:$0xff]
        %v1038 = vld [vmem:[%s396 + $0xfa8] sm:$0xff]
        %v1039 = vld [vmem:[%s396 + $0xfb0] sm:$0xff]
        %v1040 = vld [vmem:[%s396 + $0xfb8] sm:$0xff]
        %v1041 = vld [vmem:[%s396 + $0xfc0] sm:$0xff]
        %v1042 = vld [vmem:[%s396 + $0xfc8] sm:$0xff]
        %v1043 = vld [vmem:[%s396 + $0xfd0] sm:$0xff]
        %v1044 = vld [vmem:[%s396 + $0xfd8] sm:$0xff]
        %v1045 = vld [vmem:[%s396 + $0xfe0] sm:$0xff]
        %v1046 = vld [vmem:[%s396 + $0xfe8] sm:$0xff]
        %v1047 = vld [vmem:[%s396 + $0xff0] sm:$0xff]
        %v1048 = vld [vmem:[%s396 + $0xff8] sm:$0xff]
        %v1049 = vld [vmem:[%s396 + $0x1000] sm:$0xff]
        %v1050 = vld [vmem:[%s396 + $0x1008] sm:$0xff]
        %v1051 = vld [vmem:[%s396 + $0x1010] sm:$0xff]
        %v1052 = vld [vmem:[%s396 + $0x1018] sm:$0xff]
        %v1053 = vld [vmem:[%s396 + $0x1020] sm:$0xff]
        %v1054 = vld [vmem:[%s396 + $0x1028] sm:$0xff]
        %v1055 = vld [vmem:[%s396 + $0x1030] sm:$0xff]
        %v1056 = vld [vmem:[%s396 + $0x1038] sm:$0xff]
        %v1057 = vld [vmem:[%s396 + $0x1040] sm:$0xff]
        %v1058 = vld [vmem:[%s396 + $0x1048] sm:$0xff]
        %v1059 = vld [vmem:[%s396 + $0x1050] sm:$0xff]
        %v1060 = vld [vmem:[%s396 + $0x1058] sm:$0xff]
        %v1061 = vld [vmem:[%s396 + $0x1060] sm:$0xff]
        %v1062 = vld [vmem:[%s396 + $0x1068] sm:$0xff]
        %v1063 = vld [vmem:[%s396 + $0x1070] sm:$0xff]
        %v1064 = vld [vmem:[%s396 + $0x1078] sm:$0xff]
        %v1065 = vld [vmem:[%s396 + $0x1080] sm:$0xff]
        %v1066 = vld [vmem:[%s396 + $0x1088] sm:$0xff]
        %v1067 = vld [vmem:[%s396 + $0x1090] sm:$0xff]
        %v1068 = vld [vmem:[%s396 + $0x1098] sm:$0xff]
        %v1069 = vld [vmem:[%s396 + $0x10a0] sm:$0xff]
        %v1070 = vld [vmem:[%s396 + $0x10a8] sm:$0xff]
        %v1071 = vld [vmem:[%s396 + $0x10b0] sm:$0xff]
        %v1072 = vld [vmem:[%s396 + $0x10b8] sm:$0xff]
        %v1073 = vld [vmem:[%s396 + $0x10c0] sm:$0xff]
        %v1074 = vld [vmem:[%s396 + $0x10c8] sm:$0xff]
        %v1075 = vld [vmem:[%s396 + $0x10d0] sm:$0xff]
        %v1076 = vld [vmem:[%s396 + $0x10d8] sm:$0xff]
        %v1077 = vld [vmem:[%s396 + $0x10e0] sm:$0xff]
        %v1078 = vld [vmem:[%s396 + $0x10e8] sm:$0xff]
        %v1079 = vld [vmem:[%s396 + $0x10f0] sm:$0xff]
        %v1080 = vld [vmem:[%s396 + $0x10f8] sm:$0xff]
        %v1081 = vld [vmem:[%s396 + $0x1100] sm:$0xff]
        %v1082 = vld [vmem:[%s396 + $0x1108] sm:$0xff]
        %v1083 = vld [vmem:[%s396 + $0x1110] sm:$0xff]
        %v1084 = vld [vmem:[%s396 + $0x1118] sm:$0xff]
        %v1085 = vld [vmem:[%s396 + $0x1120] sm:$0xff]
        %v1086 = vld [vmem:[%s396 + $0x1128] sm:$0xff]
        %v1087 = vld [vmem:[%s396 + $0x1130] sm:$0xff]
        %v1088 = vld [vmem:[%s396 + $0x1138] sm:$0xff]
        %v1089 = vld [vmem:[%s396 + $0x1140] sm:$0xff]
        %v1090 = vld [vmem:[%s396 + $0x1148] sm:$0xff]
        %v1091 = vld [vmem:[%s396 + $0x1150] sm:$0xff]
        %v1092 = vld [vmem:[%s396 + $0x1158] sm:$0xff]
        %v1093 = vld [vmem:[%s396 + $0x1160] sm:$0xff]
        %v1094 = vld [vmem:[%s396 + $0x1168] sm:$0xff]
        %v1095 = vld [vmem:[%s396 + $0x1170] sm:$0xff]
        %v1096 = vld [vmem:[%s396 + $0x1178] sm:$0xff]
        %v1097 = vld [vmem:[%s396 + $0x1180] sm:$0xff]
        %v1098 = vld [vmem:[%s396 + $0x1188] sm:$0xff]
        %v1099 = vld [vmem:[%s396 + $0x1190] sm:$0xff]
        %v1100 = vld [vmem:[%s396 + $0x1198] sm:$0xff]
        %v1101 = vld [vmem:[%s396 + $0x11a0] sm:$0xff]
        %v1102 = vld [vmem:[%s396 + $0x11a8] sm:$0xff]
        %v1103 = vld [vmem:[%s396 + $0x11b0] sm:$0xff]
        %v1104 = vld [vmem:[%s396 + $0x11b8] sm:$0xff]
        %v1105 = vld [vmem:[%s396 + $0x11c0] sm:$0xff]
        %v1106 = vld [vmem:[%s396 + $0x11c8] sm:$0xff]
        %v1107 = vld [vmem:[%s396 + $0x11d0] sm:$0xff]
        %v1108 = vld [vmem:[%s396 + $0x11d8] sm:$0xff]
        %v1109 = vld [vmem:[%s396 + $0x11e0] sm:$0xff]
        %v1110 = vld [vmem:[%s396 + $0x11e8] sm:$0xff]
        %v1111 = vld [vmem:[%s396 + $0x11f0] sm:$0xff]
        %v1112 = vld [vmem:[%s396 + $0x11f8] sm:$0xff]
        %v1113 = vld [vmem:[%s396 + $0x1200] sm:$0xff]
        %v1114 = vld [vmem:[%s396 + $0x1208] sm:$0xff]
        %v1115 = vld [vmem:[%s396 + $0x1210] sm:$0xff]
        %v1116 = vld [vmem:[%s396 + $0x1218] sm:$0xff]
        %v1117 = vld [vmem:[%s396 + $0x1220] sm:$0xff]
        %v1118 = vld [vmem:[%s396 + $0x1228] sm:$0xff]
        %v1119 = vld [vmem:[%s396 + $0x1230] sm:$0xff]
        %v1120 = vld [vmem:[%s396 + $0x1238] sm:$0xff]
        %v1121 = vld [vmem:[%s396 + $0x1240] sm:$0xff]
        %v1122 = vld [vmem:[%s396 + $0x1248] sm:$0xff]
        %v1123 = vld [vmem:[%s396 + $0x1250] sm:$0xff]
        %v1124 = vld [vmem:[%s396 + $0x1258] sm:$0xff]
        %v1125 = vld [vmem:[%s396 + $0x1260] sm:$0xff]
        %v1126 = vld [vmem:[%s396 + $0x1268] sm:$0xff]
        %v1127 = vld [vmem:[%s396 + $0x1270] sm:$0xff]
        %v1128 = vld [vmem:[%s396 + $0x1278] sm:$0xff]
        %v1129 = vld [vmem:[%s396 + $0x1280] sm:$0xff]
        %v1130 = vld [vmem:[%s396 + $0x1288] sm:$0xff]
        %v1131 = vld [vmem:[%s396 + $0x1290] sm:$0xff]
        %v1132 = vld [vmem:[%s396 + $0x1298] sm:$0xff]
        %v1133 = vld [vmem:[%s396 + $0x12a0] sm:$0xff]
        %v1134 = vld [vmem:[%s396 + $0x12a8] sm:$0xff]
        %v1135 = vld [vmem:[%s396 + $0x12b0] sm:$0xff]
        %v1136 = vld [vmem:[%s396 + $0x12b8] sm:$0xff]
        %v1137 = vld [vmem:[%s396 + $0x12c0] sm:$0xff]
        %v1138 = vld [vmem:[%s396 + $0x12c8] sm:$0xff]
        %v1139 = vld [vmem:[%s396 + $0x12d0] sm:$0xff]
        %v1140 = vld [vmem:[%s396 + $0x12d8] sm:$0xff]
        %v1141 = vld [vmem:[%s396 + $0x12e0] sm:$0xff]
        %v1142 = vld [vmem:[%s396 + $0x12e8] sm:$0xff]
        %v1143 = vld [vmem:[%s396 + $0x12f0] sm:$0xff]
        %v1144 = vld [vmem:[%s396 + $0x12f8] sm:$0xff]
        %v1145 = vld [vmem:[%s396 + $0x1300] sm:$0xff]
        %v1146 = vld [vmem:[%s396 + $0x1308] sm:$0xff]
        %v1147 = vld [vmem:[%s396 + $0x1310] sm:$0xff]
        %v1148 = vld [vmem:[%s396 + $0x1318] sm:$0xff]
        %v1149 = vld [vmem:[%s396 + $0x1320] sm:$0xff]
        %v1150 = vld [vmem:[%s396 + $0x1328] sm:$0xff]
        %v1151 = vld [vmem:[%s396 + $0x1330] sm:$0xff]
        %v1152 = vld [vmem:[%s396 + $0x1338] sm:$0xff]
        %v1153 = vld [vmem:[%s396 + $0x1340] sm:$0xff]
        %v1154 = vld [vmem:[%s396 + $0x1348] sm:$0xff]
        %v1155 = vld [vmem:[%s396 + $0x1350] sm:$0xff]
        %v1156 = vld [vmem:[%s396 + $0x1358] sm:$0xff]
        %v1157 = vld [vmem:[%s396 + $0x1360] sm:$0xff]
        %v1158 = vld [vmem:[%s396 + $0x1368] sm:$0xff]
        %v1159 = vld [vmem:[%s396 + $0x1370] sm:$0xff]
        %v1160 = vld [vmem:[%s396 + $0x1378] sm:$0xff]
        %v1161 = vld [vmem:[%s396 + $0x1380] sm:$0xff]
        %v1162 = vld [vmem:[%s396 + $0x1388] sm:$0xff]
        %v1163 = vld [vmem:[%s396 + $0x1390] sm:$0xff]
        %v1164 = vld [vmem:[%s396 + $0x1398] sm:$0xff]
        %v1165 = vld [vmem:[%s396 + $0x13a0] sm:$0xff]
        %v1166 = vld [vmem:[%s396 + $0x13a8] sm:$0xff]
        %v1167 = vld [vmem:[%s396 + $0x13b0] sm:$0xff]
        %v1168 = vld [vmem:[%s396 + $0x13b8] sm:$0xff]
        %v1169 = vld [vmem:[%s396 + $0x13c0] sm:$0xff]
        %v1170 = vld [vmem:[%s396 + $0x13c8] sm:$0xff]
        %v1171 = vld [vmem:[%s396 + $0x13d0] sm:$0xff]
        %v1172 = vld [vmem:[%s396 + $0x13d8] sm:$0xff]
        %v1173 = vld [vmem:[%s396 + $0x13e0] sm:$0xff]
        %v1174 = vld [vmem:[%s396 + $0x13e8] sm:$0xff]
        %v1175 = vld [vmem:[%s396 + $0x13f0] sm:$0xff]
        %v1176 = vld [vmem:[%s396 + $0x13f8] sm:$0xff]
        %v1177 = vld [vmem:[%s396 + $0x1400] sm:$0xff]
        %v1178 = vld [vmem:[%s396 + $0x1408] sm:$0xff]
        %v1179 = vld [vmem:[%s396 + $0x1410] sm:$0xff]
        %v1180 = vld [vmem:[%s396 + $0x1418] sm:$0xff]
        %v1181 = vld [vmem:[%s396 + $0x1420] sm:$0xff]
        %v1182 = vld [vmem:[%s396 + $0x1428] sm:$0xff]
        %v1183 = vld [vmem:[%s396 + $0x1430] sm:$0xff]
        %v1184 = vld [vmem:[%s396 + $0x1438] sm:$0xff]
        %v1185 = vld [vmem:[%s396 + $0x1440] sm:$0xff]
        %v1186 = vld [vmem:[%s396 + $0x1448] sm:$0xff]
        %v1187 = vld [vmem:[%s396 + $0x1450] sm:$0xff]
        %v1188 = vld [vmem:[%s396 + $0x1458] sm:$0xff]
        %v1189 = vld [vmem:[%s396 + $0x1460] sm:$0xff]
        %v1190 = vld [vmem:[%s396 + $0x1468] sm:$0xff]
        %v1191 = vld [vmem:[%s396 + $0x1470] sm:$0xff]
        %v1192 = vld [vmem:[%s396 + $0x1478] sm:$0xff]
        %v1193 = vld [vmem:[%s396 + $0x1480] sm:$0xff]
        %v1194 = vld [vmem:[%s396 + $0x1488] sm:$0xff]
        %v1195 = vld [vmem:[%s396 + $0x1490] sm:$0xff]
        %v1196 = vld [vmem:[%s396 + $0x1498] sm:$0xff]
        %v1197 = vld [vmem:[%s396 + $0x14a0] sm:$0xff]
        %v1198 = vld [vmem:[%s396 + $0x14a8] sm:$0xff]
        %v1199 = vld [vmem:[%s396 + $0x14b0] sm:$0xff]
        %v1200 = vld [vmem:[%s396 + $0x14b8] sm:$0xff]
        %v1201 = vld [vmem:[%s396 + $0x14c0] sm:$0xff]
        %v1202 = vld [vmem:[%s396 + $0x14c8] sm:$0xff]
        %v1203 = vld [vmem:[%s396 + $0x14d0] sm:$0xff]
        %v1204 = vld [vmem:[%s396 + $0x14d8] sm:$0xff]
        %v1205 = vld [vmem:[%s396 + $0x14e0] sm:$0xff]
        %v1206 = vld [vmem:[%s396 + $0x14e8] sm:$0xff]
        %v1207 = vld [vmem:[%s396 + $0x14f0] sm:$0xff]
        %v1208 = vld [vmem:[%s396 + $0x14f8] sm:$0xff]
        %v1209 = vld [vmem:[%s396 + $0x1500] sm:$0xff]
        %v1210 = vld [vmem:[%s396 + $0x1508] sm:$0xff]
        %v1211 = vld [vmem:[%s396 + $0x1510] sm:$0xff]
        %v1212 = vld [vmem:[%s396 + $0x1518] sm:$0xff]
        %v1213 = vld [vmem:[%s396 + $0x1520] sm:$0xff]
        %v1214 = vld [vmem:[%s396 + $0x1528] sm:$0xff]
        %v1215 = vld [vmem:[%s396 + $0x1530] sm:$0xff]
        %v1216 = vld [vmem:[%s396 + $0x1538] sm:$0xff]
        %v1217 = vld [vmem:[%s396 + $0x1540] sm:$0xff]
        %v1218 = vld [vmem:[%s396 + $0x1548] sm:$0xff]
        %v1219 = vld [vmem:[%s396 + $0x1550] sm:$0xff]
        %v1220 = vld [vmem:[%s396 + $0x1558] sm:$0xff]
        %v1221 = vld [vmem:[%s396 + $0x1560] sm:$0xff]
        %v1222 = vld [vmem:[%s396 + $0x1568] sm:$0xff]
        %v1223 = vld [vmem:[%s396 + $0x1570] sm:$0xff]
        %v1224 = vld [vmem:[%s396 + $0x1578] sm:$0xff]
        %v1225 = vld [vmem:[%s396 + $0x1580] sm:$0xff]
        %v1226 = vld [vmem:[%s396 + $0x1588] sm:$0xff]
        %v1227 = vld [vmem:[%s396 + $0x1590] sm:$0xff]
        %v1228 = vld [vmem:[%s396 + $0x1598] sm:$0xff]
        %v1229 = vld [vmem:[%s396 + $0x15a0] sm:$0xff]
        %v1230 = vld [vmem:[%s396 + $0x15a8] sm:$0xff]
        %v1231 = vld [vmem:[%s396 + $0x15b0] sm:$0xff]
        %v1232 = vld [vmem:[%s396 + $0x15b8] sm:$0xff]
        %v1233 = vld [vmem:[%s396 + $0x15c0] sm:$0xff]
        %v1234 = vld [vmem:[%s396 + $0x15c8] sm:$0xff]
        %v1235 = vld [vmem:[%s396 + $0x15d0] sm:$0xff]
        %v1236 = vld [vmem:[%s396 + $0x15d8] sm:$0xff]
        %v1237 = vld [vmem:[%s396 + $0x15e0] sm:$0xff]
        %v1238 = vld [vmem:[%s396 + $0x15e8] sm:$0xff]
        %v1239 = vld [vmem:[%s396 + $0x15f0] sm:$0xff]
        %v1240 = vld [vmem:[%s396 + $0x15f8] sm:$0xff]
        %v1241 = vld [vmem:[%s396 + $0x1600] sm:$0xff]
        %v1242 = vld [vmem:[%s396 + $0x1608] sm:$0xff]
        %v1243 = vld [vmem:[%s396 + $0x1610] sm:$0xff]
        %v1244 = vld [vmem:[%s396 + $0x1618] sm:$0xff]
        %v1245 = vld [vmem:[%s396 + $0x1620] sm:$0xff]
        %v1246 = vld [vmem:[%s396 + $0x1628] sm:$0xff]
        %v1247 = vld [vmem:[%s396 + $0x1630] sm:$0xff]
        %v1248 = vld [vmem:[%s396 + $0x1638] sm:$0xff]
        %v1249 = vld [vmem:[%s396 + $0x1640] sm:$0xff]
        %v1250 = vld [vmem:[%s396 + $0x1648] sm:$0xff]
        %v1251 = vld [vmem:[%s396 + $0x1650] sm:$0xff]
        %v1252 = vld [vmem:[%s396 + $0x1658] sm:$0xff]
        %v1253 = vld [vmem:[%s396 + $0x1660] sm:$0xff]
        %v1254 = vld [vmem:[%s396 + $0x1668] sm:$0xff]
        %v1255 = vld [vmem:[%s396 + $0x1670] sm:$0xff]
        %v1256 = vld [vmem:[%s396 + $0x1678] sm:$0xff]
        %v1257 = vld [vmem:[%s396 + $0x1680] sm:$0xff]
        %v1258 = vld [vmem:[%s396 + $0x1688] sm:$0xff]
        %v1259 = vld [vmem:[%s396 + $0x1690] sm:$0xff]
        %v1260 = vld [vmem:[%s396 + $0x1698] sm:$0xff]
        %v1261 = vld [vmem:[%s396 + $0x16a0] sm:$0xff]
        %v1262 = vld [vmem:[%s396 + $0x16a8] sm:$0xff]
        %v1263 = vld [vmem:[%s396 + $0x16b0] sm:$0xff]
        %v1264 = vld [vmem:[%s396 + $0x16b8] sm:$0xff]
        %v1265 = vld [vmem:[%s396 + $0x16c0] sm:$0xff]
        %v1266 = vld [vmem:[%s396 + $0x16c8] sm:$0xff]
        %v1267 = vld [vmem:[%s396 + $0x16d0] sm:$0xff]
        %v1268 = vld [vmem:[%s396 + $0x16d8] sm:$0xff]
        %v1269 = vld [vmem:[%s396 + $0x16e0] sm:$0xff]
        %v1270 = vld [vmem:[%s396 + $0x16e8] sm:$0xff]
        %v1271 = vld [vmem:[%s396 + $0x16f0] sm:$0xff]
        %v1272 = vld [vmem:[%s396 + $0x16f8] sm:$0xff]
        %v1273 = vld [vmem:[%s396 + $0x1700] sm:$0xff]
        %v1274 = vld [vmem:[%s396 + $0x1708] sm:$0xff]
        %v1275 = vld [vmem:[%s396 + $0x1710] sm:$0xff]
        %v1276 = vld [vmem:[%s396 + $0x1718] sm:$0xff]
        %v1277 = vld [vmem:[%s396 + $0x1720] sm:$0xff]
        %v1278 = vld [vmem:[%s396 + $0x1728] sm:$0xff]
        %v1279 = vld [vmem:[%s396 + $0x1730] sm:$0xff]
        %v1280 = vld [vmem:[%s396 + $0x1738] sm:$0xff]
        %v1281 = vld [vmem:[%s396 + $0x1740] sm:$0xff]
        %v1282 = vld [vmem:[%s396 + $0x1748] sm:$0xff]
        %v1283 = vld [vmem:[%s396 + $0x1750] sm:$0xff]
        %v1284 = vld [vmem:[%s396 + $0x1758] sm:$0xff]
        %v1285 = vld [vmem:[%s396 + $0x1760] sm:$0xff]
        %v1286 = vld [vmem:[%s396 + $0x1768] sm:$0xff]
        %v1287 = vld [vmem:[%s396 + $0x1770] sm:$0xff]
        %v1288 = vld [vmem:[%s396 + $0x1778] sm:$0xff]
        %v1289 = vld [vmem:[%s396 + $0x1780] sm:$0xff]
        %v1290 = vld [vmem:[%s396 + $0x1788] sm:$0xff]
        %v1291 = vld [vmem:[%s396 + $0x1790] sm:$0xff]
        %v1292 = vld [vmem:[%s396 + $0x1798] sm:$0xff]
        %v1293 = vld [vmem:[%s396 + $0x17a0] sm:$0xff]
        %v1294 = vld [vmem:[%s396 + $0x17a8] sm:$0xff]
        %v1295 = vld [vmem:[%s396 + $0x17b0] sm:$0xff]
        %v1296 = vld [vmem:[%s396 + $0x17b8] sm:$0xff]
        %v1297 = vld [vmem:[%s396 + $0x17c0] sm:$0xff]
        %v1298 = vld [vmem:[%s396 + $0x17c8] sm:$0xff]
        %v1299 = vld [vmem:[%s396 + $0x17d0] sm:$0xff]
        %v1300 = vld [vmem:[%s396 + $0x17d8] sm:$0xff]
        %v1301 = vld [vmem:[%s396 + $0x17e0] sm:$0xff]
        %v1302 = vld [vmem:[%s396 + $0x17e8] sm:$0xff]
        %v1303 = vld [vmem:[%s396 + $0x17f0] sm:$0xff]
        %v1304 = vld [vmem:[%s396 + $0x17f8] sm:$0xff]
        %v1305 = vld [vmem:[%s396 + $0x1800] sm:$0xff]
        %v1306 = vld [vmem:[%s396 + $0x1808] sm:$0xff]
        %v1307 = vld [vmem:[%s396 + $0x1810] sm:$0xff]
        %v1308 = vld [vmem:[%s396 + $0x1818] sm:$0xff]
        %v1309 = vld [vmem:[%s396 + $0x1820] sm:$0xff]
        %v1310 = vld [vmem:[%s396 + $0x1828] sm:$0xff]
        %v1311 = vld [vmem:[%s396 + $0x1830] sm:$0xff]
        %v1312 = vld [vmem:[%s396 + $0x1838] sm:$0xff]
        %v1313 = vld [vmem:[%s396 + $0x1840] sm:$0xff]
        %v1314 = vld [vmem:[%s396 + $0x1848] sm:$0xff]
        %v1315 = vld [vmem:[%s396 + $0x1850] sm:$0xff]
        %v1316 = vld [vmem:[%s396 + $0x1858] sm:$0xff]
        %v1317 = vld [vmem:[%s396 + $0x1860] sm:$0xff]
        %v1318 = vld [vmem:[%s396 + $0x1868] sm:$0xff]
        %v1319 = vld [vmem:[%s396 + $0x1870] sm:$0xff]
        %v1320 = vld [vmem:[%s396 + $0x1878] sm:$0xff]
        %v1321 = vld [vmem:[%s396 + $0x1880] sm:$0xff]
        %v1322 = vld [vmem:[%s396 + $0x1888] sm:$0xff]
        %v1323 = vld [vmem:[%s396 + $0x1890] sm:$0xff]
        %v1324 = vld [vmem:[%s396 + $0x1898] sm:$0xff]
        %v1325 = vld [vmem:[%s396 + $0x18a0] sm:$0xff]
        %v1326 = vld [vmem:[%s396 + $0x18a8] sm:$0xff]
        %v1327 = vld [vmem:[%s396 + $0x18b0] sm:$0xff]
        %v1328 = vld [vmem:[%s396 + $0x18b8] sm:$0xff]
        %v1329 = vld [vmem:[%s396 + $0x18c0] sm:$0xff]
        %v1330 = vld [vmem:[%s396 + $0x18c8] sm:$0xff]
        %v1331 = vld [vmem:[%s396 + $0x18d0] sm:$0xff]
        %v1332 = vld [vmem:[%s396 + $0x18d8] sm:$0xff]
        %v1333 = vld [vmem:[%s396 + $0x18e0] sm:$0xff]
        %v1334 = vld [vmem:[%s396 + $0x18e8] sm:$0xff]
        %v1335 = vld [vmem:[%s396 + $0x18f0] sm:$0xff]
        %v1336 = vld [vmem:[%s396 + $0x18f8] sm:$0xff]
        %v1337 = vld [vmem:[%s396 + $0x1900] sm:$0xff]
        %v1338 = vld [vmem:[%s396 + $0x1908] sm:$0xff]
        %v1339 = vld [vmem:[%s396 + $0x1910] sm:$0xff]
        %v1340 = vld [vmem:[%s396 + $0x1918] sm:$0xff]
        %v1341 = vld [vmem:[%s396 + $0x1920] sm:$0xff]
        %v1342 = vld [vmem:[%s396 + $0x1928] sm:$0xff]
        %v1343 = vld [vmem:[%s396 + $0x1930] sm:$0xff]
        %v1344 = vld [vmem:[%s396 + $0x1938] sm:$0xff]
        %v1345 = vld [vmem:[%s396 + $0x1940] sm:$0xff]
        %v1346 = vld [vmem:[%s396 + $0x1948] sm:$0xff]
        %v1347 = vld [vmem:[%s396 + $0x1950] sm:$0xff]
        %v1348 = vld [vmem:[%s396 + $0x1958] sm:$0xff]
        %v1349 = vld [vmem:[%s396 + $0x1960] sm:$0xff]
        %v1350 = vld [vmem:[%s396 + $0x1968] sm:$0xff]
        %v1351 = vld [vmem:[%s396 + $0x1970] sm:$0xff]
        %v1352 = vld [vmem:[%s396 + $0x1978] sm:$0xff]
        %v1353 = vld [vmem:[%s396 + $0x1980] sm:$0xff]
        %v1354 = vld [vmem:[%s396 + $0x1988] sm:$0xff]
        %v1355 = vld [vmem:[%s396 + $0x1990] sm:$0xff]
        %v1356 = vld [vmem:[%s396 + $0x1998] sm:$0xff]
        %v1357 = vld [vmem:[%s396 + $0x19a0] sm:$0xff]
        %v1358 = vld [vmem:[%s396 + $0x19a8] sm:$0xff]
        %v1359 = vld [vmem:[%s396 + $0x19b0] sm:$0xff]
        %v1360 = vld [vmem:[%s396 + $0x19b8] sm:$0xff]
        %v1361 = vld [vmem:[%s396 + $0x19c0] sm:$0xff]
        %v1362 = vld [vmem:[%s396 + $0x19c8] sm:$0xff]
        %v1363 = vld [vmem:[%s396 + $0x19d0] sm:$0xff]
        %v1364 = vld [vmem:[%s396 + $0x19d8] sm:$0xff]
        %v1365 = vld [vmem:[%s396 + $0x19e0] sm:$0xff]
        %v1366 = vld [vmem:[%s396 + $0x19e8] sm:$0xff]
        %v1367 = vld [vmem:[%s396 + $0x19f0] sm:$0xff]
        %v1368 = vld [vmem:[%s396 + $0x19f8] sm:$0xff]
        %v1369 = vld [vmem:[%s396 + $0x1a00] sm:$0xff]
        %v1370 = vld [vmem:[%s396 + $0x1a08] sm:$0xff]
        %v1371 = vld [vmem:[%s396 + $0x1a10] sm:$0xff]
        %v1372 = vld [vmem:[%s396 + $0x1a18] sm:$0xff]
        %v1373 = vld [vmem:[%s396 + $0x1a20] sm:$0xff]
        %v1374 = vld [vmem:[%s396 + $0x1a28] sm:$0xff]
        %v1375 = vld [vmem:[%s396 + $0x1a30] sm:$0xff]
        %v1376 = vld [vmem:[%s396 + $0x1a38] sm:$0xff]
        %v1377 = vld [vmem:[%s396 + $0x1a40] sm:$0xff]
        %v1378 = vld [vmem:[%s396 + $0x1a48] sm:$0xff]
        %v1379 = vld [vmem:[%s396 + $0x1a50] sm:$0xff]
        %v1380 = vld [vmem:[%s396 + $0x1a58] sm:$0xff]
        %v1381 = vld [vmem:[%s396 + $0x1a60] sm:$0xff]
        %v1382 = vld [vmem:[%s396 + $0x1a68] sm:$0xff]
        %v1383 = vld [vmem:[%s396 + $0x1a70] sm:$0xff]
        %v1384 = vld [vmem:[%s396 + $0x1a78] sm:$0xff]
        %v1385 = vld [vmem:[%s396 + $0x1a80] sm:$0xff]
        %v1386 = vld [vmem:[%s396 + $0x1a88] sm:$0xff]
        %v1387 = vld [vmem:[%s396 + $0x1a90] sm:$0xff]
        %v1388 = vld [vmem:[%s396 + $0x1a98] sm:$0xff]
        %v1389 = vld [vmem:[%s396 + $0x1aa0] sm:$0xff]
        %v1390 = vld [vmem:[%s396 + $0x1aa8] sm:$0xff]
        %v1391 = vld [vmem:[%s396 + $0x1ab0] sm:$0xff]
        %v1392 = vld [vmem:[%s396 + $0x1ab8] sm:$0xff]
        %v1393 = vld [vmem:[%s396 + $0x1ac0] sm:$0xff]
        %v1394 = vld [vmem:[%s396 + $0x1ac8] sm:$0xff]
        %v1395 = vld [vmem:[%s396 + $0x1ad0] sm:$0xff]
        %v1396 = vld [vmem:[%s396 + $0x1ad8] sm:$0xff]
        %v1397 = vld [vmem:[%s396 + $0x1ae0] sm:$0xff]
        %v1398 = vld [vmem:[%s396 + $0x1ae8] sm:$0xff]
        %v1399 = vld [vmem:[%s396 + $0x1af0] sm:$0xff]
        %v1400 = vld [vmem:[%s396 + $0x1af8] sm:$0xff]
        %v1401 = vld [vmem:[%s396 + $0x1b00] sm:$0xff]
        %v1402 = vld [vmem:[%s396 + $0x1b08] sm:$0xff]
        %v1403 = vld [vmem:[%s396 + $0x1b10] sm:$0xff]
        %v1404 = vld [vmem:[%s396 + $0x1b18] sm:$0xff]
        %v1405 = vld [vmem:[%s396 + $0x1b20] sm:$0xff]
        %v1406 = vld [vmem:[%s396 + $0x1b28] sm:$0xff]
        %v1407 = vld [vmem:[%s396 + $0x1b30] sm:$0xff]
        %v1408 = vld [vmem:[%s396 + $0x1b38] sm:$0xff]
        %v1409 = vld [vmem:[%s396 + $0x1b40] sm:$0xff]
        %v1410 = vld [vmem:[%s396 + $0x1b48] sm:$0xff]
        %v1411 = vld [vmem:[%s396 + $0x1b50] sm:$0xff]
        %v1412 = vld [vmem:[%s396 + $0x1b58] sm:$0xff]
        %v1413 = vld [vmem:[%s396 + $0x1b60] sm:$0xff]
        %v1414 = vld [vmem:[%s396 + $0x1b68] sm:$0xff]
        %v1415 = vld [vmem:[%s396 + $0x1b70] sm:$0xff]
        %v1416 = vld [vmem:[%s396 + $0x1b78] sm:$0xff]
        %v1417 = vld [vmem:[%s396 + $0x1b80] sm:$0xff]
        %v1418 = vld [vmem:[%s396 + $0x1b88] sm:$0xff]
        %v1419 = vld [vmem:[%s396 + $0x1b90] sm:$0xff]
        %v1420 = vld [vmem:[%s396 + $0x1b98] sm:$0xff]
        %v1421 = vld [vmem:[%s396 + $0x1ba0] sm:$0xff]
        %v1422 = vld [vmem:[%s396 + $0x1ba8] sm:$0xff]
        %v1423 = vld [vmem:[%s396 + $0x1bb0] sm:$0xff]
        %v1424 = vld [vmem:[%s396 + $0x1bb8] sm:$0xff]
        %v1425 = vld [vmem:[%s396 + $0x1bc0] sm:$0xff]
        %v1426 = vld [vmem:[%s396 + $0x1bc8] sm:$0xff]
        %v1427 = vld [vmem:[%s396 + $0x1bd0] sm:$0xff]
        %v1428 = vld [vmem:[%s396 + $0x1bd8] sm:$0xff]
        %v1429 = vld [vmem:[%s396 + $0x1be0] sm:$0xff]
        %v1430 = vld [vmem:[%s396 + $0x1be8] sm:$0xff]
        %v1431 = vld [vmem:[%s396 + $0x1bf0] sm:$0xff]
        %v1432 = vld [vmem:[%s396 + $0x1bf8] sm:$0xff]
        %v1433 = vld [vmem:[%s396 + $0x1c00] sm:$0xff]
        %v1434 = vld [vmem:[%s396 + $0x1c08] sm:$0xff]
        %v1435 = vld [vmem:[%s396 + $0x1c10] sm:$0xff]
        %v1436 = vld [vmem:[%s396 + $0x1c18] sm:$0xff]
        %v1437 = vld [vmem:[%s396 + $0x1c20] sm:$0xff]
        %v1438 = vld [vmem:[%s396 + $0x1c28] sm:$0xff]
        %v1439 = vld [vmem:[%s396 + $0x1c30] sm:$0xff]
        %v1440 = vld [vmem:[%s396 + $0x1c38] sm:$0xff]
        %v1441 = vld [vmem:[%s396 + $0x1c40] sm:$0xff]
        %v1442 = vld [vmem:[%s396 + $0x1c48] sm:$0xff]
        %v1443 = vld [vmem:[%s396 + $0x1c50] sm:$0xff]
        %v1444 = vld [vmem:[%s396 + $0x1c58] sm:$0xff]
        %v1445 = vld [vmem:[%s396 + $0x1c60] sm:$0xff]
        %v1446 = vld [vmem:[%s396 + $0x1c68] sm:$0xff]
        %v1447 = vld [vmem:[%s396 + $0x1c70] sm:$0xff]
        %v1448 = vld [vmem:[%s396 + $0x1c78] sm:$0xff]
        %v1449 = vld [vmem:[%s396 + $0x1c80] sm:$0xff]
        %v1450 = vld [vmem:[%s396 + $0x1c88] sm:$0xff]
        %v1451 = vld [vmem:[%s396 + $0x1c90] sm:$0xff]
        %v1452 = vld [vmem:[%s396 + $0x1c98] sm:$0xff]
        %v1453 = vld [vmem:[%s396 + $0x1ca0] sm:$0xff]
        %v1454 = vld [vmem:[%s396 + $0x1ca8] sm:$0xff]
        %v1455 = vld [vmem:[%s396 + $0x1cb0] sm:$0xff]
        %v1456 = vld [vmem:[%s396 + $0x1cb8] sm:$0xff]
        %v1457 = vld [vmem:[%s396 + $0x1cc0] sm:$0xff]
        %v1458 = vld [vmem:[%s396 + $0x1cc8] sm:$0xff]
        %v1459 = vld [vmem:[%s396 + $0x1cd0] sm:$0xff]
        %v1460 = vld [vmem:[%s396 + $0x1cd8] sm:$0xff]
        %v1461 = vld [vmem:[%s396 + $0x1ce0] sm:$0xff]
        %v1462 = vld [vmem:[%s396 + $0x1ce8] sm:$0xff]
        %v1463 = vld [vmem:[%s396 + $0x1cf0] sm:$0xff]
        %v1464 = vld [vmem:[%s396 + $0x1cf8] sm:$0xff]
        %v1465 = vld [vmem:[%s396 + $0x1d00] sm:$0xff]
        %v1466 = vld [vmem:[%s396 + $0x1d08] sm:$0xff]
        %v1467 = vld [vmem:[%s396 + $0x1d10] sm:$0xff]
        %v1468 = vld [vmem:[%s396 + $0x1d18] sm:$0xff]
        %v1469 = vld [vmem:[%s396 + $0x1d20] sm:$0xff]
        %v1470 = vld [vmem:[%s396 + $0x1d28] sm:$0xff]
        %v1471 = vld [vmem:[%s396 + $0x1d30] sm:$0xff]
        %v1472 = vld [vmem:[%s396 + $0x1d38] sm:$0xff]
        %v1473 = vld [vmem:[%s396 + $0x1d40] sm:$0xff]
        %v1474 = vld [vmem:[%s396 + $0x1d48] sm:$0xff]
        %v1475 = vld [vmem:[%s396 + $0x1d50] sm:$0xff]
        %v1476 = vld [vmem:[%s396 + $0x1d58] sm:$0xff]
        %v1477 = vld [vmem:[%s396 + $0x1d60] sm:$0xff]
        %v1478 = vld [vmem:[%s396 + $0x1d68] sm:$0xff]
        %v1479 = vld [vmem:[%s396 + $0x1d70] sm:$0xff]
        %v1480 = vld [vmem:[%s396 + $0x1d78] sm:$0xff]
        %v1481 = vld [vmem:[%s396 + $0x1d80] sm:$0xff]
        %v1482 = vld [vmem:[%s396 + $0x1d88] sm:$0xff]
        %v1483 = vld [vmem:[%s396 + $0x1d90] sm:$0xff]
        %v1484 = vld [vmem:[%s396 + $0x1d98] sm:$0xff]
        %v1485 = vld [vmem:[%s396 + $0x1da0] sm:$0xff]
        %v1486 = vld [vmem:[%s396 + $0x1da8] sm:$0xff]
        %v1487 = vld [vmem:[%s396 + $0x1db0] sm:$0xff]
        %v1488 = vld [vmem:[%s396 + $0x1db8] sm:$0xff]
        %v1489 = vld [vmem:[%s396 + $0x1dc0] sm:$0xff]
        %v1490 = vld [vmem:[%s396 + $0x1dc8] sm:$0xff]
        %v1491 = vld [vmem:[%s396 + $0x1dd0] sm:$0xff]
        %v1492 = vld [vmem:[%s396 + $0x1dd8] sm:$0xff]
        %v1493 = vld [vmem:[%s396 + $0x1de0] sm:$0xff]
        %v1494 = vld [vmem:[%s396 + $0x1de8] sm:$0xff]
        %v1495 = vld [vmem:[%s396 + $0x1df0] sm:$0xff]
        %v1496 = vld [vmem:[%s396 + $0x1df8] sm:$0xff]
        %v1497 = vld [vmem:[%s396 + $0x1e00] sm:$0xff]
        %v1498 = vld [vmem:[%s396 + $0x1e08] sm:$0xff]
        %v1499 = vld [vmem:[%s396 + $0x1e10] sm:$0xff]
        %v1500 = vld [vmem:[%s396 + $0x1e18] sm:$0xff]
        %v1501 = vld [vmem:[%s396 + $0x1e20] sm:$0xff]
        %v1502 = vld [vmem:[%s396 + $0x1e28] sm:$0xff]
        %v1503 = vld [vmem:[%s396 + $0x1e30] sm:$0xff]
        %v1504 = vld [vmem:[%s396 + $0x1e38] sm:$0xff]
        %v1505 = vld [vmem:[%s396 + $0x1e40] sm:$0xff]
        %v1506 = vld [vmem:[%s396 + $0x1e48] sm:$0xff]
        %v1507 = vld [vmem:[%s396 + $0x1e50] sm:$0xff]
        %v1508 = vld [vmem:[%s396 + $0x1e58] sm:$0xff]
        %v1509 = vld [vmem:[%s396 + $0x1e60] sm:$0xff]
        %v1510 = vld [vmem:[%s396 + $0x1e68] sm:$0xff]
        %v1511 = vld [vmem:[%s396 + $0x1e70] sm:$0xff]
        %v1512 = vld [vmem:[%s396 + $0x1e78] sm:$0xff]
        %v1513 = vld [vmem:[%s396 + $0x1e80] sm:$0xff]
        %v1514 = vld [vmem:[%s396 + $0x1e88] sm:$0xff]
        %v1515 = vld [vmem:[%s396 + $0x1e90] sm:$0xff]
        %v1516 = vld [vmem:[%s396 + $0x1e98] sm:$0xff]
        %v1517 = vld [vmem:[%s396 + $0x1ea0] sm:$0xff]
        %v1518 = vld [vmem:[%s396 + $0x1ea8] sm:$0xff]
        %v1519 = vld [vmem:[%s396 + $0x1eb0] sm:$0xff]
        %v1520 = vld [vmem:[%s396 + $0x1eb8] sm:$0xff]
        %v1521 = vld [vmem:[%s396 + $0x1ec0] sm:$0xff]
        %v1522 = vld [vmem:[%s396 + $0x1ec8] sm:$0xff]
        %v1523 = vld [vmem:[%s396 + $0x1ed0] sm:$0xff]
        %v1524 = vld [vmem:[%s396 + $0x1ed8] sm:$0xff]
        %v1525 = vld [vmem:[%s396 + $0x1ee0] sm:$0xff]
        %v1526 = vld [vmem:[%s396 + $0x1ee8] sm:$0xff]
        %v1527 = vld [vmem:[%s396 + $0x1ef0] sm:$0xff]
        %v1528 = vld [vmem:[%s396 + $0x1ef8] sm:$0xff]
        %v1529 = vld [vmem:[%s396 + $0x1f00] sm:$0xff]
        %v1530 = vld [vmem:[%s396 + $0x1f08] sm:$0xff]
        %v1531 = vld [vmem:[%s396 + $0x1f10] sm:$0xff]
        %v1532 = vld [vmem:[%s396 + $0x1f18] sm:$0xff]
        %v1533 = vld [vmem:[%s396 + $0x1f20] sm:$0xff]
        %v1534 = vld [vmem:[%s396 + $0x1f28] sm:$0xff]
        %v1535 = vld [vmem:[%s396 + $0x1f30] sm:$0xff]
        %v1536 = vld [vmem:[%s396 + $0x1f38] sm:$0xff]
        %v1537 = vld [vmem:[%s396 + $0x1f40] sm:$0xff]
        %v1538 = vld [vmem:[%s396 + $0x1f48] sm:$0xff]
        %v1539 = vld [vmem:[%s396 + $0x1f50] sm:$0xff]
        %v1540 = vld [vmem:[%s396 + $0x1f58] sm:$0xff]
        %v1541 = vld [vmem:[%s396 + $0x1f60] sm:$0xff]
        %v1542 = vld [vmem:[%s396 + $0x1f68] sm:$0xff]
        %v1543 = vld [vmem:[%s396 + $0x1f70] sm:$0xff]
        %v1544 = vld [vmem:[%s396 + $0x1f78] sm:$0xff]
        %v1545 = vld [vmem:[%s396 + $0x1f80] sm:$0xff]
        %v1546 = vld [vmem:[%s396 + $0x1f88] sm:$0xff]
        %v1547 = vld [vmem:[%s396 + $0x1f90] sm:$0xff]
        %v1548 = vld [vmem:[%s396 + $0x1f98] sm:$0xff]
        %v1549 = vld [vmem:[%s396 + $0x1fa0] sm:$0xff]
        %v1550 = vld [vmem:[%s396 + $0x1fa8] sm:$0xff]
        %v1551 = vld [vmem:[%s396 + $0x1fb0] sm:$0xff]
        %v1552 = vld [vmem:[%s396 + $0x1fb8] sm:$0xff]
        %v1553 = vld [vmem:[%s396 + $0x1fc0] sm:$0xff]
        %v1554 = vld [vmem:[%s396 + $0x1fc8] sm:$0xff]
        %v1555 = vld [vmem:[%s396 + $0x1fd0] sm:$0xff]
        %v1556 = vld [vmem:[%s396 + $0x1fd8] sm:$0xff]
        %v1557 = vld [vmem:[%s396 + $0x1fe0] sm:$0xff]
        %v1558 = vld [vmem:[%s396 + $0x1fe8] sm:$0xff]
        %v1559 = vld [vmem:[%s396 + $0x1ff0] sm:$0xff]
        %v1560 = vld [vmem:[%s396 + $0x1ff8] sm:$0xff]
        %1577 = vst [vmem:[#allocation1] ss:$4 sm:$0xff] %v521
        %s1578 = scalar_lea.vmem [#allocation1], 32
        %1579 = vst [vmem:[%s1578] ss:$4 sm:$0xff] %v522
        %v1580 = vld.sshfl [vmem:[#allocation1] sm:$0xff pattern:$0x73625140]
        %v1581 = vld.sshfl [vmem:[#allocation1 + $0x8] sm:$0xff pattern:$0x73625140]
        %v1582 = vld.sshfl [vmem:[#allocation1 + $0x10] sm:$0xff pattern:$0x73625140]
        %v1583 = vld.sshfl [vmem:[#allocation1 + $0x18] sm:$0xff pattern:$0x73625140]
        %v1584 = vld.sshfl [vmem:[#allocation1 + $0x20] sm:$0xff pattern:$0x73625140]
        %v1585 = vld.sshfl [vmem:[#allocation1 + $0x28] sm:$0xff pattern:$0x73625140]
        %v1586 = vld.sshfl [vmem:[#allocation1 + $0x30] sm:$0xff pattern:$0x73625140]
        %v1587 = vld.sshfl [vmem:[#allocation1 + $0x38] sm:$0xff pattern:$0x73625140]
        %1588 = vst [vmem:[#allocation1] ss:$4 sm:$0xff] %v523
        %1589 = vst [vmem:[%s1578] ss:$4 sm:$0xff] %v524
        %v1590 = vld.sshfl [vmem:[#allocation1] sm:$0xff pattern:$0x73625140]
        %v1591 = vld.sshfl [vmem:[#allocation1 + $0x8] sm:$0xff pattern:$0x73625140]
        %v1592 = vld.sshfl [vmem:[#allocation1 + $0x10] sm:$0xff pattern:$0x73625140]
        %v1593 = vld.sshfl [vmem:[#allocation1 + $0x18] sm:$0xff pattern:$0x73625140]
        %v1594 = vld.sshfl [vmem:[#allocation1 + $0x20] sm:$0xff pattern:$0x73625140]
        %v1595 = vld.sshfl [vmem:[#allocation1 + $0x28] sm:$0xff pattern:$0x73625140]
        %v1596 = vld.sshfl [vmem:[#allocation1 + $0x30] sm:$0xff pattern:$0x73625140]
        %v1597 = vld.sshfl [vmem:[#allocation1 + $0x38] sm:$0xff pattern:$0x73625140]
        %1598 = vst [vmem:[#allocation1] ss:$4 sm:$0xff] %v525
        %1599 = vst [vmem:[%s1578] ss:$4 sm:$0xff] %v526
        %v1600 = vld.sshfl [vmem:[#allocation1] sm:$0xff pattern:$0x73625140]
        %v1601 = vld.sshfl [vmem:[#allocation1 + $0x8] sm:$0xff pattern:$0x73625140]
        %v1602 = vld.sshfl [vmem:[#allocation1 + $0x10] sm:$0xff pattern:$0x73625140]
        %v1603 = vld.sshfl [vmem:[#allocation1 + $0x18] sm:$0xff pattern:$0x73625140]
        %v1604 = vld.sshfl [vmem:[#allocation1 + $0x20] sm:$0xff pattern:$0x73625140]
        %v1605 = vld.sshfl [vmem:[#allocation1 + $0x28] sm:$0xff pattern:$0x73625140]
        %v1606 = vld.sshfl [vmem:[#allocation1 + $0x30] sm:$0xff pattern:$0x73625140]
        %v1607 = vld.sshfl [vmem:[#allocation1 + $0x38] sm:$0xff pattern:$0x73625140]
        %1608 = vst [vmem:[#allocation1] ss:$4 sm:$0xff] %v527
        %1609 = vst [vmem:[%s1578] ss:$4 sm:$0xff] %v528
        %v1610 = vld.sshfl [vmem:[#allocation1] sm:$0xff pattern:$0x73625140]
        %v1611 = vld.sshfl [vmem:[#allocation1 + $0x8] sm:$0xff pattern:$0x73625140]
        %v1612 = vld.sshfl [vmem:[#allocation1 + $0x10] sm:$0xff pattern:$0x73625140]
        %v1613 = vld.sshfl [vmem:[#allocation1 + $0x18] sm:$0xff pattern:$0x73625140]
        %v1614 = vld.sshfl [vmem:[#allocation1 + $0x20] sm:$0xff pattern:$0x73625140]
        %v1615 = vld.sshfl [vmem:[#allocation1 + $0x28] sm:$0xff pattern:$0x73625140]
        %v1616 = vld.sshfl [vmem:[#allocation1 + $0x30] sm:$0xff pattern:$0x73625140]
        %v1617 = vld.sshfl [vmem:[#allocation1 + $0x38] sm:$0xff pattern:$0x73625140]
        %1618 = vst [vmem:[#allocation1] ss:$4 sm:$0xff] %v529
        %1619 = vst [vmem:[%s1578] ss:$4 sm:$0xff] %v530
        %v1620 = vld.sshfl [vmem:[#allocation1] sm:$0xff pattern:$0x73625140]
        %v1621 = vld.sshfl [vmem:[#allocation1 + $0x8] sm:$0xff pattern:$0x73625140]
        %v1622 = vld.sshfl [vmem:[#allocation1 + $0x10] sm:$0xff pattern:$0x73625140]
        %v1623 = vld.sshfl [vmem:[#allocation1 + $0x18] sm:$0xff pattern:$0x73625140]
        %v1624 = vld.sshfl [vmem:[#allocation1 + $0x20] sm:$0xff pattern:$0x73625140]
        %v1625 = vld.sshfl [vmem:[#allocation1 + $0x28] sm:$0xff pattern:$0x73625140]
        %v1626 = vld.sshfl [vmem:[#allocation1 + $0x30] sm:$0xff pattern:$0x73625140]
        %v1627 = vld.sshfl [vmem:[#allocation1 + $0x38] sm:$0xff pattern:$0x73625140]
        %1628 = vst [vmem:[#allocation1] ss:$4 sm:$0xff] %v531
        %1629 = vst [vmem:[%s1578] ss:$4 sm:$0xff] %v532
        %v1630 = vld.sshfl [vmem:[#allocation1] sm:$0xff pattern:$0x73625140]
        %v1631 = vld.sshfl [vmem:[#allocation1 + $0x8] sm:$0xff pattern:$0x73625140]
        %v1632 = vld.sshfl [vmem:[#allocation1 + $0x10] sm:$0xff pattern:$0x73625140]
        %v1633 = vld.sshfl [vmem:[#allocation1 + $0x18] sm:$0xff pattern:$0x73625140]
        %v1634 = vld.sshfl [vmem:[#allocation1 + $0x20] sm:$0xff pattern:$0x73625140]
        %v1635 = vld.sshfl [vmem:[#allocation1 + $0x28] sm:$0xff pattern:$0x73625140]
        %v1636 = vld.sshfl [vmem:[#allocation1 + $0x30] sm:$0xff pattern:$0x73625140]
        %v1637 = vld.sshfl [vmem:[#allocation1 + $0x38] sm:$0xff pattern:$0x73625140]
        %1638 = vst [vmem:[#allocation1] ss:$4 sm:$0xff] %v533
        %1639 = vst [vmem:[%s1578] ss:$4 sm:$0xff] %v534
        %v1640 = vld.sshfl [vmem:[#allocation1] sm:$0xff pattern:$0x73625140]
        %v1641 = vld.sshfl [vmem:[#allocation1 + $0x8] sm:$0xff pattern:$0x73625140]
        %v1642 = vld.sshfl [vmem:[#allocation1 + $0x10] sm:$0xff pattern:$0x73625140]
        %v1643 = vld.sshfl [vmem:[#allocation1 + $0x18] sm:$0xff pattern:$0x73625140]
        %v1644 = vld.sshfl [vmem:[#allocation1 + $0x20] sm:$0xff pattern:$0x73625140]
        %v1645 = vld.sshfl [vmem:[#allocation1 + $0x28] sm:$0xff pattern:$0x73625140]
        %v1646 = vld.sshfl [vmem:[#allocation1 + $0x30] sm:$0xff pattern:$0x73625140]
        %v1647 = vld.sshfl [vmem:[#allocation1 + $0x38] sm:$0xff pattern:$0x73625140]
        %1648 = vst [vmem:[#allocation1] ss:$4 sm:$0xff] %v535
        %1649 = vst [vmem:[%s1578] ss:$4 sm:$0xff] %v536
        %v1650 = vld.sshfl [vmem:[#allocation1] sm:$0xff pattern:$0x73625140]
        %v1651 = vld.sshfl [vmem:[#allocation1 + $0x8] sm:$0xff pattern:$0x73625140]
        %v1652 = vld.sshfl [vmem:[#allocation1 + $0x10] sm:$0xff pattern:$0x73625140]
        %v1653 = vld.sshfl [vmem:[#allocation1 + $0x18] sm:$0xff pattern:$0x73625140]
        %v1654 = vld.sshfl [vmem:[#allocation1 + $0x20] sm:$0xff pattern:$0x73625140]
        %v1655 = vld.sshfl [vmem:[#allocation1 + $0x28] sm:$0xff pattern:$0x73625140]
        %v1656 = vld.sshfl [vmem:[#allocation1 + $0x30] sm:$0xff pattern:$0x73625140]
        %v1657 = vld.sshfl [vmem:[#allocation1 + $0x38] sm:$0xff pattern:$0x73625140]
        %1722 = vmatpush.msra.mxu0 %v552
        %1723 = vmatpush.msra.mxu0 %v551
        %1724 = vmatpush.msra.mxu0 %v550
        %1725 = vmatpush.msra.mxu0 %v549
        %1726 = vmatpush.msra.mxu0 %v548
        %1727 = vmatpush.msra.mxu0 %v547
        %1728 = vmatpush.msra.mxu0 %v546
        %1729 = vmatpush.msra.mxu0 %v545
        %1730 = vmatpush.msra.mxu0 %v544
        %1731 = vmatpush.msra.mxu0 %v543
        %1732 = vmatpush.msra.mxu0 %v542
        %1733 = vmatpush.msra.mxu0 %v541
        %1734 = vmatpush.msra.mxu0 %v540
        %1735 = vmatpush.msra.mxu0 %v539
        %1736 = vmatpush.msra.mxu0 %v538
        %1737 = vmatpush.msra.mxu0 %v537
        %1738 = vmatmul.f32.gmra.mxu0 %v1580
        %v1739 = vpop.f32.mrf.mxu0
        %v1740 = vadd.f32 0.0, %v1739
        %1741 = vdwg.mxu0
        %1742 = vmatpush.msra.mxu0 %v568
        %1743 = vmatpush.msra.mxu0 %v567
        %1744 = vmatpush.msra.mxu0 %v566
        %1745 = vmatpush.msra.mxu0 %v565
        %1746 = vmatpush.msra.mxu0 %v564
        %1747 = vmatpush.msra.mxu0 %v563
        %1748 = vmatpush.msra.mxu0 %v562
        %1749 = vmatpush.msra.mxu0 %v561
        %1750 = vmatpush.msra.mxu0 %v560
        %1751 = vmatpush.msra.mxu0 %v559
        %1752 = vmatpush.msra.mxu0 %v558
        %1753 = vmatpush.msra.mxu0 %v557
        %1754 = vmatpush.msra.mxu0 %v556
        %1755 = vmatpush.msra.mxu0 %v555
        %1756 = vmatpush.msra.mxu0 %v554
        %1757 = vmatpush.msra.mxu0 %v553
        %1758 = vmatmul.f32.gmra.mxu0 %v1581
        %v1759 = vpop.f32.mrf.mxu0
        %v1760 = vadd.f32 %v1740, %v1759
        %1761 = vdwg.mxu0
        %1762 = vmatpush.msra.mxu0 %v584
        %1763 = vmatpush.msra.mxu0 %v583
        %1764 = vmatpush.msra.mxu0 %v582
        %1765 = vmatpush.msra.mxu0 %v581
        %1766 = vmatpush.msra.mxu0 %v580
        %1767 = vmatpush.msra.mxu0 %v579
        %1768 = vmatpush.msra.mxu0 %v578
        %1769 = vmatpush.msra.mxu0 %v577
        %1770 = vmatpush.msra.mxu0 %v576
        %1771 = vmatpush.msra.mxu0 %v575
        %1772 = vmatpush.msra.mxu0 %v574
        %1773 = vmatpush.msra.mxu0 %v573
        %1774 = vmatpush.msra.mxu0 %v572
        %1775 = vmatpush.msra.mxu0 %v571
        %1776 = vmatpush.msra.mxu0 %v570
        %1777 = vmatpush.msra.mxu0 %v569
        %1778 = vmatmul.f32.gmra.mxu0 %v1582
        %v1779 = vpop.f32.mrf.mxu0
        %v1780 = vadd.f32 %v1760, %v1779
        %1781 = vdwg.mxu0
        %1782 = vmatpush.msra.mxu0 %v600
        %1783 = vmatpush.msra.mxu0 %v599
        %1784 = vmatpush.msra.mxu0 %v598
        %1785 = vmatpush.msra.mxu0 %v597
        %1786 = vmatpush.msra.mxu0 %v596
        %1787 = vmatpush.msra.mxu0 %v595
        %1788 = vmatpush.msra.mxu0 %v594
        %1789 = vmatpush.msra.mxu0 %v593
        %1790 = vmatpush.msra.mxu0 %v592
        %1791 = vmatpush.msra.mxu0 %v591
        %1792 = vmatpush.msra.mxu0 %v590
        %1793 = vmatpush.msra.mxu0 %v589
        %1794 = vmatpush.msra.mxu0 %v588
        %1795 = vmatpush.msra.mxu0 %v587
        %1796 = vmatpush.msra.mxu0 %v586
        %1797 = vmatpush.msra.mxu0 %v585
        %1798 = vmatmul.f32.gmra.mxu0 %v1583
        %v1799 = vpop.f32.mrf.mxu0
        %v1800 = vadd.f32 %v1780, %v1799
        %1801 = vdwg.mxu0
        %1802 = vmatpush.msra.mxu0 %v616
        %1803 = vmatpush.msra.mxu0 %v615
        %1804 = vmatpush.msra.mxu0 %v614
        %1805 = vmatpush.msra.mxu0 %v613
        %1806 = vmatpush.msra.mxu0 %v612
        %1807 = vmatpush.msra.mxu0 %v611
        %1808 = vmatpush.msra.mxu0 %v610
        %1809 = vmatpush.msra.mxu0 %v609
        %1810 = vmatpush.msra.mxu0 %v608
        %1811 = vmatpush.msra.mxu0 %v607
        %1812 = vmatpush.msra.mxu0 %v606
        %1813 = vmatpush.msra.mxu0 %v605
        %1814 = vmatpush.msra.mxu0 %v604
        %1815 = vmatpush.msra.mxu0 %v603
        %1816 = vmatpush.msra.mxu0 %v602
        %1817 = vmatpush.msra.mxu0 %v601
        %1818 = vmatmul.f32.gmra.mxu0 %v1584
        %v1819 = vpop.f32.mrf.mxu0
        %v1820 = vadd.f32 %v1800, %v1819
        %1821 = vdwg.mxu0
        %1822 = vmatpush.msra.mxu0 %v632
        %1823 = vmatpush.msra.mxu0 %v631
        %1824 = vmatpush.msra.mxu0 %v630
        %1825 = vmatpush.msra.mxu0 %v629
        %1826 = vmatpush.msra.mxu0 %v628
        %1827 = vmatpush.msra.mxu0 %v627
        %1828 = vmatpush.msra.mxu0 %v626
        %1829 = vmatpush.msra.mxu0 %v625
        %1830 = vmatpush.msra.mxu0 %v624
        %1831 = vmatpush.msra.mxu0 %v623
        %1832 = vmatpush.msra.mxu0 %v622
        %1833 = vmatpush.msra.mxu0 %v621
        %1834 = vmatpush.msra.mxu0 %v620
        %1835 = vmatpush.msra.mxu0 %v619
        %1836 = vmatpush.msra.mxu0 %v618
        %1837 = vmatpush.msra.mxu0 %v617
        %1838 = vmatmul.f32.gmra.mxu0 %v1585
        %v1839 = vpop.f32.mrf.mxu0
        %v1840 = vadd.f32 %v1820, %v1839
        %1841 = vdwg.mxu0
        %1842 = vmatpush.msra.mxu0 %v648
        %1843 = vmatpush.msra.mxu0 %v647
        %1844 = vmatpush.msra.mxu0 %v646
        %1845 = vmatpush.msra.mxu0 %v645
        %1846 = vmatpush.msra.mxu0 %v644
        %1847 = vmatpush.msra.mxu0 %v643
        %1848 = vmatpush.msra.mxu0 %v642
        %1849 = vmatpush.msra.mxu0 %v641
        %1850 = vmatpush.msra.mxu0 %v640
        %1851 = vmatpush.msra.mxu0 %v639
        %1852 = vmatpush.msra.mxu0 %v638
        %1853 = vmatpush.msra.mxu0 %v637
        %1854 = vmatpush.msra.mxu0 %v636
        %1855 = vmatpush.msra.mxu0 %v635
        %1856 = vmatpush.msra.mxu0 %v634
        %1857 = vmatpush.msra.mxu0 %v633
        %1858 = vmatmul.f32.gmra.mxu0 %v1586
        %v1859 = vpop.f32.mrf.mxu0
        %v1860 = vadd.f32 %v1840, %v1859
        %1861 = vdwg.mxu0
        %1862 = vmatpush.msra.mxu0 %v664
        %1863 = vmatpush.msra.mxu0 %v663
        %1864 = vmatpush.msra.mxu0 %v662
        %1865 = vmatpush.msra.mxu0 %v661
        %1866 = vmatpush.msra.mxu0 %v660
        %1867 = vmatpush.msra.mxu0 %v659
        %1868 = vmatpush.msra.mxu0 %v658
        %1869 = vmatpush.msra.mxu0 %v657
        %1870 = vmatpush.msra.mxu0 %v656
        %1871 = vmatpush.msra.mxu0 %v655
        %1872 = vmatpush.msra.mxu0 %v654
        %1873 = vmatpush.msra.mxu0 %v653
        %1874 = vmatpush.msra.mxu0 %v652
        %1875 = vmatpush.msra.mxu0 %v651
        %1876 = vmatpush.msra.mxu0 %v650
        %1877 = vmatpush.msra.mxu0 %v649
        %1878 = vmatmul.f32.gmra.mxu0 %v1587
        %v1879 = vpop.f32.mrf.mxu0
        %v1880 = vadd.f32 %v1860, %v1879
        %1881 = vdwg.mxu0
        %1882 = vmatpush.msra.mxu0 %v680
        %1883 = vmatpush.msra.mxu0 %v679
        %1884 = vmatpush.msra.mxu0 %v678
        %1885 = vmatpush.msra.mxu0 %v677
        %1886 = vmatpush.msra.mxu0 %v676
        %1887 = vmatpush.msra.mxu0 %v675
        %1888 = vmatpush.msra.mxu0 %v674
        %1889 = vmatpush.msra.mxu0 %v673
        %1890 = vmatpush.msra.mxu0 %v672
        %1891 = vmatpush.msra.mxu0 %v671
        %1892 = vmatpush.msra.mxu0 %v670
        %1893 = vmatpush.msra.mxu0 %v669
        %1894 = vmatpush.msra.mxu0 %v668
        %1895 = vmatpush.msra.mxu0 %v667
        %1896 = vmatpush.msra.mxu0 %v666
        %1897 = vmatpush.msra.mxu0 %v665
        %1898 = vmatmul.f32.gmra.mxu0 %v1590
        %v1899 = vpop.f32.mrf.mxu0
        %v1900 = vadd.f32 %v1880, %v1899
        %1901 = vdwg.mxu0
        %1902 = vmatpush.msra.mxu0 %v696
        %1903 = vmatpush.msra.mxu0 %v695
        %1904 = vmatpush.msra.mxu0 %v694
        %1905 = vmatpush.msra.mxu0 %v693
        %1906 = vmatpush.msra.mxu0 %v692
        %1907 = vmatpush.msra.mxu0 %v691
        %1908 = vmatpush.msra.mxu0 %v690
        %1909 = vmatpush.msra.mxu0 %v689
        %1910 = vmatpush.msra.mxu0 %v688
        %1911 = vmatpush.msra.mxu0 %v687
        %1912 = vmatpush.msra.mxu0 %v686
        %1913 = vmatpush.msra.mxu0 %v685
        %1914 = vmatpush.msra.mxu0 %v684
        %1915 = vmatpush.msra.mxu0 %v683
        %1916 = vmatpush.msra.mxu0 %v682
        %1917 = vmatpush.msra.mxu0 %v681
        %1918 = vmatmul.f32.gmra.mxu0 %v1591
        %v1919 = vpop.f32.mrf.mxu0
        %v1920 = vadd.f32 %v1900, %v1919
        %1921 = vdwg.mxu0
        %1922 = vmatpush.msra.mxu0 %v712
        %1923 = vmatpush.msra.mxu0 %v711
        %1924 = vmatpush.msra.mxu0 %v710
        %1925 = vmatpush.msra.mxu0 %v709
        %1926 = vmatpush.msra.mxu0 %v708
        %1927 = vmatpush.msra.mxu0 %v707
        %1928 = vmatpush.msra.mxu0 %v706
        %1929 = vmatpush.msra.mxu0 %v705
        %1930 = vmatpush.msra.mxu0 %v704
        %1931 = vmatpush.msra.mxu0 %v703
        %1932 = vmatpush.msra.mxu0 %v702
        %1933 = vmatpush.msra.mxu0 %v701
        %1934 = vmatpush.msra.mxu0 %v700
        %1935 = vmatpush.msra.mxu0 %v699
        %1936 = vmatpush.msra.mxu0 %v698
        %1937 = vmatpush.msra.mxu0 %v697
        %1938 = vmatmul.f32.gmra.mxu0 %v1592
        %v1939 = vpop.f32.mrf.mxu0
        %v1940 = vadd.f32 %v1920, %v1939
        %1941 = vdwg.mxu0
        %1942 = vmatpush.msra.mxu0 %v728
        %1943 = vmatpush.msra.mxu0 %v727
        %1944 = vmatpush.msra.mxu0 %v726
        %1945 = vmatpush.msra.mxu0 %v725
        %1946 = vmatpush.msra.mxu0 %v724
        %1947 = vmatpush.msra.mxu0 %v723
        %1948 = vmatpush.msra.mxu0 %v722
        %1949 = vmatpush.msra.mxu0 %v721
        %1950 = vmatpush.msra.mxu0 %v720
        %1951 = vmatpush.msra.mxu0 %v719
        %1952 = vmatpush.msra.mxu0 %v718
        %1953 = vmatpush.msra.mxu0 %v717
        %1954 = vmatpush.msra.mxu0 %v716
        %1955 = vmatpush.msra.mxu0 %v715
        %1956 = vmatpush.msra.mxu0 %v714
        %1957 = vmatpush.msra.mxu0 %v713
        %1958 = vmatmul.f32.gmra.mxu0 %v1593
        %v1959 = vpop.f32.mrf.mxu0
        %v1960 = vadd.f32 %v1940, %v1959
        %1961 = vdwg.mxu0
        %1962 = vmatpush.msra.mxu0 %v744
        %1963 = vmatpush.msra.mxu0 %v743
        %1964 = vmatpush.msra.mxu0 %v742
        %1965 = vmatpush.msra.mxu0 %v741
        %1966 = vmatpush.msra.mxu0 %v740
        %1967 = vmatpush.msra.mxu0 %v739
        %1968 = vmatpush.msra.mxu0 %v738
        %1969 = vmatpush.msra.mxu0 %v737
        %1970 = vmatpush.msra.mxu0 %v736
        %1971 = vmatpush.msra.mxu0 %v735
        %1972 = vmatpush.msra.mxu0 %v734
        %1973 = vmatpush.msra.mxu0 %v733
        %1974 = vmatpush.msra.mxu0 %v732
        %1975 = vmatpush.msra.mxu0 %v731
        %1976 = vmatpush.msra.mxu0 %v730
        %1977 = vmatpush.msra.mxu0 %v729
        %1978 = vmatmul.f32.gmra.mxu0 %v1594
        %v1979 = vpop.f32.mrf.mxu0
        %v1980 = vadd.f32 %v1960, %v1979
        %1981 = vdwg.mxu0
        %1982 = vmatpush.msra.mxu0 %v760
        %1983 = vmatpush.msra.mxu0 %v759
        %1984 = vmatpush.msra.mxu0 %v758
        %1985 = vmatpush.msra.mxu0 %v757
        %1986 = vmatpush.msra.mxu0 %v756
        %1987 = vmatpush.msra.mxu0 %v755
        %1988 = vmatpush.msra.mxu0 %v754
        %1989 = vmatpush.msra.mxu0 %v753
        %1990 = vmatpush.msra.mxu0 %v752
        %1991 = vmatpush.msra.mxu0 %v751
        %1992 = vmatpush.msra.mxu0 %v750
        %1993 = vmatpush.msra.mxu0 %v749
        %1994 = vmatpush.msra.mxu0 %v748
        %1995 = vmatpush.msra.mxu0 %v747
        %1996 = vmatpush.msra.mxu0 %v746
        %1997 = vmatpush.msra.mxu0 %v745
        %1998 = vmatmul.f32.gmra.mxu0 %v1595
        %v1999 = vpop.f32.mrf.mxu0
        %v2000 = vadd.f32 %v1980, %v1999
        %2001 = vdwg.mxu0
        %2002 = vmatpush.msra.mxu0 %v776
        %2003 = vmatpush.msra.mxu0 %v775
        %2004 = vmatpush.msra.mxu0 %v774
        %2005 = vmatpush.msra.mxu0 %v773
        %2006 = vmatpush.msra.mxu0 %v772
        %2007 = vmatpush.msra.mxu0 %v771
        %2008 = vmatpush.msra.mxu0 %v770
        %2009 = vmatpush.msra.mxu0 %v769
        %2010 = vmatpush.msra.mxu0 %v768
        %2011 = vmatpush.msra.mxu0 %v767
        %2012 = vmatpush.msra.mxu0 %v766
        %2013 = vmatpush.msra.mxu0 %v765
        %2014 = vmatpush.msra.mxu0 %v764
        %2015 = vmatpush.msra.mxu0 %v763
        %2016 = vmatpush.msra.mxu0 %v762
        %2017 = vmatpush.msra.mxu0 %v761
        %2018 = vmatmul.f32.gmra.mxu0 %v1596
        %v2019 = vpop.f32.mrf.mxu0
        %v2020 = vadd.f32 %v2000, %v2019
        %2021 = vdwg.mxu0
        %2022 = vmatpush.msra.mxu0 %v792
        %2023 = vmatpush.msra.mxu0 %v791
        %2024 = vmatpush.msra.mxu0 %v790
        %2025 = vmatpush.msra.mxu0 %v789
        %2026 = vmatpush.msra.mxu0 %v788
        %2027 = vmatpush.msra.mxu0 %v787
        %2028 = vmatpush.msra.mxu0 %v786
        %2029 = vmatpush.msra.mxu0 %v785
        %2030 = vmatpush.msra.mxu0 %v784
        %2031 = vmatpush.msra.mxu0 %v783
        %2032 = vmatpush.msra.mxu0 %v782
        %2033 = vmatpush.msra.mxu0 %v781
        %2034 = vmatpush.msra.mxu0 %v780
        %2035 = vmatpush.msra.mxu0 %v779
        %2036 = vmatpush.msra.mxu0 %v778
        %2037 = vmatpush.msra.mxu0 %v777
        %2038 = vmatmul.f32.gmra.mxu0 %v1597
        %v2039 = vpop.f32.mrf.mxu0
        %v2040 = vadd.f32 %v2020, %v2039
        %2041 = vdwg.mxu0
        %2042 = vmatpush.msra.mxu0 %v808
        %2043 = vmatpush.msra.mxu0 %v807
        %2044 = vmatpush.msra.mxu0 %v806
        %2045 = vmatpush.msra.mxu0 %v805
        %2046 = vmatpush.msra.mxu0 %v804
        %2047 = vmatpush.msra.mxu0 %v803
        %2048 = vmatpush.msra.mxu0 %v802
        %2049 = vmatpush.msra.mxu0 %v801
        %2050 = vmatpush.msra.mxu0 %v800
        %2051 = vmatpush.msra.mxu0 %v799
        %2052 = vmatpush.msra.mxu0 %v798
        %2053 = vmatpush.msra.mxu0 %v797
        %2054 = vmatpush.msra.mxu0 %v796
        %2055 = vmatpush.msra.mxu0 %v795
        %2056 = vmatpush.msra.mxu0 %v794
        %2057 = vmatpush.msra.mxu0 %v793
        %2058 = vmatmul.f32.gmra.mxu0 %v1600
        %v2059 = vpop.f32.mrf.mxu0
        %v2060 = vadd.f32 %v2040, %v2059
        %2061 = vdwg.mxu0
        %2062 = vmatpush.msra.mxu0 %v824
        %2063 = vmatpush.msra.mxu0 %v823
        %2064 = vmatpush.msra.mxu0 %v822
        %2065 = vmatpush.msra.mxu0 %v821
        %2066 = vmatpush.msra.mxu0 %v820
        %2067 = vmatpush.msra.mxu0 %v819
        %2068 = vmatpush.msra.mxu0 %v818
        %2069 = vmatpush.msra.mxu0 %v817
        %2070 = vmatpush.msra.mxu0 %v816
        %2071 = vmatpush.msra.mxu0 %v815
        %2072 = vmatpush.msra.mxu0 %v814
        %2073 = vmatpush.msra.mxu0 %v813
        %2074 = vmatpush.msra.mxu0 %v812
        %2075 = vmatpush.msra.mxu0 %v811
        %2076 = vmatpush.msra.mxu0 %v810
        %2077 = vmatpush.msra.mxu0 %v809
        %2078 = vmatmul.f32.gmra.mxu0 %v1601
        %v2079 = vpop.f32.mrf.mxu0
        %v2080 = vadd.f32 %v2060, %v2079
        %2081 = vdwg.mxu0
        %2082 = vmatpush.msra.mxu0 %v840
        %2083 = vmatpush.msra.mxu0 %v839
        %2084 = vmatpush.msra.mxu0 %v838
        %2085 = vmatpush.msra.mxu0 %v837
        %2086 = vmatpush.msra.mxu0 %v836
        %2087 = vmatpush.msra.mxu0 %v835
        %2088 = vmatpush.msra.mxu0 %v834
        %2089 = vmatpush.msra.mxu0 %v833
        %2090 = vmatpush.msra.mxu0 %v832
        %2091 = vmatpush.msra.mxu0 %v831
        %2092 = vmatpush.msra.mxu0 %v830
        %2093 = vmatpush.msra.mxu0 %v829
        %2094 = vmatpush.msra.mxu0 %v828
        %2095 = vmatpush.msra.mxu0 %v827
        %2096 = vmatpush.msra.mxu0 %v826
        %2097 = vmatpush.msra.mxu0 %v825
        %2098 = vmatmul.f32.gmra.mxu0 %v1602
        %v2099 = vpop.f32.mrf.mxu0
        %v2100 = vadd.f32 %v2080, %v2099
        %2101 = vdwg.mxu0
        %2102 = vmatpush.msra.mxu0 %v856
        %2103 = vmatpush.msra.mxu0 %v855
        %2104 = vmatpush.msra.mxu0 %v854
        %2105 = vmatpush.msra.mxu0 %v853
        %2106 = vmatpush.msra.mxu0 %v852
        %2107 = vmatpush.msra.mxu0 %v851
        %2108 = vmatpush.msra.mxu0 %v850
        %2109 = vmatpush.msra.mxu0 %v849
        %2110 = vmatpush.msra.mxu0 %v848
        %2111 = vmatpush.msra.mxu0 %v847
        %2112 = vmatpush.msra.mxu0 %v846
        %2113 = vmatpush.msra.mxu0 %v845
        %2114 = vmatpush.msra.mxu0 %v844
        %2115 = vmatpush.msra.mxu0 %v843
        %2116 = vmatpush.msra.mxu0 %v842
        %2117 = vmatpush.msra.mxu0 %v841
        %2118 = vmatmul.f32.gmra.mxu0 %v1603
        %v2119 = vpop.f32.mrf.mxu0
        %v2120 = vadd.f32 %v2100, %v2119
        %2121 = vdwg.mxu0
        %2122 = vmatpush.msra.mxu0 %v872
        %2123 = vmatpush.msra.mxu0 %v871
        %2124 = vmatpush.msra.mxu0 %v870
        %2125 = vmatpush.msra.mxu0 %v869
        %2126 = vmatpush.msra.mxu0 %v868
        %2127 = vmatpush.msra.mxu0 %v867
        %2128 = vmatpush.msra.mxu0 %v866
        %2129 = vmatpush.msra.mxu0 %v865
        %2130 = vmatpush.msra.mxu0 %v864
        %2131 = vmatpush.msra.mxu0 %v863
        %2132 = vmatpush.msra.mxu0 %v862
        %2133 = vmatpush.msra.mxu0 %v861
        %2134 = vmatpush.msra.mxu0 %v860
        %2135 = vmatpush.msra.mxu0 %v859
        %2136 = vmatpush.msra.mxu0 %v858
        %2137 = vmatpush.msra.mxu0 %v857
        %2138 = vmatmul.f32.gmra.mxu0 %v1604
        %v2139 = vpop.f32.mrf.mxu0
        %v2140 = vadd.f32 %v2120, %v2139
        %2141 = vdwg.mxu0
        %2142 = vmatpush.msra.mxu0 %v888
        %2143 = vmatpush.msra.mxu0 %v887
        %2144 = vmatpush.msra.mxu0 %v886
        %2145 = vmatpush.msra.mxu0 %v885
        %2146 = vmatpush.msra.mxu0 %v884
        %2147 = vmatpush.msra.mxu0 %v883
        %2148 = vmatpush.msra.mxu0 %v882
        %2149 = vmatpush.msra.mxu0 %v881
        %2150 = vmatpush.msra.mxu0 %v880
        %2151 = vmatpush.msra.mxu0 %v879
        %2152 = vmatpush.msra.mxu0 %v878
        %2153 = vmatpush.msra.mxu0 %v877
        %2154 = vmatpush.msra.mxu0 %v876
        %2155 = vmatpush.msra.mxu0 %v875
        %2156 = vmatpush.msra.mxu0 %v874
        %2157 = vmatpush.msra.mxu0 %v873
        %2158 = vmatmul.f32.gmra.mxu0 %v1605
        %v2159 = vpop.f32.mrf.mxu0
        %v2160 = vadd.f32 %v2140, %v2159
        %2161 = vdwg.mxu0
        %2162 = vmatpush.msra.mxu0 %v904
        %2163 = vmatpush.msra.mxu0 %v903
        %2164 = vmatpush.msra.mxu0 %v902
        %2165 = vmatpush.msra.mxu0 %v901
        %2166 = vmatpush.msra.mxu0 %v900
        %2167 = vmatpush.msra.mxu0 %v899
        %2168 = vmatpush.msra.mxu0 %v898
        %2169 = vmatpush.msra.mxu0 %v897
        %2170 = vmatpush.msra.mxu0 %v896
        %2171 = vmatpush.msra.mxu0 %v895
        %2172 = vmatpush.msra.mxu0 %v894
        %2173 = vmatpush.msra.mxu0 %v893
        %2174 = vmatpush.msra.mxu0 %v892
        %2175 = vmatpush.msra.mxu0 %v891
        %2176 = vmatpush.msra.mxu0 %v890
        %2177 = vmatpush.msra.mxu0 %v889
        %2178 = vmatmul.f32.gmra.mxu0 %v1606
        %v2179 = vpop.f32.mrf.mxu0
        %v2180 = vadd.f32 %v2160, %v2179
        %2181 = vdwg.mxu0
        %2182 = vmatpush.msra.mxu0 %v920
        %2183 = vmatpush.msra.mxu0 %v919
        %2184 = vmatpush.msra.mxu0 %v918
        %2185 = vmatpush.msra.mxu0 %v917
        %2186 = vmatpush.msra.mxu0 %v916
        %2187 = vmatpush.msra.mxu0 %v915
        %2188 = vmatpush.msra.mxu0 %v914
        %2189 = vmatpush.msra.mxu0 %v913
        %2190 = vmatpush.msra.mxu0 %v912
        %2191 = vmatpush.msra.mxu0 %v911
        %2192 = vmatpush.msra.mxu0 %v910
        %2193 = vmatpush.msra.mxu0 %v909
        %2194 = vmatpush.msra.mxu0 %v908
        %2195 = vmatpush.msra.mxu0 %v907
        %2196 = vmatpush.msra.mxu0 %v906
        %2197 = vmatpush.msra.mxu0 %v905
        %2198 = vmatmul.f32.gmra.mxu0 %v1607
        %v2199 = vpop.f32.mrf.mxu0
        %v2200 = vadd.f32 %v2180, %v2199
        %2201 = vdwg.mxu0
        %2202 = vmatpush.msra.mxu0 %v936
        %2203 = vmatpush.msra.mxu0 %v935
        %2204 = vmatpush.msra.mxu0 %v934
        %2205 = vmatpush.msra.mxu0 %v933
        %2206 = vmatpush.msra.mxu0 %v932
        %2207 = vmatpush.msra.mxu0 %v931
        %2208 = vmatpush.msra.mxu0 %v930
        %2209 = vmatpush.msra.mxu0 %v929
        %2210 = vmatpush.msra.mxu0 %v928
        %2211 = vmatpush.msra.mxu0 %v927
        %2212 = vmatpush.msra.mxu0 %v926
        %2213 = vmatpush.msra.mxu0 %v925
        %2214 = vmatpush.msra.mxu0 %v924
        %2215 = vmatpush.msra.mxu0 %v923
        %2216 = vmatpush.msra.mxu0 %v922
        %2217 = vmatpush.msra.mxu0 %v921
        %2218 = vmatmul.f32.gmra.mxu0 %v1610
        %v2219 = vpop.f32.mrf.mxu0
        %v2220 = vadd.f32 %v2200, %v2219
        %2221 = vdwg.mxu0
        %2222 = vmatpush.msra.mxu0 %v952
        %2223 = vmatpush.msra.mxu0 %v951
        %2224 = vmatpush.msra.mxu0 %v950
        %2225 = vmatpush.msra.mxu0 %v949
        %2226 = vmatpush.msra.mxu0 %v948
        %2227 = vmatpush.msra.mxu0 %v947
        %2228 = vmatpush.msra.mxu0 %v946
        %2229 = vmatpush.msra.mxu0 %v945
        %2230 = vmatpush.msra.mxu0 %v944
        %2231 = vmatpush.msra.mxu0 %v943
        %2232 = vmatpush.msra.mxu0 %v942
        %2233 = vmatpush.msra.mxu0 %v941
        %2234 = vmatpush.msra.mxu0 %v940
        %2235 = vmatpush.msra.mxu0 %v939
        %2236 = vmatpush.msra.mxu0 %v938
        %2237 = vmatpush.msra.mxu0 %v937
        %2238 = vmatmul.f32.gmra.mxu0 %v1611
        %v2239 = vpop.f32.mrf.mxu0
        %v2240 = vadd.f32 %v2220, %v2239
        %2241 = vdwg.mxu0
        %2242 = vmatpush.msra.mxu0 %v968
        %2243 = vmatpush.msra.mxu0 %v967
        %2244 = vmatpush.msra.mxu0 %v966
        %2245 = vmatpush.msra.mxu0 %v965
        %2246 = vmatpush.msra.mxu0 %v964
        %2247 = vmatpush.msra.mxu0 %v963
        %2248 = vmatpush.msra.mxu0 %v962
        %2249 = vmatpush.msra.mxu0 %v961
        %2250 = vmatpush.msra.mxu0 %v960
        %2251 = vmatpush.msra.mxu0 %v959
        %2252 = vmatpush.msra.mxu0 %v958
        %2253 = vmatpush.msra.mxu0 %v957
        %2254 = vmatpush.msra.mxu0 %v956
        %2255 = vmatpush.msra.mxu0 %v955
        %2256 = vmatpush.msra.mxu0 %v954
        %2257 = vmatpush.msra.mxu0 %v953
        %2258 = vmatmul.f32.gmra.mxu0 %v1612
        %v2259 = vpop.f32.mrf.mxu0
        %v2260 = vadd.f32 %v2240, %v2259
        %2261 = vdwg.mxu0
        %2262 = vmatpush.msra.mxu0 %v984
        %2263 = vmatpush.msra.mxu0 %v983
        %2264 = vmatpush.msra.mxu0 %v982
        %2265 = vmatpush.msra.mxu0 %v981
        %2266 = vmatpush.msra.mxu0 %v980
        %2267 = vmatpush.msra.mxu0 %v979
        %2268 = vmatpush.msra.mxu0 %v978
        %2269 = vmatpush.msra.mxu0 %v977
        %2270 = vmatpush.msra.mxu0 %v976
        %2271 = vmatpush.msra.mxu0 %v975
        %2272 = vmatpush.msra.mxu0 %v974
        %2273 = vmatpush.msra.mxu0 %v973
        %2274 = vmatpush.msra.mxu0 %v972
        %2275 = vmatpush.msra.mxu0 %v971
        %2276 = vmatpush.msra.mxu0 %v970
        %2277 = vmatpush.msra.mxu0 %v969
        %2278 = vmatmul.f32.gmra.mxu0 %v1613
        %v2279 = vpop.f32.mrf.mxu0
        %v2280 = vadd.f32 %v2260, %v2279
        %2281 = vdwg.mxu0
        %2282 = vmatpush.msra.mxu0 %v1000
        %2283 = vmatpush.msra.mxu0 %v999
        %2284 = vmatpush.msra.mxu0 %v998
        %2285 = vmatpush.msra.mxu0 %v997
        %2286 = vmatpush.msra.mxu0 %v996
        %2287 = vmatpush.msra.mxu0 %v995
        %2288 = vmatpush.msra.mxu0 %v994
        %2289 = vmatpush.msra.mxu0 %v993
        %2290 = vmatpush.msra.mxu0 %v992
        %2291 = vmatpush.msra.mxu0 %v991
        %2292 = vmatpush.msra.mxu0 %v990
        %2293 = vmatpush.msra.mxu0 %v989
        %2294 = vmatpush.msra.mxu0 %v988
        %2295 = vmatpush.msra.mxu0 %v987
        %2296 = vmatpush.msra.mxu0 %v986
        %2297 = vmatpush.msra.mxu0 %v985
        %2298 = vmatmul.f32.gmra.mxu0 %v1614
        %v2299 = vpop.f32.mrf.mxu0
        %v2300 = vadd.f32 %v2280, %v2299
        %2301 = vdwg.mxu0
        %2302 = vmatpush.msra.mxu0 %v1016
        %2303 = vmatpush.msra.mxu0 %v1015
        %2304 = vmatpush.msra.mxu0 %v1014
        %2305 = vmatpush.msra.mxu0 %v1013
        %2306 = vmatpush.msra.mxu0 %v1012
        %2307 = vmatpush.msra.mxu0 %v1011
        %2308 = vmatpush.msra.mxu0 %v1010
        %2309 = vmatpush.msra.mxu0 %v1009
        %2310 = vmatpush.msra.mxu0 %v1008
        %2311 = vmatpush.msra.mxu0 %v1007
        %2312 = vmatpush.msra.mxu0 %v1006
        %2313 = vmatpush.msra.mxu0 %v1005
        %2314 = vmatpush.msra.mxu0 %v1004
        %2315 = vmatpush.msra.mxu0 %v1003
        %2316 = vmatpush.msra.mxu0 %v1002
        %2317 = vmatpush.msra.mxu0 %v1001
        %2318 = vmatmul.f32.gmra.mxu0 %v1615
        %v2319 = vpop.f32.mrf.mxu0
        %v2320 = vadd.f32 %v2300, %v2319
        %2321 = vdwg.mxu0
        %2322 = vmatpush.msra.mxu0 %v1032
        %2323 = vmatpush.msra.mxu0 %v1031
        %2324 = vmatpush.msra.mxu0 %v1030
        %2325 = vmatpush.msra.mxu0 %v1029
        %2326 = vmatpush.msra.mxu0 %v1028
        %2327 = vmatpush.msra.mxu0 %v1027
        %2328 = vmatpush.msra.mxu0 %v1026
        %2329 = vmatpush.msra.mxu0 %v1025
        %2330 = vmatpush.msra.mxu0 %v1024
        %2331 = vmatpush.msra.mxu0 %v1023
        %2332 = vmatpush.msra.mxu0 %v1022
        %2333 = vmatpush.msra.mxu0 %v1021
        %2334 = vmatpush.msra.mxu0 %v1020
        %2335 = vmatpush.msra.mxu0 %v1019
        %2336 = vmatpush.msra.mxu0 %v1018
        %2337 = vmatpush.msra.mxu0 %v1017
        %2338 = vmatmul.f32.gmra.mxu0 %v1616
        %v2339 = vpop.f32.mrf.mxu0
        %v2340 = vadd.f32 %v2320, %v2339
        %2341 = vdwg.mxu0
        %2342 = vmatpush.msra.mxu0 %v1048
        %2343 = vmatpush.msra.mxu0 %v1047
        %2344 = vmatpush.msra.mxu0 %v1046
        %2345 = vmatpush.msra.mxu0 %v1045
        %2346 = vmatpush.msra.mxu0 %v1044
        %2347 = vmatpush.msra.mxu0 %v1043
        %2348 = vmatpush.msra.mxu0 %v1042
        %2349 = vmatpush.msra.mxu0 %v1041
        %2350 = vmatpush.msra.mxu0 %v1040
        %2351 = vmatpush.msra.mxu0 %v1039
        %2352 = vmatpush.msra.mxu0 %v1038
        %2353 = vmatpush.msra.mxu0 %v1037
        %2354 = vmatpush.msra.mxu0 %v1036
        %2355 = vmatpush.msra.mxu0 %v1035
        %2356 = vmatpush.msra.mxu0 %v1034
        %2357 = vmatpush.msra.mxu0 %v1033
        %2358 = vmatmul.f32.gmra.mxu0 %v1617
        %v2359 = vpop.f32.mrf.mxu0
        %v2360 = vadd.f32 %v2340, %v2359
        %2361 = vdwg.mxu0
        %2362 = vmatpush.msra.mxu0 %v1064
        %2363 = vmatpush.msra.mxu0 %v1063
        %2364 = vmatpush.msra.mxu0 %v1062
        %2365 = vmatpush.msra.mxu0 %v1061
        %2366 = vmatpush.msra.mxu0 %v1060
        %2367 = vmatpush.msra.mxu0 %v1059
        %2368 = vmatpush.msra.mxu0 %v1058
        %2369 = vmatpush.msra.mxu0 %v1057
        %2370 = vmatpush.msra.mxu0 %v1056
        %2371 = vmatpush.msra.mxu0 %v1055
        %2372 = vmatpush.msra.mxu0 %v1054
        %2373 = vmatpush.msra.mxu0 %v1053
        %2374 = vmatpush.msra.mxu0 %v1052
        %2375 = vmatpush.msra.mxu0 %v1051
        %2376 = vmatpush.msra.mxu0 %v1050
        %2377 = vmatpush.msra.mxu0 %v1049
        %2378 = vmatmul.f32.gmra.mxu0 %v1620
        %v2379 = vpop.f32.mrf.mxu0
        %v2380 = vadd.f32 %v2360, %v2379
        %2381 = vdwg.mxu0
        %2382 = vmatpush.msra.mxu0 %v1080
        %2383 = vmatpush.msra.mxu0 %v1079
        %2384 = vmatpush.msra.mxu0 %v1078
        %2385 = vmatpush.msra.mxu0 %v1077
        %2386 = vmatpush.msra.mxu0 %v1076
        %2387 = vmatpush.msra.mxu0 %v1075
        %2388 = vmatpush.msra.mxu0 %v1074
        %2389 = vmatpush.msra.mxu0 %v1073
        %2390 = vmatpush.msra.mxu0 %v1072
        %2391 = vmatpush.msra.mxu0 %v1071
        %2392 = vmatpush.msra.mxu0 %v1070
        %2393 = vmatpush.msra.mxu0 %v1069
        %2394 = vmatpush.msra.mxu0 %v1068
        %2395 = vmatpush.msra.mxu0 %v1067
        %2396 = vmatpush.msra.mxu0 %v1066
        %2397 = vmatpush.msra.mxu0 %v1065
        %2398 = vmatmul.f32.gmra.mxu0 %v1621
        %v2399 = vpop.f32.mrf.mxu0
        %v2400 = vadd.f32 %v2380, %v2399
        %2401 = vdwg.mxu0
        %2402 = vmatpush.msra.mxu0 %v1096
        %2403 = vmatpush.msra.mxu0 %v1095
        %2404 = vmatpush.msra.mxu0 %v1094
        %2405 = vmatpush.msra.mxu0 %v1093
        %2406 = vmatpush.msra.mxu0 %v1092
        %2407 = vmatpush.msra.mxu0 %v1091
        %2408 = vmatpush.msra.mxu0 %v1090
        %2409 = vmatpush.msra.mxu0 %v1089
        %2410 = vmatpush.msra.mxu0 %v1088
        %2411 = vmatpush.msra.mxu0 %v1087
        %2412 = vmatpush.msra.mxu0 %v1086
        %2413 = vmatpush.msra.mxu0 %v1085
        %2414 = vmatpush.msra.mxu0 %v1084
        %2415 = vmatpush.msra.mxu0 %v1083
        %2416 = vmatpush.msra.mxu0 %v1082
        %2417 = vmatpush.msra.mxu0 %v1081
        %2418 = vmatmul.f32.gmra.mxu0 %v1622
        %v2419 = vpop.f32.mrf.mxu0
        %v2420 = vadd.f32 %v2400, %v2419
        %2421 = vdwg.mxu0
        %2422 = vmatpush.msra.mxu0 %v1112
        %2423 = vmatpush.msra.mxu0 %v1111
        %2424 = vmatpush.msra.mxu0 %v1110
        %2425 = vmatpush.msra.mxu0 %v1109
        %2426 = vmatpush.msra.mxu0 %v1108
        %2427 = vmatpush.msra.mxu0 %v1107
        %2428 = vmatpush.msra.mxu0 %v1106
        %2429 = vmatpush.msra.mxu0 %v1105
        %2430 = vmatpush.msra.mxu0 %v1104
        %2431 = vmatpush.msra.mxu0 %v1103
        %2432 = vmatpush.msra.mxu0 %v1102
        %2433 = vmatpush.msra.mxu0 %v1101
        %2434 = vmatpush.msra.mxu0 %v1100
        %2435 = vmatpush.msra.mxu0 %v1099
        %2436 = vmatpush.msra.mxu0 %v1098
        %2437 = vmatpush.msra.mxu0 %v1097
        %2438 = vmatmul.f32.gmra.mxu0 %v1623
        %v2439 = vpop.f32.mrf.mxu0
        %v2440 = vadd.f32 %v2420, %v2439
        %2441 = vdwg.mxu0
        %2442 = vmatpush.msra.mxu0 %v1128
        %2443 = vmatpush.msra.mxu0 %v1127
        %2444 = vmatpush.msra.mxu0 %v1126
        %2445 = vmatpush.msra.mxu0 %v1125
        %2446 = vmatpush.msra.mxu0 %v1124
        %2447 = vmatpush.msra.mxu0 %v1123
        %2448 = vmatpush.msra.mxu0 %v1122
        %2449 = vmatpush.msra.mxu0 %v1121
        %2450 = vmatpush.msra.mxu0 %v1120
        %2451 = vmatpush.msra.mxu0 %v1119
        %2452 = vmatpush.msra.mxu0 %v1118
        %2453 = vmatpush.msra.mxu0 %v1117
        %2454 = vmatpush.msra.mxu0 %v1116
        %2455 = vmatpush.msra.mxu0 %v1115
        %2456 = vmatpush.msra.mxu0 %v1114
        %2457 = vmatpush.msra.mxu0 %v1113
        %2458 = vmatmul.f32.gmra.mxu0 %v1624
        %v2459 = vpop.f32.mrf.mxu0
        %v2460 = vadd.f32 %v2440, %v2459
        %2461 = vdwg.mxu0
        %2462 = vmatpush.msra.mxu0 %v1144
        %2463 = vmatpush.msra.mxu0 %v1143
        %2464 = vmatpush.msra.mxu0 %v1142
        %2465 = vmatpush.msra.mxu0 %v1141
        %2466 = vmatpush.msra.mxu0 %v1140
        %2467 = vmatpush.msra.mxu0 %v1139
        %2468 = vmatpush.msra.mxu0 %v1138
        %2469 = vmatpush.msra.mxu0 %v1137
        %2470 = vmatpush.msra.mxu0 %v1136
        %2471 = vmatpush.msra.mxu0 %v1135
        %2472 = vmatpush.msra.mxu0 %v1134
        %2473 = vmatpush.msra.mxu0 %v1133
        %2474 = vmatpush.msra.mxu0 %v1132
        %2475 = vmatpush.msra.mxu0 %v1131
        %2476 = vmatpush.msra.mxu0 %v1130
        %2477 = vmatpush.msra.mxu0 %v1129
        %2478 = vmatmul.f32.gmra.mxu0 %v1625
        %v2479 = vpop.f32.mrf.mxu0
        %v2480 = vadd.f32 %v2460, %v2479
        %2481 = vdwg.mxu0
        %2482 = vmatpush.msra.mxu0 %v1160
        %2483 = vmatpush.msra.mxu0 %v1159
        %2484 = vmatpush.msra.mxu0 %v1158
        %2485 = vmatpush.msra.mxu0 %v1157
        %2486 = vmatpush.msra.mxu0 %v1156
        %2487 = vmatpush.msra.mxu0 %v1155
        %2488 = vmatpush.msra.mxu0 %v1154
        %2489 = vmatpush.msra.mxu0 %v1153
        %2490 = vmatpush.msra.mxu0 %v1152
        %2491 = vmatpush.msra.mxu0 %v1151
        %2492 = vmatpush.msra.mxu0 %v1150
        %2493 = vmatpush.msra.mxu0 %v1149
        %2494 = vmatpush.msra.mxu0 %v1148
        %2495 = vmatpush.msra.mxu0 %v1147
        %2496 = vmatpush.msra.mxu0 %v1146
        %2497 = vmatpush.msra.mxu0 %v1145
        %2498 = vmatmul.f32.gmra.mxu0 %v1626
        %v2499 = vpop.f32.mrf.mxu0
        %v2500 = vadd.f32 %v2480, %v2499
        %2501 = vdwg.mxu0
        %2502 = vmatpush.msra.mxu0 %v1176
        %2503 = vmatpush.msra.mxu0 %v1175
        %2504 = vmatpush.msra.mxu0 %v1174
        %2505 = vmatpush.msra.mxu0 %v1173
        %2506 = vmatpush.msra.mxu0 %v1172
        %2507 = vmatpush.msra.mxu0 %v1171
        %2508 = vmatpush.msra.mxu0 %v1170
        %2509 = vmatpush.msra.mxu0 %v1169
        %2510 = vmatpush.msra.mxu0 %v1168
        %2511 = vmatpush.msra.mxu0 %v1167
        %2512 = vmatpush.msra.mxu0 %v1166
        %2513 = vmatpush.msra.mxu0 %v1165
        %2514 = vmatpush.msra.mxu0 %v1164
        %2515 = vmatpush.msra.mxu0 %v1163
        %2516 = vmatpush.msra.mxu0 %v1162
        %2517 = vmatpush.msra.mxu0 %v1161
        %2518 = vmatmul.f32.gmra.mxu0 %v1627
        %v2519 = vpop.f32.mrf.mxu0
        %v2520 = vadd.f32 %v2500, %v2519
        %2521 = vdwg.mxu0
        %2522 = vmatpush.msra.mxu0 %v1192
        %2523 = vmatpush.msra.mxu0 %v1191
        %2524 = vmatpush.msra.mxu0 %v1190
        %2525 = vmatpush.msra.mxu0 %v1189
        %2526 = vmatpush.msra.mxu0 %v1188
        %2527 = vmatpush.msra.mxu0 %v1187
        %2528 = vmatpush.msra.mxu0 %v1186
        %2529 = vmatpush.msra.mxu0 %v1185
        %2530 = vmatpush.msra.mxu0 %v1184
        %2531 = vmatpush.msra.mxu0 %v1183
        %2532 = vmatpush.msra.mxu0 %v1182
        %2533 = vmatpush.msra.mxu0 %v1181
        %2534 = vmatpush.msra.mxu0 %v1180
        %2535 = vmatpush.msra.mxu0 %v1179
        %2536 = vmatpush.msra.mxu0 %v1178
        %2537 = vmatpush.msra.mxu0 %v1177
        %2538 = vmatmul.f32.gmra.mxu0 %v1630
        %v2539 = vpop.f32.mrf.mxu0
        %v2540 = vadd.f32 %v2520, %v2539
        %2541 = vdwg.mxu0
        %2542 = vmatpush.msra.mxu0 %v1208
        %2543 = vmatpush.msra.mxu0 %v1207
        %2544 = vmatpush.msra.mxu0 %v1206
        %2545 = vmatpush.msra.mxu0 %v1205
        %2546 = vmatpush.msra.mxu0 %v1204
        %2547 = vmatpush.msra.mxu0 %v1203
        %2548 = vmatpush.msra.mxu0 %v1202
        %2549 = vmatpush.msra.mxu0 %v1201
        %2550 = vmatpush.msra.mxu0 %v1200
        %2551 = vmatpush.msra.mxu0 %v1199
        %2552 = vmatpush.msra.mxu0 %v1198
        %2553 = vmatpush.msra.mxu0 %v1197
        %2554 = vmatpush.msra.mxu0 %v1196
        %2555 = vmatpush.msra.mxu0 %v1195
        %2556 = vmatpush.msra.mxu0 %v1194
        %2557 = vmatpush.msra.mxu0 %v1193
        %2558 = vmatmul.f32.gmra.mxu0 %v1631
        %v2559 = vpop.f32.mrf.mxu0
        %v2560 = vadd.f32 %v2540, %v2559
        %2561 = vdwg.mxu0
        %2562 = vmatpush.msra.mxu0 %v1224
        %2563 = vmatpush.msra.mxu0 %v1223
        %2564 = vmatpush.msra.mxu0 %v1222
        %2565 = vmatpush.msra.mxu0 %v1221
        %2566 = vmatpush.msra.mxu0 %v1220
        %2567 = vmatpush.msra.mxu0 %v1219
        %2568 = vmatpush.msra.mxu0 %v1218
        %2569 = vmatpush.msra.mxu0 %v1217
        %2570 = vmatpush.msra.mxu0 %v1216
        %2571 = vmatpush.msra.mxu0 %v1215
        %2572 = vmatpush.msra.mxu0 %v1214
        %2573 = vmatpush.msra.mxu0 %v1213
        %2574 = vmatpush.msra.mxu0 %v1212
        %2575 = vmatpush.msra.mxu0 %v1211
        %2576 = vmatpush.msra.mxu0 %v1210
        %2577 = vmatpush.msra.mxu0 %v1209
        %2578 = vmatmul.f32.gmra.mxu0 %v1632
        %v2579 = vpop.f32.mrf.mxu0
        %v2580 = vadd.f32 %v2560, %v2579
        %2581 = vdwg.mxu0
        %2582 = vmatpush.msra.mxu0 %v1240
        %2583 = vmatpush.msra.mxu0 %v1239
        %2584 = vmatpush.msra.mxu0 %v1238
        %2585 = vmatpush.msra.mxu0 %v1237
        %2586 = vmatpush.msra.mxu0 %v1236
        %2587 = vmatpush.msra.mxu0 %v1235
        %2588 = vmatpush.msra.mxu0 %v1234
        %2589 = vmatpush.msra.mxu0 %v1233
        %2590 = vmatpush.msra.mxu0 %v1232
        %2591 = vmatpush.msra.mxu0 %v1231
        %2592 = vmatpush.msra.mxu0 %v1230
        %2593 = vmatpush.msra.mxu0 %v1229
        %2594 = vmatpush.msra.mxu0 %v1228
        %2595 = vmatpush.msra.mxu0 %v1227
        %2596 = vmatpush.msra.mxu0 %v1226
        %2597 = vmatpush.msra.mxu0 %v1225
        %2598 = vmatmul.f32.gmra.mxu0 %v1633
        %v2599 = vpop.f32.mrf.mxu0
        %v2600 = vadd.f32 %v2580, %v2599
        %2601 = vdwg.mxu0
        %2602 = vmatpush.msra.mxu0 %v1256
        %2603 = vmatpush.msra.mxu0 %v1255
        %2604 = vmatpush.msra.mxu0 %v1254
        %2605 = vmatpush.msra.mxu0 %v1253
        %2606 = vmatpush.msra.mxu0 %v1252
        %2607 = vmatpush.msra.mxu0 %v1251
        %2608 = vmatpush.msra.mxu0 %v1250
        %2609 = vmatpush.msra.mxu0 %v1249
        %2610 = vmatpush.msra.mxu0 %v1248
        %2611 = vmatpush.msra.mxu0 %v1247
        %2612 = vmatpush.msra.mxu0 %v1246
        %2613 = vmatpush.msra.mxu0 %v1245
        %2614 = vmatpush.msra.mxu0 %v1244
        %2615 = vmatpush.msra.mxu0 %v1243
        %2616 = vmatpush.msra.mxu0 %v1242
        %2617 = vmatpush.msra.mxu0 %v1241
        %2618 = vmatmul.f32.gmra.mxu0 %v1634
        %v2619 = vpop.f32.mrf.mxu0
        %v2620 = vadd.f32 %v2600, %v2619
        %2621 = vdwg.mxu0
        %2622 = vmatpush.msra.mxu0 %v1272
        %2623 = vmatpush.msra.mxu0 %v1271
        %2624 = vmatpush.msra.mxu0 %v1270
        %2625 = vmatpush.msra.mxu0 %v1269
        %2626 = vmatpush.msra.mxu0 %v1268
        %2627 = vmatpush.msra.mxu0 %v1267
        %2628 = vmatpush.msra.mxu0 %v1266
        %2629 = vmatpush.msra.mxu0 %v1265
        %2630 = vmatpush.msra.mxu0 %v1264
        %2631 = vmatpush.msra.mxu0 %v1263
        %2632 = vmatpush.msra.mxu0 %v1262
        %2633 = vmatpush.msra.mxu0 %v1261
        %2634 = vmatpush.msra.mxu0 %v1260
        %2635 = vmatpush.msra.mxu0 %v1259
        %2636 = vmatpush.msra.mxu0 %v1258
        %2637 = vmatpush.msra.mxu0 %v1257
        %2638 = vmatmul.f32.gmra.mxu0 %v1635
        %v2639 = vpop.f32.mrf.mxu0
        %v2640 = vadd.f32 %v2620, %v2639
        %2641 = vdwg.mxu0
        %2642 = vmatpush.msra.mxu0 %v1288
        %2643 = vmatpush.msra.mxu0 %v1287
        %2644 = vmatpush.msra.mxu0 %v1286
        %2645 = vmatpush.msra.mxu0 %v1285
        %2646 = vmatpush.msra.mxu0 %v1284
        %2647 = vmatpush.msra.mxu0 %v1283
        %2648 = vmatpush.msra.mxu0 %v1282
        %2649 = vmatpush.msra.mxu0 %v1281
        %2650 = vmatpush.msra.mxu0 %v1280
        %2651 = vmatpush.msra.mxu0 %v1279
        %2652 = vmatpush.msra.mxu0 %v1278
        %2653 = vmatpush.msra.mxu0 %v1277
        %2654 = vmatpush.msra.mxu0 %v1276
        %2655 = vmatpush.msra.mxu0 %v1275
        %2656 = vmatpush.msra.mxu0 %v1274
        %2657 = vmatpush.msra.mxu0 %v1273
        %2658 = vmatmul.f32.gmra.mxu0 %v1636
        %v2659 = vpop.f32.mrf.mxu0
        %v2660 = vadd.f32 %v2640, %v2659
        %2661 = vdwg.mxu0
        %2662 = vmatpush.msra.mxu0 %v1304
        %2663 = vmatpush.msra.mxu0 %v1303
        %2664 = vmatpush.msra.mxu0 %v1302
        %2665 = vmatpush.msra.mxu0 %v1301
        %2666 = vmatpush.msra.mxu0 %v1300
        %2667 = vmatpush.msra.mxu0 %v1299
        %2668 = vmatpush.msra.mxu0 %v1298
        %2669 = vmatpush.msra.mxu0 %v1297
        %2670 = vmatpush.msra.mxu0 %v1296
        %2671 = vmatpush.msra.mxu0 %v1295
        %2672 = vmatpush.msra.mxu0 %v1294
        %2673 = vmatpush.msra.mxu0 %v1293
        %2674 = vmatpush.msra.mxu0 %v1292
        %2675 = vmatpush.msra.mxu0 %v1291
        %2676 = vmatpush.msra.mxu0 %v1290
        %2677 = vmatpush.msra.mxu0 %v1289
        %2678 = vmatmul.f32.gmra.mxu0 %v1637
        %v2679 = vpop.f32.mrf.mxu0
        %v2680 = vadd.f32 %v2660, %v2679
        %2681 = vdwg.mxu0
        %2682 = vmatpush.msra.mxu0 %v1320
        %2683 = vmatpush.msra.mxu0 %v1319
        %2684 = vmatpush.msra.mxu0 %v1318
        %2685 = vmatpush.msra.mxu0 %v1317
        %2686 = vmatpush.msra.mxu0 %v1316
        %2687 = vmatpush.msra.mxu0 %v1315
        %2688 = vmatpush.msra.mxu0 %v1314
        %2689 = vmatpush.msra.mxu0 %v1313
        %2690 = vmatpush.msra.mxu0 %v1312
        %2691 = vmatpush.msra.mxu0 %v1311
        %2692 = vmatpush.msra.mxu0 %v1310
        %2693 = vmatpush.msra.mxu0 %v1309
        %2694 = vmatpush.msra.mxu0 %v1308
        %2695 = vmatpush.msra.mxu0 %v1307
        %2696 = vmatpush.msra.mxu0 %v1306
        %2697 = vmatpush.msra.mxu0 %v1305
        %2698 = vmatmul.f32.gmra.mxu0 %v1640
        %v2699 = vpop.f32.mrf.mxu0
        %v2700 = vadd.f32 %v2680, %v2699
        %2701 = vdwg.mxu0
        %2702 = vmatpush.msra.mxu0 %v1336
        %2703 = vmatpush.msra.mxu0 %v1335
        %2704 = vmatpush.msra.mxu0 %v1334
        %2705 = vmatpush.msra.mxu0 %v1333
        %2706 = vmatpush.msra.mxu0 %v1332
        %2707 = vmatpush.msra.mxu0 %v1331
        %2708 = vmatpush.msra.mxu0 %v1330
        %2709 = vmatpush.msra.mxu0 %v1329
        %2710 = vmatpush.msra.mxu0 %v1328
        %2711 = vmatpush.msra.mxu0 %v1327
        %2712 = vmatpush.msra.mxu0 %v1326
        %2713 = vmatpush.msra.mxu0 %v1325
        %2714 = vmatpush.msra.mxu0 %v1324
        %2715 = vmatpush.msra.mxu0 %v1323
        %2716 = vmatpush.msra.mxu0 %v1322
        %2717 = vmatpush.msra.mxu0 %v1321
        %2718 = vmatmul.f32.gmra.mxu0 %v1641
        %v2719 = vpop.f32.mrf.mxu0
        %v2720 = vadd.f32 %v2700, %v2719
        %2721 = vdwg.mxu0
        %2722 = vmatpush.msra.mxu0 %v1352
        %2723 = vmatpush.msra.mxu0 %v1351
        %2724 = vmatpush.msra.mxu0 %v1350
        %2725 = vmatpush.msra.mxu0 %v1349
        %2726 = vmatpush.msra.mxu0 %v1348
        %2727 = vmatpush.msra.mxu0 %v1347
        %2728 = vmatpush.msra.mxu0 %v1346
        %2729 = vmatpush.msra.mxu0 %v1345
        %2730 = vmatpush.msra.mxu0 %v1344
        %2731 = vmatpush.msra.mxu0 %v1343
        %2732 = vmatpush.msra.mxu0 %v1342
        %2733 = vmatpush.msra.mxu0 %v1341
        %2734 = vmatpush.msra.mxu0 %v1340
        %2735 = vmatpush.msra.mxu0 %v1339
        %2736 = vmatpush.msra.mxu0 %v1338
        %2737 = vmatpush.msra.mxu0 %v1337
        %2738 = vmatmul.f32.gmra.mxu0 %v1642
        %v2739 = vpop.f32.mrf.mxu0
        %v2740 = vadd.f32 %v2720, %v2739
        %2741 = vdwg.mxu0
        %2742 = vmatpush.msra.mxu0 %v1368
        %2743 = vmatpush.msra.mxu0 %v1367
        %2744 = vmatpush.msra.mxu0 %v1366
        %2745 = vmatpush.msra.mxu0 %v1365
        %2746 = vmatpush.msra.mxu0 %v1364
        %2747 = vmatpush.msra.mxu0 %v1363
        %2748 = vmatpush.msra.mxu0 %v1362
        %2749 = vmatpush.msra.mxu0 %v1361
        %2750 = vmatpush.msra.mxu0 %v1360
        %2751 = vmatpush.msra.mxu0 %v1359
        %2752 = vmatpush.msra.mxu0 %v1358
        %2753 = vmatpush.msra.mxu0 %v1357
        %2754 = vmatpush.msra.mxu0 %v1356
        %2755 = vmatpush.msra.mxu0 %v1355
        %2756 = vmatpush.msra.mxu0 %v1354
        %2757 = vmatpush.msra.mxu0 %v1353
        %2758 = vmatmul.f32.gmra.mxu0 %v1643
        %v2759 = vpop.f32.mrf.mxu0
        %v2760 = vadd.f32 %v2740, %v2759
        %2761 = vdwg.mxu0
        %2762 = vmatpush.msra.mxu0 %v1384
        %2763 = vmatpush.msra.mxu0 %v1383
        %2764 = vmatpush.msra.mxu0 %v1382
        %2765 = vmatpush.msra.mxu0 %v1381
        %2766 = vmatpush.msra.mxu0 %v1380
        %2767 = vmatpush.msra.mxu0 %v1379
        %2768 = vmatpush.msra.mxu0 %v1378
        %2769 = vmatpush.msra.mxu0 %v1377
        %2770 = vmatpush.msra.mxu0 %v1376
        %2771 = vmatpush.msra.mxu0 %v1375
        %2772 = vmatpush.msra.mxu0 %v1374
        %2773 = vmatpush.msra.mxu0 %v1373
        %2774 = vmatpush.msra.mxu0 %v1372
        %2775 = vmatpush.msra.mxu0 %v1371
        %2776 = vmatpush.msra.mxu0 %v1370
        %2777 = vmatpush.msra.mxu0 %v1369
        %2778 = vmatmul.f32.gmra.mxu0 %v1644
        %v2779 = vpop.f32.mrf.mxu0
        %v2780 = vadd.f32 %v2760, %v2779
        %2781 = vdwg.mxu0
        %2782 = vmatpush.msra.mxu0 %v1400
        %2783 = vmatpush.msra.mxu0 %v1399
        %2784 = vmatpush.msra.mxu0 %v1398
        %2785 = vmatpush.msra.mxu0 %v1397
        %2786 = vmatpush.msra.mxu0 %v1396
        %2787 = vmatpush.msra.mxu0 %v1395
        %2788 = vmatpush.msra.mxu0 %v1394
        %2789 = vmatpush.msra.mxu0 %v1393
        %2790 = vmatpush.msra.mxu0 %v1392
        %2791 = vmatpush.msra.mxu0 %v1391
        %2792 = vmatpush.msra.mxu0 %v1390
        %2793 = vmatpush.msra.mxu0 %v1389
        %2794 = vmatpush.msra.mxu0 %v1388
        %2795 = vmatpush.msra.mxu0 %v1387
        %2796 = vmatpush.msra.mxu0 %v1386
        %2797 = vmatpush.msra.mxu0 %v1385
        %2798 = vmatmul.f32.gmra.mxu0 %v1645
        %v2799 = vpop.f32.mrf.mxu0
        %v2800 = vadd.f32 %v2780, %v2799
        %2801 = vdwg.mxu0
        %2802 = vmatpush.msra.mxu0 %v1416
        %2803 = vmatpush.msra.mxu0 %v1415
        %2804 = vmatpush.msra.mxu0 %v1414
        %2805 = vmatpush.msra.mxu0 %v1413
        %2806 = vmatpush.msra.mxu0 %v1412
        %2807 = vmatpush.msra.mxu0 %v1411
        %2808 = vmatpush.msra.mxu0 %v1410
        %2809 = vmatpush.msra.mxu0 %v1409
        %2810 = vmatpush.msra.mxu0 %v1408
        %2811 = vmatpush.msra.mxu0 %v1407
        %2812 = vmatpush.msra.mxu0 %v1406
        %2813 = vmatpush.msra.mxu0 %v1405
        %2814 = vmatpush.msra.mxu0 %v1404
        %2815 = vmatpush.msra.mxu0 %v1403
        %2816 = vmatpush.msra.mxu0 %v1402
        %2817 = vmatpush.msra.mxu0 %v1401
        %2818 = vmatmul.f32.gmra.mxu0 %v1646
        %v2819 = vpop.f32.mrf.mxu0
        %v2820 = vadd.f32 %v2800, %v2819
        %2821 = vdwg.mxu0
        %2822 = vmatpush.msra.mxu0 %v1432
        %2823 = vmatpush.msra.mxu0 %v1431
        %2824 = vmatpush.msra.mxu0 %v1430
        %2825 = vmatpush.msra.mxu0 %v1429
        %2826 = vmatpush.msra.mxu0 %v1428
        %2827 = vmatpush.msra.mxu0 %v1427
        %2828 = vmatpush.msra.mxu0 %v1426
        %2829 = vmatpush.msra.mxu0 %v1425
        %2830 = vmatpush.msra.mxu0 %v1424
        %2831 = vmatpush.msra.mxu0 %v1423
        %2832 = vmatpush.msra.mxu0 %v1422
        %2833 = vmatpush.msra.mxu0 %v1421
        %2834 = vmatpush.msra.mxu0 %v1420
        %2835 = vmatpush.msra.mxu0 %v1419
        %2836 = vmatpush.msra.mxu0 %v1418
        %2837 = vmatpush.msra.mxu0 %v1417
        %2838 = vmatmul.f32.gmra.mxu0 %v1647
        %v2839 = vpop.f32.mrf.mxu0
        %v2840 = vadd.f32 %v2820, %v2839
        %2841 = vdwg.mxu0
        %2842 = vmatpush.msra.mxu0 %v1448
        %2843 = vmatpush.msra.mxu0 %v1447
        %2844 = vmatpush.msra.mxu0 %v1446
        %2845 = vmatpush.msra.mxu0 %v1445
        %2846 = vmatpush.msra.mxu0 %v1444
        %2847 = vmatpush.msra.mxu0 %v1443
        %2848 = vmatpush.msra.mxu0 %v1442
        %2849 = vmatpush.msra.mxu0 %v1441
        %2850 = vmatpush.msra.mxu0 %v1440
        %2851 = vmatpush.msra.mxu0 %v1439
        %2852 = vmatpush.msra.mxu0 %v1438
        %2853 = vmatpush.msra.mxu0 %v1437
        %2854 = vmatpush.msra.mxu0 %v1436
        %2855 = vmatpush.msra.mxu0 %v1435
        %2856 = vmatpush.msra.mxu0 %v1434
        %2857 = vmatpush.msra.mxu0 %v1433
        %2858 = vmatmul.f32.gmra.mxu0 %v1650
        %v2859 = vpop.f32.mrf.mxu0
        %v2860 = vadd.f32 %v2840, %v2859
        %2861 = vdwg.mxu0
        %2862 = vmatpush.msra.mxu0 %v1464
        %2863 = vmatpush.msra.mxu0 %v1463
        %2864 = vmatpush.msra.mxu0 %v1462
        %2865 = vmatpush.msra.mxu0 %v1461
        %2866 = vmatpush.msra.mxu0 %v1460
        %2867 = vmatpush.msra.mxu0 %v1459
        %2868 = vmatpush.msra.mxu0 %v1458
        %2869 = vmatpush.msra.mxu0 %v1457
        %2870 = vmatpush.msra.mxu0 %v1456
        %2871 = vmatpush.msra.mxu0 %v1455
        %2872 = vmatpush.msra.mxu0 %v1454
        %2873 = vmatpush.msra.mxu0 %v1453
        %2874 = vmatpush.msra.mxu0 %v1452
        %2875 = vmatpush.msra.mxu0 %v1451
        %2876 = vmatpush.msra.mxu0 %v1450
        %2877 = vmatpush.msra.mxu0 %v1449
        %2878 = vmatmul.f32.gmra.mxu0 %v1651
        %v2879 = vpop.f32.mrf.mxu0
        %v2880 = vadd.f32 %v2860, %v2879
        %2881 = vdwg.mxu0
        %2882 = vmatpush.msra.mxu0 %v1480
        %2883 = vmatpush.msra.mxu0 %v1479
        %2884 = vmatpush.msra.mxu0 %v1478
        %2885 = vmatpush.msra.mxu0 %v1477
        %2886 = vmatpush.msra.mxu0 %v1476
        %2887 = vmatpush.msra.mxu0 %v1475
        %2888 = vmatpush.msra.mxu0 %v1474
        %2889 = vmatpush.msra.mxu0 %v1473
        %2890 = vmatpush.msra.mxu0 %v1472
        %2891 = vmatpush.msra.mxu0 %v1471
        %2892 = vmatpush.msra.mxu0 %v1470
        %2893 = vmatpush.msra.mxu0 %v1469
        %2894 = vmatpush.msra.mxu0 %v1468
        %2895 = vmatpush.msra.mxu0 %v1467
        %2896 = vmatpush.msra.mxu0 %v1466
        %2897 = vmatpush.msra.mxu0 %v1465
        %2898 = vmatmul.f32.gmra.mxu0 %v1652
        %v2899 = vpop.f32.mrf.mxu0
        %v2900 = vadd.f32 %v2880, %v2899
        %2901 = vdwg.mxu0
        %2902 = vmatpush.msra.mxu0 %v1496
        %2903 = vmatpush.msra.mxu0 %v1495
        %2904 = vmatpush.msra.mxu0 %v1494
        %2905 = vmatpush.msra.mxu0 %v1493
        %2906 = vmatpush.msra.mxu0 %v1492
        %2907 = vmatpush.msra.mxu0 %v1491
        %2908 = vmatpush.msra.mxu0 %v1490
        %2909 = vmatpush.msra.mxu0 %v1489
        %2910 = vmatpush.msra.mxu0 %v1488
        %2911 = vmatpush.msra.mxu0 %v1487
        %2912 = vmatpush.msra.mxu0 %v1486
        %2913 = vmatpush.msra.mxu0 %v1485
        %2914 = vmatpush.msra.mxu0 %v1484
        %2915 = vmatpush.msra.mxu0 %v1483
        %2916 = vmatpush.msra.mxu0 %v1482
        %2917 = vmatpush.msra.mxu0 %v1481
        %2918 = vmatmul.f32.gmra.mxu0 %v1653
        %v2919 = vpop.f32.mrf.mxu0
        %v2920 = vadd.f32 %v2900, %v2919
        %2921 = vdwg.mxu0
        %2922 = vmatpush.msra.mxu0 %v1512
        %2923 = vmatpush.msra.mxu0 %v1511
        %2924 = vmatpush.msra.mxu0 %v1510
        %2925 = vmatpush.msra.mxu0 %v1509
        %2926 = vmatpush.msra.mxu0 %v1508
        %2927 = vmatpush.msra.mxu0 %v1507
        %2928 = vmatpush.msra.mxu0 %v1506
        %2929 = vmatpush.msra.mxu0 %v1505
        %2930 = vmatpush.msra.mxu0 %v1504
        %2931 = vmatpush.msra.mxu0 %v1503
        %2932 = vmatpush.msra.mxu0 %v1502
        %2933 = vmatpush.msra.mxu0 %v1501
        %2934 = vmatpush.msra.mxu0 %v1500
        %2935 = vmatpush.msra.mxu0 %v1499
        %2936 = vmatpush.msra.mxu0 %v1498
        %2937 = vmatpush.msra.mxu0 %v1497
        %2938 = vmatmul.f32.gmra.mxu0 %v1654
        %v2939 = vpop.f32.mrf.mxu0
        %v2940 = vadd.f32 %v2920, %v2939
        %2941 = vdwg.mxu0
        %2942 = vmatpush.msra.mxu0 %v1528
        %2943 = vmatpush.msra.mxu0 %v1527
        %2944 = vmatpush.msra.mxu0 %v1526
        %2945 = vmatpush.msra.mxu0 %v1525
        %2946 = vmatpush.msra.mxu0 %v1524
        %2947 = vmatpush.msra.mxu0 %v1523
        %2948 = vmatpush.msra.mxu0 %v1522
        %2949 = vmatpush.msra.mxu0 %v1521
        %2950 = vmatpush.msra.mxu0 %v1520
        %2951 = vmatpush.msra.mxu0 %v1519
        %2952 = vmatpush.msra.mxu0 %v1518
        %2953 = vmatpush.msra.mxu0 %v1517
        %2954 = vmatpush.msra.mxu0 %v1516
        %2955 = vmatpush.msra.mxu0 %v1515
        %2956 = vmatpush.msra.mxu0 %v1514
        %2957 = vmatpush.msra.mxu0 %v1513
        %2958 = vmatmul.f32.gmra.mxu0 %v1655
        %v2959 = vpop.f32.mrf.mxu0
        %v2960 = vadd.f32 %v2940, %v2959
        %2961 = vdwg.mxu0
        %2962 = vmatpush.msra.mxu0 %v1544
        %2963 = vmatpush.msra.mxu0 %v1543
        %2964 = vmatpush.msra.mxu0 %v1542
        %2965 = vmatpush.msra.mxu0 %v1541
        %2966 = vmatpush.msra.mxu0 %v1540
        %2967 = vmatpush.msra.mxu0 %v1539
        %2968 = vmatpush.msra.mxu0 %v1538
        %2969 = vmatpush.msra.mxu0 %v1537
        %2970 = vmatpush.msra.mxu0 %v1536
        %2971 = vmatpush.msra.mxu0 %v1535
        %2972 = vmatpush.msra.mxu0 %v1534
        %2973 = vmatpush.msra.mxu0 %v1533
        %2974 = vmatpush.msra.mxu0 %v1532
        %2975 = vmatpush.msra.mxu0 %v1531
        %2976 = vmatpush.msra.mxu0 %v1530
        %2977 = vmatpush.msra.mxu0 %v1529
        %2978 = vmatmul.f32.gmra.mxu0 %v1656
        %v2979 = vpop.f32.mrf.mxu0
        %v2980 = vadd.f32 %v2960, %v2979
        %2981 = vdwg.mxu0
        %2982 = vmatpush.msra.mxu0 %v1560
        %2983 = vmatpush.msra.mxu0 %v1559
        %2984 = vmatpush.msra.mxu0 %v1558
        %2985 = vmatpush.msra.mxu0 %v1557
        %2986 = vmatpush.msra.mxu0 %v1556
        %2987 = vmatpush.msra.mxu0 %v1555
        %2988 = vmatpush.msra.mxu0 %v1554
        %2989 = vmatpush.msra.mxu0 %v1553
        %2990 = vmatpush.msra.mxu0 %v1552
        %2991 = vmatpush.msra.mxu0 %v1551
        %2992 = vmatpush.msra.mxu0 %v1550
        %2993 = vmatpush.msra.mxu0 %v1549
        %2994 = vmatpush.msra.mxu0 %v1548
        %2995 = vmatpush.msra.mxu0 %v1547
        %2996 = vmatpush.msra.mxu0 %v1546
        %2997 = vmatpush.msra.mxu0 %v1545
        %2998 = vmatmul.f32.gmra.mxu0 %v1657
        %v2999 = vpop.f32.mrf.mxu0
        %v3000 = vadd.f32 %v2980, %v2999
        %3001 = vdwg.mxu0
        %v3002 = vadd.f32 %v520, %v3000
        %3003 = vst [vmem:[#allocation2] sm:$0x3] %v3002
        %p3004 = scmp.eq.s32.totalorder %s32, 1
        // Predicated region
        $region73: #{hierarchical_attn_forward.3} parent=47 // pred_check
          %p3005 = pneg %p3004
        $region74: #{hierarchical_attn_forward.3} parent=47 // pred_check_branch
          %3007 = sbr.rel (%p3005) target = $region76
        $region75: #{hierarchical_attn_forward.3} parent=47 // pred_region
          %v3008 = vld [vmem:[#allocation2] sm:$0x3]
          %v3009 = vld [vmem:[%s405] sm:$0x1]
          %v3011 = vperm.slane %v3009, 0
          %v3013 = vadd.f32 %v3008, %v3011
          %v3014 = vld [vmem:[%s415] sm:$0xff]
          %v3015 = vld [vmem:[%s415 + $0x8] sm:$0xff]
          %v3016 = vld [vmem:[%s415 + $0x10] sm:$0xff]
          %v3017 = vld [vmem:[%s415 + $0x18] sm:$0xff]
          %v3018 = vld [vmem:[%s415 + $0x20] sm:$0xff]
          %v3019 = vld [vmem:[%s415 + $0x28] sm:$0xff]
          %v3020 = vld [vmem:[%s415 + $0x30] sm:$0xff]
          %v3021 = vld [vmem:[%s415 + $0x38] sm:$0xff]
          %v3022 = vld [vmem:[%s415 + $0x40] sm:$0xff]
          %v3023 = vld [vmem:[%s415 + $0x48] sm:$0xff]
          %v3024 = vld [vmem:[%s415 + $0x50] sm:$0xff]
          %v3025 = vld [vmem:[%s415 + $0x58] sm:$0xff]
          %v3026 = vld [vmem:[%s415 + $0x60] sm:$0xff]
          %v3027 = vld [vmem:[%s415 + $0x68] sm:$0xff]
          %v3028 = vld [vmem:[%s415 + $0x70] sm:$0xff]
          %v3029 = vld [vmem:[%s415 + $0x78] sm:$0xff]
          %v3030 = vld [vmem:[%s415 + $0x80] sm:$0xff]
          %v3031 = vld [vmem:[%s415 + $0x88] sm:$0xff]
          %v3032 = vld [vmem:[%s415 + $0x90] sm:$0xff]
          %v3033 = vld [vmem:[%s415 + $0x98] sm:$0xff]
          %v3034 = vld [vmem:[%s415 + $0xa0] sm:$0xff]
          %v3035 = vld [vmem:[%s415 + $0xa8] sm:$0xff]
          %v3036 = vld [vmem:[%s415 + $0xb0] sm:$0xff]
          %v3037 = vld [vmem:[%s415 + $0xb8] sm:$0xff]
          %v3038 = vld [vmem:[%s415 + $0xc0] sm:$0xff]
          %v3039 = vld [vmem:[%s415 + $0xc8] sm:$0xff]
          %v3040 = vld [vmem:[%s415 + $0xd0] sm:$0xff]
          %v3041 = vld [vmem:[%s415 + $0xd8] sm:$0xff]
          %v3042 = vld [vmem:[%s415 + $0xe0] sm:$0xff]
          %v3043 = vld [vmem:[%s415 + $0xe8] sm:$0xff]
          %v3044 = vld [vmem:[%s415 + $0xf0] sm:$0xff]
          %v3045 = vld [vmem:[%s415 + $0xf8] sm:$0xff]
          %v3046 = vld [vmem:[%s415 + $0x100] sm:$0xff]
          %v3047 = vld [vmem:[%s415 + $0x108] sm:$0xff]
          %v3048 = vld [vmem:[%s415 + $0x110] sm:$0xff]
          %v3049 = vld [vmem:[%s415 + $0x118] sm:$0xff]
          %v3050 = vld [vmem:[%s415 + $0x120] sm:$0xff]
          %v3051 = vld [vmem:[%s415 + $0x128] sm:$0xff]
          %v3052 = vld [vmem:[%s415 + $0x130] sm:$0xff]
          %v3053 = vld [vmem:[%s415 + $0x138] sm:$0xff]
          %v3054 = vld [vmem:[%s415 + $0x140] sm:$0xff]
          %v3055 = vld [vmem:[%s415 + $0x148] sm:$0xff]
          %v3056 = vld [vmem:[%s415 + $0x150] sm:$0xff]
          %v3057 = vld [vmem:[%s415 + $0x158] sm:$0xff]
          %v3058 = vld [vmem:[%s415 + $0x160] sm:$0xff]
          %v3059 = vld [vmem:[%s415 + $0x168] sm:$0xff]
          %v3060 = vld [vmem:[%s415 + $0x170] sm:$0xff]
          %v3061 = vld [vmem:[%s415 + $0x178] sm:$0xff]
          %v3062 = vld [vmem:[%s415 + $0x180] sm:$0xff]
          %v3063 = vld [vmem:[%s415 + $0x188] sm:$0xff]
          %v3064 = vld [vmem:[%s415 + $0x190] sm:$0xff]
          %v3065 = vld [vmem:[%s415 + $0x198] sm:$0xff]
          %v3066 = vld [vmem:[%s415 + $0x1a0] sm:$0xff]
          %v3067 = vld [vmem:[%s415 + $0x1a8] sm:$0xff]
          %v3068 = vld [vmem:[%s415 + $0x1b0] sm:$0xff]
          %v3069 = vld [vmem:[%s415 + $0x1b8] sm:$0xff]
          %v3070 = vld [vmem:[%s415 + $0x1c0] sm:$0xff]
          %v3071 = vld [vmem:[%s415 + $0x1c8] sm:$0xff]
          %v3072 = vld [vmem:[%s415 + $0x1d0] sm:$0xff]
          %v3073 = vld [vmem:[%s415 + $0x1d8] sm:$0xff]
          %v3074 = vld [vmem:[%s415 + $0x1e0] sm:$0xff]
          %v3075 = vld [vmem:[%s415 + $0x1e8] sm:$0xff]
          %v3076 = vld [vmem:[%s415 + $0x1f0] sm:$0xff]
          %v3077 = vld [vmem:[%s415 + $0x1f8] sm:$0xff]
          %v3078 = vld [vmem:[%s425] sm:$0xf]
          %v3080 = vperm.slane %v3078, 0
          %v3081 = vperm.slane %v3078, 1
          %v3082 = vperm.slane %v3078, 2
          %v3083 = vperm.slane %v3078, 3
          %3088 = vmatpush.msra.mxu0 %v3074
          %3089 = vmatpush.msra.mxu0 %v3070
          %3090 = vmatpush.msra.mxu0 %v3066
          %3091 = vmatpush.msra.mxu0 %v3062
          %3092 = vmatpush.msra.mxu0 %v3058
          %3093 = vmatpush.msra.mxu0 %v3054
          %3094 = vmatpush.msra.mxu0 %v3050
          %3095 = vmatpush.msra.mxu0 %v3046
          %3096 = vmatpush.msra.mxu0 %v3042
          %3097 = vmatpush.msra.mxu0 %v3038
          %3098 = vmatpush.msra.mxu0 %v3034
          %3099 = vmatpush.msra.mxu0 %v3030
          %3100 = vmatpush.msra.mxu0 %v3026
          %3101 = vmatpush.msra.mxu0 %v3022
          %3102 = vmatpush.msra.mxu0 %v3018
          %3103 = vmatpush.msra.mxu0 %v3014
          %3104 = vmatmul.f32.gmra.mxu0 %v3013
          %v3105 = vpop.f32.mrf.mxu0
          %v3106 = vadd.f32 %v3080, %v3105
          %3107 = vdwg.mxu0
          %3108 = vmatpush.msra.mxu0 %v3075
          %3109 = vmatpush.msra.mxu0 %v3071
          %3110 = vmatpush.msra.mxu0 %v3067
          %3111 = vmatpush.msra.mxu0 %v3063
          %3112 = vmatpush.msra.mxu0 %v3059
          %3113 = vmatpush.msra.mxu0 %v3055
          %3114 = vmatpush.msra.mxu0 %v3051
          %3115 = vmatpush.msra.mxu0 %v3047
          %3116 = vmatpush.msra.mxu0 %v3043
          %3117 = vmatpush.msra.mxu0 %v3039
          %3118 = vmatpush.msra.mxu0 %v3035
          %3119 = vmatpush.msra.mxu0 %v3031
          %3120 = vmatpush.msra.mxu0 %v3027
          %3121 = vmatpush.msra.mxu0 %v3023
          %3122 = vmatpush.msra.mxu0 %v3019
          %3123 = vmatpush.msra.mxu0 %v3015
          %3124 = vmatmul.f32.gmra.mxu0 %v3013
          %v3125 = vpop.f32.mrf.mxu0
          %v3126 = vadd.f32 %v3081, %v3125
          %3127 = vdwg.mxu0
          %3128 = vmatpush.msra.mxu0 %v3076
          %3129 = vmatpush.msra.mxu0 %v3072
          %3130 = vmatpush.msra.mxu0 %v3068
          %3131 = vmatpush.msra.mxu0 %v3064
          %3132 = vmatpush.msra.mxu0 %v3060
          %3133 = vmatpush.msra.mxu0 %v3056
          %3134 = vmatpush.msra.mxu0 %v3052
          %3135 = vmatpush.msra.mxu0 %v3048
          %3136 = vmatpush.msra.mxu0 %v3044
          %3137 = vmatpush.msra.mxu0 %v3040
          %3138 = vmatpush.msra.mxu0 %v3036
          %3139 = vmatpush.msra.mxu0 %v3032
          %3140 = vmatpush.msra.mxu0 %v3028
          %3141 = vmatpush.msra.mxu0 %v3024
          %3142 = vmatpush.msra.mxu0 %v3020
          %3143 = vmatpush.msra.mxu0 %v3016
          %3144 = vmatmul.f32.gmra.mxu0 %v3013
          %v3145 = vpop.f32.mrf.mxu0
          %v3146 = vadd.f32 %v3082, %v3145
          %3147 = vdwg.mxu0
          %3148 = vmatpush.msra.mxu0 %v3077
          %3149 = vmatpush.msra.mxu0 %v3073
          %3150 = vmatpush.msra.mxu0 %v3069
          %3151 = vmatpush.msra.mxu0 %v3065
          %3152 = vmatpush.msra.mxu0 %v3061
          %3153 = vmatpush.msra.mxu0 %v3057
          %3154 = vmatpush.msra.mxu0 %v3053
          %3155 = vmatpush.msra.mxu0 %v3049
          %3156 = vmatpush.msra.mxu0 %v3045
          %3157 = vmatpush.msra.mxu0 %v3041
          %3158 = vmatpush.msra.mxu0 %v3037
          %3159 = vmatpush.msra.mxu0 %v3033
          %3160 = vmatpush.msra.mxu0 %v3029
          %3161 = vmatpush.msra.mxu0 %v3025
          %3162 = vmatpush.msra.mxu0 %v3021
          %3163 = vmatpush.msra.mxu0 %v3017
          %3164 = vmatmul.f32.gmra.mxu0 %v3013
          %v3165 = vpop.f32.mrf.mxu0
          %v3166 = vadd.f32 %v3083, %v3165
          %3167 = vdwg.mxu0
          %v3168 = vmax.f32 %v3106, 0.0
          %v3169 = vmax.f32 %v3126, 0.0
          %v3170 = vmax.f32 %v3146, 0.0
          %v3171 = vmax.f32 %v3166, 0.0
          %v3172 = vld [vmem:[%s435] sm:$0xf]
          %v3174 = vperm.slane %v3172, 0
          %v3175 = vperm.slane %v3172, 1
          %v3176 = vperm.slane %v3172, 2
          %v3177 = vperm.slane %v3172, 3
          %v3182 = vmul.f32 %v3168, %v3174
          %v3183 = vmul.f32 %v3169, %v3175
          %v3184 = vmul.f32 %v3170, %v3176
          %v3185 = vmul.f32 %v3171, %v3177
          %vm3186 = vcmask 1041408
          %v3187 = vsel %vm3186, %v3182, 0.0
          %v3188 = vsel %vm3186, %v3183, 0.0
          %v3189 = vadd.f32 %v3187, %v3188
          %v3190 = vsel %vm3186, %v3184, 0.0
          %v3191 = vadd.f32 %v3189, %v3190
          %v3192 = vsel %vm3186, %v3185, 0.0
          %v3193 = vadd.f32 %v3191, %v3192
          %3194 = vadd.xlane.f32.xlu0 %v3193
          %v3195 = vpop.xlane.xlu0 %3194
          %v3196 = vld [vmem:[%s510] sm:$0x1]
          %v3198 = vperm.slane %v3196, 0
          %v3200 = vadd.f32 %v3195, %v3198
          %vm3201 = vcmask 1024
          %3202 = vst.msk [vmem:[%s514] sm:$0x3] %vm3201, %v3200
        $region76: #{hierarchical_attn_forward.3} parent=47 // pred_fallthru
          _
        %p3203 = scmp.lt.s32.totalorder %s31, 3
        %s3204 = scalar_select %p3203, %s31, 3
        %s3205 = smul.addr %s3204, 2
        %s3206 = scalar_lea.vmem %s7, %s3205
        // Predicated region
        $region77: #{hierarchical_attn_forward.3} parent=47 // pred_check
          %p3207 = pneg %p243
        $region78: #{hierarchical_attn_forward.3} parent=47 // pred_check_branch
          %3209 = sbr.rel (%p3207) target = $region80
        $region79: #{hierarchical_attn_forward.3} parent=47 // pred_region
          _
        $region80: #{hierarchical_attn_forward.3} parent=47 // pred_fallthru
          _
      $region48: #{hierarchical_attn_forward.3} parent=5 // pred_fallthru
        _
      %p3210 = scmp.le.s32.totalorder 2, %s22
      // Predicated region
      $region81: #{hierarchical_attn_forward.3} parent=5 // pred_check
        %p3211 = pneg %p3210
      $region82: #{hierarchical_attn_forward.3} parent=5 // pred_check_branch
        %3213 = sbr.rel (%p3211) target = $region84
      $region83: #{hierarchical_attn_forward.3} parent=5 // pred_region
        %s3214 = ssub.s32 %s22, 2
        // Predicated region
        $region85: #{hierarchical_attn_forward.3} parent=83 // pred_check
          %p3215 = pneg %p249
        $region86: #{hierarchical_attn_forward.3} parent=83 // pred_check_branch
          %3217 = sbr.rel (%p3215) target = $region88
        $region87: #{hierarchical_attn_forward.3} parent=83 // pred_region
          %p3218 = scmp.lt.s32.totalorder %s33, 3
          %s3219 = scalar_select %p3218, %s33, 3
          %s3220 = smul.addr %s3219, 2
          %s3221 = scalar_lea.vmem %s7, %s3220
        $region88: #{hierarchical_attn_forward.3} parent=83 // pred_fallthru
          _
      $region84: #{hierarchical_attn_forward.3} parent=5 // pred_fallthru
        _
    $region6: #{hierarchical_attn_forward.3} parent=1 // loop_footer
      %s26 = sadd.s32 1, %s22
    $region7: #{hierarchical_attn_forward.3} parent=1 // loop_footer_branch
      %21 = sbr.rel target = $region3
    $region8: #{hierarchical_attn_forward.3} parent=1 // loop_exit
      _
    %3222 = vsyncpa [#allocation4], 1
    %s3223 = scalar_lea.sflag [#allocation4], 1
    %3224 = vsyncpa %s3223, 1
    %3225 = vsyncpa [#allocation6], 1
    %s3226 = scalar_lea.sflag [#allocation6], 1
    %3227 = vsyncpa %s3226, 1
    %3228 = vsyncpa [#allocation9], 1
    %s3229 = scalar_lea.sflag [#allocation9], 1
    %3230 = vsyncpa %s3229, 1

</llo_original>
